<compile_context>
chip_gen: v7x
topology: tpu7x:2x2x1
jax: 0.10.0
libtpu: 0.0.40
codegen_flags: <defaults>
</compile_context>

<pallas_src>
import functools

import jax
import jax.numpy as jnp
from jax.experimental import pallas as pl
from jax.experimental.pallas import tpu as pltpu


# ----------------------------- configuration --------------------------------
N_NODES = 16                # nodes per graph (multiple of 8 -> sublane friendly)
H = 32                      # h_layer_size
EDGE_NAMES = ["single", "double"]
N_EDGE = len(EDGE_NAMES)
NUM_LAYERS = 3
N_GRAPHS = 16               # total graphs in the batch


# ------------------------------- kernel -------------------------------------
def _ggnn_kernel(h_ref, adj_ref, w_h_ref, b_h_ref, w_ih_ref, b_ih_ref, out_ref,
                 *, num_layers: int, n_edge: int, h_size: int, mxu_dtype):
    """One block of G stacked graphs, full GGNN propagation.

    h_ref    : [GN, H]           stacked node features for this block (f32)
    adj_ref  : [1, GN, E*GN]     lane-concatenated block-diagonal adjacency (mxu_dtype)
    w_h_ref  : [H, 3H + E*H]     pre-transposed [W_hh_r|W_hh_z|W_hh_n|W_e0|...] (mxu_dtype)
    b_h_ref  : [1, 3H + E*H]     [b_hh_r|b_hh_z|b_hh_n|b_e0|...]  (f32)
    w_ih_ref : [H, 3H]           pre-transposed [W_ih_r|W_ih_z|W_ih_n] (mxu_dtype)
    b_ih_ref : [1, 3H]           [b_ih_r|b_ih_z|b_ih_n] (f32)
    out_ref  : [GN, H]           final node features (f32)
    """
    Hs = h_size

    # Hoist ONLY the small weights/biases (few vregs).  Adjacency is intentionally
    # not hoisted: it is read at the point of use inside each layer (review item 1).
    w_h = w_h_ref[...]
    b_h = b_h_ref[...]
    w_ih = w_ih_ref[...]
    b_ih = b_ih_ref[...]

    h = h_ref[...]                                           # [GN, H] f32

    for _ in range(num_layers):
        # --- fused h-projection: gh (GRU hidden gates) + per-edge proj in ONE matmul ---
        comb = jnp.dot(h.astype(mxu_dtype), w_h,
                       preferred_element_type=jnp.float32) + b_h      # [GN, 3H + E*H]
        # gh  = comb[:, :3H]        (lane offsets 0/H/2H, aligned with gi below)
        # proj_e = comb[:, 3H + e*H : 3H + (e+1)*H]

        # --- fused aggregation: one K = E*GN matmul (sublane-stack the proj slices) ---
        p_stack = jnp.concatenate(
            [comb[:, 3 * Hs + e * Hs: 3 * Hs + (e + 1) * Hs] for e in range(n_edge)],
            axis=0)                                           # [E*GN, H]
        # adjacency read at point of use (not kept live across the layer loop)
        m = jnp.dot(adj_ref[0], p_stack.astype(mxu_dtype),
                    preferred_element_type=jnp.float32)       # [GN, H]

        # --- GRU input gates: one matmul ---
        gi = jnp.dot(m.astype(mxu_dtype), w_ih,
                     preferred_element_type=jnp.float32) + b_ih       # [GN, 3H]

        # r/z gates: lane offsets of gi and gh match (0 / H), so one wide add.
        rz = jax.nn.sigmoid(gi[:, :2 * Hs] + comb[:, :2 * Hs])        # [GN, 2H]
        r = rz[:, :Hs]
        z = rz[:, Hs:2 * Hs]
        n = jnp.tanh(gi[:, 2 * Hs:3 * Hs] + r * comb[:, 2 * Hs:3 * Hs])
        h = (1.0 - z) * n + z * h

    out_ref[...] = h.astype(out_ref.dtype)


# ------------------------------- wrapper -------------------------------------
def _pick_graphs_per_block(batch: int, n_nodes: int) -> int:
    """Target GN ~= 128 rows (one full MXU pass on all generations) while keeping
    at least 2 grid blocks so both v7x TensorCores are used.  On v6e with batch >= 32,
    passing graphs_per_block = 256 // n_nodes halves per-step overhead (see review)."""
    g = max(1, 128 // n_nodes)
    while g > 1 and (batch % g != 0 or batch // g < 2):
        g //= 2
    return max(g, 1)


def ggnn_forward(h0, adj, w_e, b_e, w_ih, w_hh, b_ih, b_hh,
                 *, num_layers=NUM_LAYERS, graphs_per_block=None,
                 mxu_dtype=jnp.bfloat16):
    """h0: [B, N, H]; adj: [B, E, N, N]; weights in PyTorch layout (out x in)."""
    B, N, Hs = h0.shape
    E = adj.shape[1]
    G = graphs_per_block if graphs_per_block is not None else _pick_graphs_per_block(B, N)
    assert B % G == 0, "batch must be divisible by graphs_per_block"
    nb = B // G
    GN = G * N

    # ---- host-side re-layout (free relative to kernel cost) ----
    # Fused, pre-transposed h-side weights: [W_hh_r|W_hh_z|W_hh_n|W_e0|W_e1| ...]
    w_h_cat = jnp.concatenate(
        [w_hh[k].T for k in range(3)] + [w_e[e].T for e in range(E)], axis=1)   # [H, 3H+E*H]
    b_h_cat = jnp.concatenate(
        [b_hh[k] for k in range(3)] + [b_e[e] for e in range(E)], axis=1)       # [1, 3H+E*H]
    w_ih_cat = jnp.concatenate([w_ih[k].T for k in range(3)], axis=1)           # [H, 3H]
    b_ih_cat = jnp.concatenate([b_ih[k] for k in range(3)], axis=1)             # [1, 3H]

    # Block-diagonal adjacency (stack G graphs along the node axis) then lane-concat
    # the edge types:  A_cat[b, i, e*GN + j] = A_bd[b, e, i, j].
    a = adj.reshape(nb, G, E, N, N).transpose(0, 2, 1, 3, 4)                    # [nb,E,G,N,N]
    eye = jnp.eye(G, dtype=adj.dtype)
    adj_bd = jnp.einsum('begij,gk->begikj', a, eye).reshape(nb, E, GN, GN)      # [nb,E,GN,GN]
    adj_cat = adj_bd.transpose(0, 2, 1, 3).reshape(nb, GN, E * GN)              # [nb,GN,E*GN]

    # MXU operand dtype (bf16 on the MXU, f32 accumulation). 0/1 adjacency is exact.
    adj_cat = adj_cat.astype(mxu_dtype)
    w_h_cat = w_h_cat.astype(mxu_dtype)
    w_ih_cat = w_ih_cat.astype(mxu_dtype)
    b_h_cat = b_h_cat.astype(jnp.float32)
    b_ih_cat = b_ih_cat.astype(jnp.float32)

    h_flat = h0.reshape(nb * GN, Hs).astype(jnp.float32)                        # [B*N, H]

    kernel = functools.partial(_ggnn_kernel, num_layers=num_layers,
                               n_edge=E, h_size=Hs, mxu_dtype=mxu_dtype)

    WH = 3 * Hs + E * Hs
    out = pl.pallas_call(
        kernel,
        out_shape=jax.ShapeDtypeStruct((nb * GN, Hs), jnp.float32),
        grid=(nb,),
        in_specs=[
            pl.BlockSpec((GN, Hs), lambda b: (b, 0)),              # h block
            pl.BlockSpec((1, GN, E * GN), lambda b: (b, 0, 0)),    # adjacency block
            pl.BlockSpec((Hs, WH), lambda b: (0, 0)),              # fused W_h (shared)
            pl.BlockSpec((1, WH), lambda b: (0, 0)),               # fused b_h
            pl.BlockSpec((Hs, 3 * Hs), lambda b: (0, 0)),          # W_ih_cat
            pl.BlockSpec((1, 3 * Hs), lambda b: (0, 0)),           # b_ih_cat
        ],
        out_specs=pl.BlockSpec((GN, Hs), lambda b: (b, 0)),
        compiler_params=pltpu.CompilerParams(
            dimension_semantics=("parallel",)),   # shards graph-blocks across TCs on v7x
    )(h_flat, adj_cat, w_h_cat, b_h_cat, w_ih_cat, b_ih_cat)

    return out.reshape(B, N, Hs)


# ------------------------ pure-JAX reference (check) -------------------------
def ggnn_reference(h0, adj, w_e, b_e, w_ih, w_hh, b_ih, b_hh, num_layers):
    """Literal translation of the module forward (per-edge Linear + sum + GRUCell)."""
    h = h0.astype(jnp.float32)                          # [B, N, H]
    for _ in range(num_layers):
        m = jnp.zeros_like(h)
        for e in range(adj.shape[1]):
            proj = h @ w_e[e].T + b_e[e]
            m = m + jnp.einsum('bij,bjh->bih', adj[:, e], proj)
        r = jax.nn.sigmoid(m @ w_ih[0].T + b_ih[0] + h @ w_hh[0].T + b_hh[0])
        z = jax.nn.sigmoid(m @ w_ih[1].T + b_ih[1] + h @ w_hh[1].T + b_hh[1])
        n = jnp.tanh(m @ w_ih[2].T + b_ih[2] + r * (h @ w_hh[2].T + b_hh[2]))
        h = (1.0 - z) * n + z * h
    return h


# --------------------------------- main --------------------------------------
if __name__ == "__main__":
    key = jax.random.PRNGKey(0)
    ks = jax.random.split(key, 8)
    scale = 1.0 / jnp.sqrt(H)

    # initial node features for a batch of graphs
    h0 = jax.random.normal(ks[0], (N_GRAPHS, N_NODES, H), jnp.float32)

    # sparse adjacency per graph / edge type (dense 0/1 representation)
    adj_raw = jax.random.uniform(ks[1], (N_GRAPHS, N_EDGE, N_NODES, N_NODES))
    adj = (adj_raw > 0.8).astype(jnp.float32)

    # per-edge-type Linear params (A_hidden): weight [H,H] (out x in), bias [1,H]
    w_e = scale * jax.random.normal(ks[2], (N_EDGE, H, H), jnp.float32)
    b_e = scale * jax.random.normal(ks[3], (N_EDGE, 1, H), jnp.float32)

    # GRUCell params split into (r, z, n) chunks (equivalent to PyTorch [3H,H] weights)
    w_ih = scale * jax.random.normal(ks[4], (3, H, H), jnp.float32)
    w_hh = scale * jax.random.normal(ks[5], (3, H, H), jnp.float32)
    b_ih = scale * jax.random.normal(ks[6], (3, 1, H), jnp.float32)
    b_hh = scale * jax.random.normal(ks[7], (3, 1, H), jnp.float32)

    ref = ggnn_reference(h0, adj, w_e, b_e, w_ih, w_hh, b_ih, b_hh, NUM_LAYERS)

    # 1) f32 MXU operands: bit-faithful to the module forward -> tight tolerance.
    out_f32 = ggnn_forward(h0, adj, w_e, b_e, w_ih, w_hh, b_ih, b_hh,
                           mxu_dtype=jnp.float32)
    out_f32 = jax.block_until_ready(out_f32)
    assert jnp.allclose(out_f32, ref, atol=1e-3, rtol=1e-3), "f32 mismatch vs reference"

    # 2) bf16 MXU operands (perf-recommended config, f32 accumulation): loose sanity
    #    bound accounting for bf16 input rounding over 3 propagation layers.
    out_bf16 = ggnn_forward(h0, adj, w_e, b_e, w_ih, w_hh, b_ih, b_hh,
                            mxu_dtype=jnp.bfloat16)
    out_bf16 = jax.block_until_ready(out_bf16)
    assert jnp.allclose(out_bf16, ref, atol=2e-1, rtol=2e-1), "bf16 sanity bound exceeded"

    print("KERNEL_OK")
</pallas_src>

<mosaic_0001>
module attributes {stable_mosaic.version = 11 : i64} {
  func.func @_ggnn_kernel(%arg0: i32, %arg1: memref<128x32xf32, #tpu.memory_space<vmem>>, %arg2: memref<1x128x256xf32, #tpu.memory_space<vmem>>, %arg3: memref<32x160xf32, #tpu.memory_space<vmem>>, %arg4: memref<1x160xf32, #tpu.memory_space<vmem>>, %arg5: memref<32x96xf32, #tpu.memory_space<vmem>>, %arg6: memref<1x96xf32, #tpu.memory_space<vmem>>, %arg7: memref<128x32xf32, #tpu.memory_space<vmem>>) attributes {dimension_semantics = [#tpu.dimension_semantics<parallel>], iteration_bounds = array<i64: 2>, scalar_prefetch = 0 : i64, scratch_operands = 0 : i64, tpu.core_type = #tpu.core_type<tc>, window_params = [{transform_indices = @transform_0, window_bounds = array<i64: 128, 32>}, {transform_indices = @transform_1, window_bounds = array<i64: 1, 128, 256>}, {pipeline_mode = #tpu.pipeline_mode<synchronous>, transform_indices = @transform_2, window_bounds = array<i64: 32, 160>}, {pipeline_mode = #tpu.pipeline_mode<synchronous>, transform_indices = @transform_3, window_bounds = array<i64: 1, 160>}, {pipeline_mode = #tpu.pipeline_mode<synchronous>, transform_indices = @transform_4, window_bounds = array<i64: 32, 96>}, {pipeline_mode = #tpu.pipeline_mode<synchronous>, transform_indices = @transform_5, window_bounds = array<i64: 1, 96>}, {transform_indices = @transform_6, window_bounds = array<i64: 128, 32>}]} {
    %c0 = arith.constant 0 : index
    %c0_0 = arith.constant 0 : index
    %0 = vector.load %arg3[%c0, %c0_0] : memref<32x160xf32, #tpu.memory_space<vmem>>, vector<32x160xf32>
    %c0_1 = arith.constant 0 : index
    %c0_2 = arith.constant 0 : index
    %1 = vector.load %arg4[%c0_1, %c0_2] : memref<1x160xf32, #tpu.memory_space<vmem>>, vector<1x160xf32>
    %c0_3 = arith.constant 0 : index
    %c0_4 = arith.constant 0 : index
    %2 = vector.load %arg5[%c0_3, %c0_4] : memref<32x96xf32, #tpu.memory_space<vmem>>, vector<32x96xf32>
    %c0_5 = arith.constant 0 : index
    %c0_6 = arith.constant 0 : index
    %3 = vector.load %arg6[%c0_5, %c0_6] : memref<1x96xf32, #tpu.memory_space<vmem>>, vector<1x96xf32>
    %c0_7 = arith.constant 0 : index
    %c0_8 = arith.constant 0 : index
    %4 = vector.load %arg1[%c0_7, %c0_8] : memref<128x32xf32, #tpu.memory_space<vmem>>, vector<128x32xf32>
    %cst = arith.constant dense<0.000000e+00> : vector<128x160xf32>
    %5 = tpu.matmul %4, %0, %cst {dimension_numbers = #tpu.dot_dimension_numbers<[1], [0], [0], [1], [0, 0, 1, 1], [], []>} : vector<128x32xf32>, vector<32x160xf32>, vector<128x160xf32> -> vector<128x160xf32>
    %6 = vector.broadcast %1 : vector<1x160xf32> to vector<128x160xf32>
    %7 = arith.addf %5, %6 : vector<128x160xf32>
    %8 = vector.extract_strided_slice %7 {offsets = [0, 96], sizes = [128, 32], strides = [1, 1]} : vector<128x160xf32> to vector<128x32xf32>
    %9 = vector.extract_strided_slice %7 {offsets = [0, 128], sizes = [128, 32], strides = [1, 1]} : vector<128x160xf32> to vector<128x32xf32>
    %10 = tpu.concatenate %8, %9 in 0 : vector<128x32xf32>, vector<128x32xf32> -> vector<256x32xf32>
    %c0_9 = arith.constant 0 : index
    %c0_10 = arith.constant 0 : index
    %c0_11 = arith.constant 0 : index
    %11 = vector.load %arg2[%c0_9, %c0_10, %c0_11] : memref<1x128x256xf32, #tpu.memory_space<vmem>>, vector<1x128x256xf32>
    %12 = vector.shape_cast %11 : vector<1x128x256xf32> to vector<128x256xf32>
    %cst_12 = arith.constant dense<0.000000e+00> : vector<128x32xf32>
    %13 = tpu.matmul %12, %10, %cst_12 {dimension_numbers = #tpu.dot_dimension_numbers<[1], [0], [0], [1], [0, 0, 1, 1], [], []>} : vector<128x256xf32>, vector<256x32xf32>, vector<128x32xf32> -> vector<128x32xf32>
    %cst_13 = arith.constant dense<0.000000e+00> : vector<128x96xf32>
    %14 = tpu.matmul %13, %2, %cst_13 {dimension_numbers = #tpu.dot_dimension_numbers<[1], [0], [0], [1], [0, 0, 1, 1], [], []>} : vector<128x32xf32>, vector<32x96xf32>, vector<128x96xf32> -> vector<128x96xf32>
    %15 = vector.broadcast %3 : vector<1x96xf32> to vector<128x96xf32>
    %16 = arith.addf %14, %15 : vector<128x96xf32>
    %17 = vector.extract_strided_slice %16 {offsets = [0, 0], sizes = [128, 64], strides = [1, 1]} : vector<128x96xf32> to vector<128x64xf32>
    %18 = vector.extract_strided_slice %7 {offsets = [0, 0], sizes = [128, 64], strides = [1, 1]} : vector<128x160xf32> to vector<128x64xf32>
    %19 = arith.addf %17, %18 : vector<128x64xf32>
    %20 = arith.negf %19 : vector<128x64xf32>
    %21 = math.exp %20 : vector<128x64xf32>
    %cst_14 = arith.constant 1.000000e+00 : f32
    %22 = vector.broadcast %cst_14 : f32 to vector<128x64xf32>
    %23 = arith.addf %22, %21 : vector<128x64xf32>
    %24 = arith.divf %22, %23 : vector<128x64xf32>
    %25 = vector.extract_strided_slice %24 {offsets = [0, 0], sizes = [128, 32], strides = [1, 1]} : vector<128x64xf32> to vector<128x32xf32>
    %26 = vector.extract_strided_slice %24 {offsets = [0, 32], sizes = [128, 32], strides = [1, 1]} : vector<128x64xf32> to vector<128x32xf32>
    %27 = vector.extract_strided_slice %16 {offsets = [0, 64], sizes = [128, 32], strides = [1, 1]} : vector<128x96xf32> to vector<128x32xf32>
    %28 = vector.extract_strided_slice %7 {offsets = [0, 64], sizes = [128, 32], strides = [1, 1]} : vector<128x160xf32> to vector<128x32xf32>
    %29 = arith.mulf %25, %28 : vector<128x32xf32>
    %30 = arith.addf %27, %29 : vector<128x32xf32>
    %31 = math.tanh %30 : vector<128x32xf32>
    %cst_15 = arith.constant 1.000000e+00 : f32
    %32 = vector.broadcast %cst_15 : f32 to vector<128x32xf32>
    %33 = arith.subf %32, %26 : vector<128x32xf32>
    %34 = arith.mulf %33, %31 : vector<128x32xf32>
    %35 = arith.mulf %26, %4 : vector<128x32xf32>
    %36 = arith.addf %34, %35 : vector<128x32xf32>
    %cst_16 = arith.constant dense<0.000000e+00> : vector<128x160xf32>
    %37 = tpu.matmul %36, %0, %cst_16 {dimension_numbers = #tpu.dot_dimension_numbers<[1], [0], [0], [1], [0, 0, 1, 1], [], []>} : vector<128x32xf32>, vector<32x160xf32>, vector<128x160xf32> -> vector<128x160xf32>
    %38 = vector.broadcast %1 : vector<1x160xf32> to vector<128x160xf32>
    %39 = arith.addf %37, %38 : vector<128x160xf32>
    %40 = vector.extract_strided_slice %39 {offsets = [0, 96], sizes = [128, 32], strides = [1, 1]} : vector<128x160xf32> to vector<128x32xf32>
    %41 = vector.extract_strided_slice %39 {offsets = [0, 128], sizes = [128, 32], strides = [1, 1]} : vector<128x160xf32> to vector<128x32xf32>
    %42 = tpu.concatenate %40, %41 in 0 : vector<128x32xf32>, vector<128x32xf32> -> vector<256x32xf32>
    %c0_17 = arith.constant 0 : index
    %c0_18 = arith.constant 0 : index
    %c0_19 = arith.constant 0 : index
    %43 = vector.load %arg2[%c0_17, %c0_18, %c0_19] : memref<1x128x256xf32, #tpu.memory_space<vmem>>, vector<1x128x256xf32>
    %44 = vector.shape_cast %43 : vector<1x128x256xf32> to vector<128x256xf32>
    %cst_20 = arith.constant dense<0.000000e+00> : vector<128x32xf32>
    %45 = tpu.matmul %44, %42, %cst_20 {dimension_numbers = #tpu.dot_dimension_numbers<[1], [0], [0], [1], [0, 0, 1, 1], [], []>} : vector<128x256xf32>, vector<256x32xf32>, vector<128x32xf32> -> vector<128x32xf32>
    %cst_21 = arith.constant dense<0.000000e+00> : vector<128x96xf32>
    %46 = tpu.matmul %45, %2, %cst_21 {dimension_numbers = #tpu.dot_dimension_numbers<[1], [0], [0], [1], [0, 0, 1, 1], [], []>} : vector<128x32xf32>, vector<32x96xf32>, vector<128x96xf32> -> vector<128x96xf32>
    %47 = vector.broadcast %3 : vector<1x96xf32> to vector<128x96xf32>
    %48 = arith.addf %46, %47 : vector<128x96xf32>
    %49 = vector.extract_strided_slice %48 {offsets = [0, 0], sizes = [128, 64], strides = [1, 1]} : vector<128x96xf32> to vector<128x64xf32>
    %50 = vector.extract_strided_slice %39 {offsets = [0, 0], sizes = [128, 64], strides = [1, 1]} : vector<128x160xf32> to vector<128x64xf32>
    %51 = arith.addf %49, %50 : vector<128x64xf32>
    %52 = arith.negf %51 : vector<128x64xf32>
    %53 = math.exp %52 : vector<128x64xf32>
    %cst_22 = arith.constant 1.000000e+00 : f32
    %54 = vector.broadcast %cst_22 : f32 to vector<128x64xf32>
    %55 = arith.addf %54, %53 : vector<128x64xf32>
    %56 = arith.divf %54, %55 : vector<128x64xf32>
    %57 = vector.extract_strided_slice %56 {offsets = [0, 0], sizes = [128, 32], strides = [1, 1]} : vector<128x64xf32> to vector<128x32xf32>
    %58 = vector.extract_strided_slice %56 {offsets = [0, 32], sizes = [128, 32], strides = [1, 1]} : vector<128x64xf32> to vector<128x32xf32>
    %59 = vector.extract_strided_slice %48 {offsets = [0, 64], sizes = [128, 32], strides = [1, 1]} : vector<128x96xf32> to vector<128x32xf32>
    %60 = vector.extract_strided_slice %39 {offsets = [0, 64], sizes = [128, 32], strides = [1, 1]} : vector<128x160xf32> to vector<128x32xf32>
    %61 = arith.mulf %57, %60 : vector<128x32xf32>
    %62 = arith.addf %59, %61 : vector<128x32xf32>
    %63 = math.tanh %62 : vector<128x32xf32>
    %cst_23 = arith.constant 1.000000e+00 : f32
    %64 = vector.broadcast %cst_23 : f32 to vector<128x32xf32>
    %65 = arith.subf %64, %58 : vector<128x32xf32>
    %66 = arith.mulf %65, %63 : vector<128x32xf32>
    %67 = arith.mulf %58, %36 : vector<128x32xf32>
    %68 = arith.addf %66, %67 : vector<128x32xf32>
    %cst_24 = arith.constant dense<0.000000e+00> : vector<128x160xf32>
    %69 = tpu.matmul %68, %0, %cst_24 {dimension_numbers = #tpu.dot_dimension_numbers<[1], [0], [0], [1], [0, 0, 1, 1], [], []>} : vector<128x32xf32>, vector<32x160xf32>, vector<128x160xf32> -> vector<128x160xf32>
    %70 = vector.broadcast %1 : vector<1x160xf32> to vector<128x160xf32>
    %71 = arith.addf %69, %70 : vector<128x160xf32>
    %72 = vector.extract_strided_slice %71 {offsets = [0, 96], sizes = [128, 32], strides = [1, 1]} : vector<128x160xf32> to vector<128x32xf32>
    %73 = vector.extract_strided_slice %71 {offsets = [0, 128], sizes = [128, 32], strides = [1, 1]} : vector<128x160xf32> to vector<128x32xf32>
    %74 = tpu.concatenate %72, %73 in 0 : vector<128x32xf32>, vector<128x32xf32> -> vector<256x32xf32>
    %c0_25 = arith.constant 0 : index
    %c0_26 = arith.constant 0 : index
    %c0_27 = arith.constant 0 : index
    %75 = vector.load %arg2[%c0_25, %c0_26, %c0_27] : memref<1x128x256xf32, #tpu.memory_space<vmem>>, vector<1x128x256xf32>
    %76 = vector.shape_cast %75 : vector<1x128x256xf32> to vector<128x256xf32>
    %cst_28 = arith.constant dense<0.000000e+00> : vector<128x32xf32>
    %77 = tpu.matmul %76, %74, %cst_28 {dimension_numbers = #tpu.dot_dimension_numbers<[1], [0], [0], [1], [0, 0, 1, 1], [], []>} : vector<128x256xf32>, vector<256x32xf32>, vector<128x32xf32> -> vector<128x32xf32>
    %cst_29 = arith.constant dense<0.000000e+00> : vector<128x96xf32>
    %78 = tpu.matmul %77, %2, %cst_29 {dimension_numbers = #tpu.dot_dimension_numbers<[1], [0], [0], [1], [0, 0, 1, 1], [], []>} : vector<128x32xf32>, vector<32x96xf32>, vector<128x96xf32> -> vector<128x96xf32>
    %79 = vector.broadcast %3 : vector<1x96xf32> to vector<128x96xf32>
    %80 = arith.addf %78, %79 : vector<128x96xf32>
    %81 = vector.extract_strided_slice %80 {offsets = [0, 0], sizes = [128, 64], strides = [1, 1]} : vector<128x96xf32> to vector<128x64xf32>
    %82 = vector.extract_strided_slice %71 {offsets = [0, 0], sizes = [128, 64], strides = [1, 1]} : vector<128x160xf32> to vector<128x64xf32>
    %83 = arith.addf %81, %82 : vector<128x64xf32>
    %84 = arith.negf %83 : vector<128x64xf32>
    %85 = math.exp %84 : vector<128x64xf32>
    %cst_30 = arith.constant 1.000000e+00 : f32
    %86 = vector.broadcast %cst_30 : f32 to vector<128x64xf32>
    %87 = arith.addf %86, %85 : vector<128x64xf32>
    %88 = arith.divf %86, %87 : vector<128x64xf32>
    %89 = vector.extract_strided_slice %88 {offsets = [0, 0], sizes = [128, 32], strides = [1, 1]} : vector<128x64xf32> to vector<128x32xf32>
    %90 = vector.extract_strided_slice %88 {offsets = [0, 32], sizes = [128, 32], strides = [1, 1]} : vector<128x64xf32> to vector<128x32xf32>
    %91 = vector.extract_strided_slice %80 {offsets = [0, 64], sizes = [128, 32], strides = [1, 1]} : vector<128x96xf32> to vector<128x32xf32>
    %92 = vector.extract_strided_slice %71 {offsets = [0, 64], sizes = [128, 32], strides = [1, 1]} : vector<128x160xf32> to vector<128x32xf32>
    %93 = arith.mulf %89, %92 : vector<128x32xf32>
    %94 = arith.addf %91, %93 : vector<128x32xf32>
    %95 = math.tanh %94 : vector<128x32xf32>
    %cst_31 = arith.constant 1.000000e+00 : f32
    %96 = vector.broadcast %cst_31 : f32 to vector<128x32xf32>
    %97 = arith.subf %96, %90 : vector<128x32xf32>
    %98 = arith.mulf %97, %95 : vector<128x32xf32>
    %99 = arith.mulf %90, %68 : vector<128x32xf32>
    %100 = arith.addf %98, %99 : vector<128x32xf32>
    %c0_32 = arith.constant 0 : index
    %c0_33 = arith.constant 0 : index
    %101 = vector.load %arg7[%c0_32, %c0_33] : memref<128x32xf32, #tpu.memory_space<vmem>>, vector<128x32xf32>
    tpu.vector_store %arg7[%c0_32, %c0_33], %100 {strides = array<i32>} : memref<128x32xf32, #tpu.memory_space<vmem>>, vector<128x32xf32>,
    return
  }
  func.func @transform_0(%arg0: i32) -> (i32, i32) {
    %c0_i32 = arith.constant 0 : i32
    %c0_i32_0 = arith.constant 0 : i32
    return %arg0, %c0_i32 : i32, i32
  }
  func.func @transform_1(%arg0: i32) -> (i32, i32, i32) {
    %c0_i32 = arith.constant 0 : i32
    %c0_i32_0 = arith.constant 0 : i32
    %c0_i32_1 = arith.constant 0 : i32
    return %arg0, %c0_i32, %c0_i32_0 : i32, i32, i32
  }
  func.func @transform_2(%arg0: i32) -> (i32, i32) {
    %c0_i32 = arith.constant 0 : i32
    %c0_i32_0 = arith.constant 0 : i32
    %c0_i32_1 = arith.constant 0 : i32
    return %c0_i32, %c0_i32_0 : i32, i32
  }
  func.func @transform_3(%arg0: i32) -> (i32, i32) {
    %c0_i32 = arith.constant 0 : i32
    %c0_i32_0 = arith.constant 0 : i32
    %c0_i32_1 = arith.constant 0 : i32
    return %c0_i32, %c0_i32_0 : i32, i32
  }
  func.func @transform_4(%arg0: i32) -> (i32, i32) {
    %c0_i32 = arith.constant 0 : i32
    %c0_i32_0 = arith.constant 0 : i32
    %c0_i32_1 = arith.constant 0 : i32
    return %c0_i32, %c0_i32_0 : i32, i32
  }
  func.func @transform_5(%arg0: i32) -> (i32, i32) {
    %c0_i32 = arith.constant 0 : i32
    %c0_i32_0 = arith.constant 0 : i32
    %c0_i32_1 = arith.constant 0 : i32
    return %c0_i32, %c0_i32_0 : i32, i32
  }
  func.func @transform_6(%arg0: i32) -> (i32, i32) {
    %c0_i32 = arith.constant 0 : i32
    %c0_i32_0 = arith.constant 0 : i32
    return %arg0, %c0_i32 : i32, i32
  }
}

</mosaic_0001>

<llo_original>
// kernel: tpu_custom_call.1
$region0: #{tpu_custom_call.1}
  #allocation0 [shape = 'u32[]', space=smem, size = 0x4, offset = 0x4, fixed_abs, tag = 'smem constant byte address 0x4 - core index']
  #allocation1 [shape = 'u32[144,128]{1,0:T(1,128)}', space=vmem, size = 0x12000, scoped, tag = 'internal scratch']
  %s0 = inlined_call_operand.vmem [shape: f32[256,32], index: 0, kind: input, shape index: {}]
  %s1 = inlined_call_operand.hbm [shape: f32[2,128,256], index: 1, kind: input, shape index: {}]
  %s2 = inlined_call_operand.vmem [shape: f32[32,160], index: 2, kind: input, shape index: {}]
  %s3 = inlined_call_operand.vmem [shape: f32[1,160], index: 3, kind: input, shape index: {}]
  %s4 = inlined_call_operand.vmem [shape: f32[32,96], index: 4, kind: input, shape index: {}]
  %s5 = inlined_call_operand.vmem [shape: f32[1,96], index: 5, kind: input, shape index: {}]
  %s6 = inlined_call_operand.vmem [shape: f32[256,32], index: 6, kind: output, shape index: {}]
  %s7 = sld [smem:[#allocation0]]
  $region61: #{tpu_custom_call.1} parent=0
    _
  %s9 = ssub.s32 1, %s7
  %s10 = scalar_select 0, %s9, %s7
  $region1: #{tpu_custom_call.1} parent=0
    #allocation2 [shape = 'u8[262144]{0}', space=vmem, size = 0x40000, scoped, tag = 'input window, operand 1']
    #allocation3 [shape = 's32[2]{0}', space=sflag, size = 0x8, scoped, tag = 'scoped memory for tpu_custom_call.1']
    %11 = vsyncpa [#allocation3], 0
    %s12 = scalar_lea.sflag [#allocation3], 1
    %13 = vsyncpa %s12, 0
    loop: start=0, step=1, limit=4
    $region2: #{tpu_custom_call.1} parent=1 // loop_pre_header
      _
    $region3: #{tpu_custom_call.1} parent=1 // loop_header
      %s15 = sphi 0, %s19
      %p16 = scmp.ge.s32.totalorder %s15, 4
      %s25 = sphi 0, %s27
      %s28 = sphi 0, %s25
      %s29 = sphi 0, %s28
      %s45 = sphi 0, %s29
      %s51 = sphi 0, %s53
      %s54 = sphi 0, %s51
      %s55 = sphi 0, %s54
      %s71 = sphi 0, %s55
      %s75 = sphi 0, %s75
      %s77 = sphi 0, %s75
      %s78 = sphi 0, %s77
      %s92 = sphi 0, %s78
      %s96 = sphi 0, %s96
      %s98 = sphi 0, %s96
      %s99 = sphi 0, %s98
      %s113 = sphi 0, %s99
      %s117 = sphi 0, %s117
      %s119 = sphi 0, %s117
      %s120 = sphi 0, %s119
      %s134 = sphi 0, %s120
      %s138 = sphi 0, %s138
      %s140 = sphi 0, %s138
      %s141 = sphi 0, %s140
      %s155 = sphi 0, %s141
      %s161 = sphi 0, %s163
      %s164 = sphi 0, %s161
      %s165 = sphi 0, %s164
      %s181 = sphi 0, %s165
    $region4: #{tpu_custom_call.1} parent=1 // loop_header_branch
      %18 = sbr.rel (%p16) target = $region8
    $region5: #{tpu_custom_call.1} parent=1 // loop_body
      %s20 = ssub.s32 %s15, 1
      %s21 = ssub.s32 %s15, 2
      %s22 = sadd.s32 %s15, 1
      %s23 = ssub.s32 %s15, %s22
      %p24 = scmp.eq.s32.totalorder %s23, 0
      %s26 = sadd.s32 %s25, 1
      %s27 = scalar_select %p24, %s25, %s26
      %p30 = pneg %p24
      %p31 = scmp.eq.s32.totalorder %s15, 1
      %p32 = por %p30, %p31
      %p33 = scmp.ne.s32.totalorder %s25, %s28
      %p34 = scmp.eq.s32.totalorder %s15, 0
      %p35 = por %p33, %p34
      %p36 = scmp.ne.s32.totalorder %s25, %s28
      %p37 = scmp.eq.s32.totalorder %s20, 1
      %p38 = por %p36, %p37
      %p39 = scmp.ne.s32.totalorder %s28, %s29
      %p40 = scmp.eq.s32.totalorder %s20, 0
      %p41 = por %p39, %p40
      %p42 = scmp.ne.s32.totalorder %s28, %s29
      %p43 = scmp.eq.s32.totalorder %s21, 1
      %p44 = por %p42, %p43
      %p46 = scmp.ne.s32.totalorder %s29, %s45
      %p47 = scmp.eq.s32.totalorder %s21, 0
      %p48 = por %p46, %p47
      %s49 = ssub.s32 %s15, %s22
      %p50 = scmp.eq.s32.totalorder %s49, 0
      %s52 = sadd.s32 %s51, 1
      %s53 = scalar_select %p50, %s51, %s52
      %p56 = pneg %p50
      %p57 = scmp.eq.s32.totalorder %s15, 1
      %p58 = por %p56, %p57
      %p59 = scmp.ne.s32.totalorder %s51, %s54
      %p60 = scmp.eq.s32.totalorder %s15, 0
      %p61 = por %p59, %p60
      %p62 = scmp.ne.s32.totalorder %s51, %s54
      %p63 = scmp.eq.s32.totalorder %s20, 1
      %p64 = por %p62, %p63
      %p65 = scmp.ne.s32.totalorder %s54, %s55
      %p66 = scmp.eq.s32.totalorder %s20, 0
      %p67 = por %p65, %p66
      %p68 = scmp.ne.s32.totalorder %s54, %s55
      %p69 = scmp.eq.s32.totalorder %s21, 1
      %p70 = por %p68, %p69
      %p72 = scmp.ne.s32.totalorder %s55, %s71
      %p73 = scmp.eq.s32.totalorder %s21, 0
      %p74 = por %p72, %p73
      %s76 = sadd.s32 %s75, 1
      %p79 = scmp.eq.s32.totalorder %s15, 1
      %p80 = scmp.ne.s32.totalorder %s75, %s77
      %p81 = scmp.eq.s32.totalorder %s15, 0
      %p82 = por %p80, %p81
      %p83 = scmp.ne.s32.totalorder %s75, %s77
      %p84 = scmp.eq.s32.totalorder %s20, 1
      %p85 = por %p83, %p84
      %p86 = scmp.ne.s32.totalorder %s77, %s78
      %p87 = scmp.eq.s32.totalorder %s20, 0
      %p88 = por %p86, %p87
      %p89 = scmp.ne.s32.totalorder %s77, %s78
      %p90 = scmp.eq.s32.totalorder %s21, 1
      %p91 = por %p89, %p90
      %p93 = scmp.ne.s32.totalorder %s78, %s92
      %p94 = scmp.eq.s32.totalorder %s21, 0
      %p95 = por %p93, %p94
      %s97 = sadd.s32 %s96, 1
      %p100 = scmp.eq.s32.totalorder %s15, 1
      %p101 = scmp.ne.s32.totalorder %s96, %s98
      %p102 = scmp.eq.s32.totalorder %s15, 0
      %p103 = por %p101, %p102
      %p104 = scmp.ne.s32.totalorder %s96, %s98
      %p105 = scmp.eq.s32.totalorder %s20, 1
      %p106 = por %p104, %p105
      %p107 = scmp.ne.s32.totalorder %s98, %s99
      %p108 = scmp.eq.s32.totalorder %s20, 0
      %p109 = por %p107, %p108
      %p110 = scmp.ne.s32.totalorder %s98, %s99
      %p111 = scmp.eq.s32.totalorder %s21, 1
      %p112 = por %p110, %p111
      %p114 = scmp.ne.s32.totalorder %s99, %s113
      %p115 = scmp.eq.s32.totalorder %s21, 0
      %p116 = por %p114, %p115
      %s118 = sadd.s32 %s117, 1
      %p121 = scmp.eq.s32.totalorder %s15, 1
      %p122 = scmp.ne.s32.totalorder %s117, %s119
      %p123 = scmp.eq.s32.totalorder %s15, 0
      %p124 = por %p122, %p123
      %p125 = scmp.ne.s32.totalorder %s117, %s119
      %p126 = scmp.eq.s32.totalorder %s20, 1
      %p127 = por %p125, %p126
      %p128 = scmp.ne.s32.totalorder %s119, %s120
      %p129 = scmp.eq.s32.totalorder %s20, 0
      %p130 = por %p128, %p129
      %p131 = scmp.ne.s32.totalorder %s119, %s120
      %p132 = scmp.eq.s32.totalorder %s21, 1
      %p133 = por %p131, %p132
      %p135 = scmp.ne.s32.totalorder %s120, %s134
      %p136 = scmp.eq.s32.totalorder %s21, 0
      %p137 = por %p135, %p136
      %s139 = sadd.s32 %s138, 1
      %p142 = scmp.eq.s32.totalorder %s15, 1
      %p143 = scmp.ne.s32.totalorder %s138, %s140
      %p144 = scmp.eq.s32.totalorder %s15, 0
      %p145 = por %p143, %p144
      %p146 = scmp.ne.s32.totalorder %s138, %s140
      %p147 = scmp.eq.s32.totalorder %s20, 1
      %p148 = por %p146, %p147
      %p149 = scmp.ne.s32.totalorder %s140, %s141
      %p150 = scmp.eq.s32.totalorder %s20, 0
      %p151 = por %p149, %p150
      %p152 = scmp.ne.s32.totalorder %s140, %s141
      %p153 = scmp.eq.s32.totalorder %s21, 1
      %p154 = por %p152, %p153
      %p156 = scmp.ne.s32.totalorder %s141, %s155
      %p157 = scmp.eq.s32.totalorder %s21, 0
      %p158 = por %p156, %p157
      %s159 = ssub.s32 %s15, %s22
      %p160 = scmp.eq.s32.totalorder %s159, 0
      %s162 = sadd.s32 %s161, 1
      %s163 = scalar_select %p160, %s161, %s162
      %p166 = pneg %p160
      %p167 = scmp.eq.s32.totalorder %s15, 1
      %p168 = por %p166, %p167
      %p169 = scmp.ne.s32.totalorder %s161, %s164
      %p170 = scmp.eq.s32.totalorder %s15, 0
      %p171 = por %p169, %p170
      %p172 = scmp.ne.s32.totalorder %s161, %s164
      %p173 = scmp.eq.s32.totalorder %s20, 1
      %p174 = por %p172, %p173
      %p175 = scmp.ne.s32.totalorder %s164, %s165
      %p176 = scmp.eq.s32.totalorder %s20, 0
      %p177 = por %p175, %p176
      %p178 = scmp.ne.s32.totalorder %s164, %s165
      %p179 = scmp.eq.s32.totalorder %s21, 1
      %p180 = por %p178, %p179
      %p182 = scmp.ne.s32.totalorder %s165, %s181
      %p183 = scmp.eq.s32.totalorder %s21, 0
      %p184 = por %p182, %p183
      %p185 = scmp.le.s32.totalorder 1, %s15
      %p186 = scmp.lt.s32.totalorder %s15, 3
      %p187 = pnand %p185, %p186
      %p188 = pneg %p187
      // Predicated region
      $region9: #{tpu_custom_call.1} parent=5 // pred_check
        _
      $region10: #{tpu_custom_call.1} parent=5 // pred_check_branch
        %190 = sbr.rel (%p187) target = $region12
      $region11: #{tpu_custom_call.1} parent=5 // pred_region
        %s191 = ssub.s32 %s15, 1
        // Predicated region
        $region13: #{tpu_custom_call.1} parent=11 // pred_check
          %p192 = pneg %p88
        $region14: #{tpu_custom_call.1} parent=11 // pred_check_branch
          %194 = sbr.rel (%p192) target = $region16
        $region15: #{tpu_custom_call.1} parent=11 // pred_region
          _
        $region16: #{tpu_custom_call.1} parent=11 // pred_fallthru
          _
        // Predicated region
        $region17: #{tpu_custom_call.1} parent=11 // pred_check
          %p195 = pneg %p109
        $region18: #{tpu_custom_call.1} parent=11 // pred_check_branch
          %197 = sbr.rel (%p195) target = $region20
        $region19: #{tpu_custom_call.1} parent=11 // pred_region
          _
        $region20: #{tpu_custom_call.1} parent=11 // pred_fallthru
          _
        // Predicated region
        $region21: #{tpu_custom_call.1} parent=11 // pred_check
          %p198 = pneg %p130
        $region22: #{tpu_custom_call.1} parent=11 // pred_check_branch
          %200 = sbr.rel (%p198) target = $region24
        $region23: #{tpu_custom_call.1} parent=11 // pred_region
          _
        $region24: #{tpu_custom_call.1} parent=11 // pred_fallthru
          _
        // Predicated region
        $region25: #{tpu_custom_call.1} parent=11 // pred_check
          %p201 = pneg %p151
        $region26: #{tpu_custom_call.1} parent=11 // pred_check_branch
          %203 = sbr.rel (%p201) target = $region28
        $region27: #{tpu_custom_call.1} parent=11 // pred_region
          _
        $region28: #{tpu_custom_call.1} parent=11 // pred_fallthru
          _
      $region12: #{tpu_custom_call.1} parent=5 // pred_fallthru
        _
      %p204 = scmp.lt.s32.totalorder %s15, 2
      // Predicated region
      $region29: #{tpu_custom_call.1} parent=5 // pred_check
        %p205 = pneg %p204
      $region30: #{tpu_custom_call.1} parent=5 // pred_check_branch
        %207 = sbr.rel (%p205) target = $region32
      $region31: #{tpu_custom_call.1} parent=5 // pred_region
        // Predicated region
        $region33: #{tpu_custom_call.1} parent=31 // pred_check
          %p208 = pneg %p35
        $region34: #{tpu_custom_call.1} parent=31 // pred_check_branch
          %210 = sbr.rel (%p208) target = $region36
        $region35: #{tpu_custom_call.1} parent=31 // pred_region
          %s211 = smul.u32 16, %s15
          %p212 = scmp.lt.s32.totalorder %s211, 31
          %s213 = scalar_select %p212, %s211, 31
          %s214 = smul.addr %s213, 8
          %s215 = scalar_lea.vmem %s0, %s214
          %s216 = smul.u32 16, %s15
        $region36: #{tpu_custom_call.1} parent=31 // pred_fallthru
          _
        // Predicated region
        $region37: #{tpu_custom_call.1} parent=31 // pred_check
          %p217 = pneg %p61
        $region38: #{tpu_custom_call.1} parent=31 // pred_check_branch
          %219 = sbr.rel (%p217) target = $region40
        $region39: #{tpu_custom_call.1} parent=31 // pred_region
          %s220 = sand.u32 %s51, 1
          %s221 = scalar_lea.sflag [#allocation3], %s220
          %s222 = sand.u32 %s51, 1
          %s223 = smul.addr %s222, 256
          %s224 = scalar_lea.vmem [#allocation2], %s223
          %s226 = ssub.s32 4096, 4096
          %227 = vsyncadd %s221, %s226
          %s228 = smul.addr %s15, 32
          %s229 = smul.addr %s228, 128
          %s230 = scalar_lea.hbm %s1, %s229
          %s231 = sshll.u32 %s224, 4
          %s232 = int_to_ptr.vmem [resolvable:$true] %s231
          %237 = dma.hbm_to_vmem [thread:$0]  %s230, 4096, %s232, %s221, 256, 256, 16
        $region40: #{tpu_custom_call.1} parent=31 // pred_fallthru
          _
      $region32: #{tpu_custom_call.1} parent=5 // pred_fallthru
        _
      %p238 = scmp.le.s32.totalorder 1, %s15
      %p239 = scmp.lt.s32.totalorder %s15, 3
      %p240 = pnand %p238, %p239
      %p241 = pneg %p240
      // Predicated region
      $region41: #{tpu_custom_call.1} parent=5 // pred_check
        _
      $region42: #{tpu_custom_call.1} parent=5 // pred_check_branch
        %243 = sbr.rel (%p240) target = $region44
      $region43: #{tpu_custom_call.1} parent=5 // pred_region
        %s244 = ssub.s32 %s15, 1
        %s245 = sand.u32 %s54, 1
        %s246 = scalar_lea.sflag [#allocation3], %s245
        %s247 = sand.u32 %s54, 1
        %s248 = smul.addr %s247, 256
        %s249 = scalar_lea.vmem [#allocation2], %s248
        // Predicated region
        $region45: #{tpu_custom_call.1} parent=43 // pred_check
          %p250 = pneg %p67
        $region46: #{tpu_custom_call.1} parent=43 // pred_check_branch
          %252 = sbr.rel (%p250) target = $region48
        $region47: #{tpu_custom_call.1} parent=43 // pred_region
          %253 = dma.done %s246, 4096
        $region48: #{tpu_custom_call.1} parent=43 // pred_fallthru
          _
        %s254 = smul.u32 16, %s20
        %p255 = scmp.lt.s32.totalorder %s254, 31
        %s256 = scalar_select %p255, %s254, 31
        %s257 = smul.addr %s256, 8
        %s258 = scalar_lea.vmem %s0, %s257
        %p259 = pneg %p41
        %p260 = pneg %p38
        %s261 = sand.u32 %s54, 1
        %s262 = scalar_lea.sflag [#allocation3], %s261
        %s263 = sand.u32 %s54, 1
        %s264 = smul.addr %s263, 256
        %s265 = scalar_lea.vmem [#allocation2], %s264
        %p266 = pneg %p67
        %p267 = pneg %p64
        %p268 = pneg %p88
        %p269 = pneg %p85
        %p270 = pneg %p109
        %p271 = pneg %p106
        %p272 = pneg %p130
        %p273 = pneg %p127
        %p274 = pneg %p151
        %p275 = pneg %p148
        %p276 = pneg %p177
        %p277 = pneg %p174
        %s278 = smul.u32 16, %s20
        %p279 = scmp.lt.s32.totalorder %s278, 31
        %s280 = scalar_select %p279, %s278, 31
        %s281 = smul.addr %s280, 8
        %s282 = scalar_lea.vmem %s6, %s281
        %s283 = smul.u32 16, %s20
        %p284 = scmp.lt.s32.totalorder %s283, 31
        %s285 = scalar_select %p284, %s283, 31
        %s286 = smul.addr %s285, 8
        %s287 = scalar_lea.vmem %s0, %s286
        %s288 = smul.u32 16, %s20
        %s289 = smul.u32 16, %s20
        %p290 = scmp.lt.s32.totalorder %s289, 31
        %s291 = scalar_select %p290, %s289, 31
        %s292 = smul.addr %s291, 8
        %s293 = scalar_lea.vmem %s6, %s292
        %s294 = smul.u32 16, %s20
        %v295 = vld [vmem:[%s2] sm:$0xff]
        %v296 = vld [vmem:[%s2 + $0x8] sm:$0xff]
        %v297 = vld [vmem:[%s2 + $0x10] sm:$0xff]
        %v298 = vld [vmem:[%s2 + $0x18] sm:$0xff]
        %v299 = vld [vmem:[%s2 + $0x20] sm:$0xff]
        %v300 = vld [vmem:[%s2 + $0x28] sm:$0xff]
        %v301 = vld [vmem:[%s2 + $0x30] sm:$0xff]
        %v302 = vld [vmem:[%s2 + $0x38] sm:$0xff]
        %v303 = vld [vmem:[%s3] sm:$0x3]
        %v304 = vld [vmem:[%s4] sm:$0xff]
        %v305 = vld [vmem:[%s4 + $0x8] sm:$0xff]
        %v306 = vld [vmem:[%s4 + $0x10] sm:$0xff]
        %v307 = vld [vmem:[%s4 + $0x18] sm:$0xff]
        %v308 = vld [vmem:[%s5] sm:$0x1]
        %v309 = vld [vmem:[%s287] sm:$0xff]
        %v310 = vld [vmem:[%s287 + $0x8] sm:$0xff]
        %v311 = vld [vmem:[%s287 + $0x10] sm:$0xff]
        %v312 = vld [vmem:[%s287 + $0x18] sm:$0xff]
        %v313 = vld [vmem:[%s287 + $0x20] sm:$0xff]
        %v314 = vld [vmem:[%s287 + $0x28] sm:$0xff]
        %v315 = vld [vmem:[%s287 + $0x30] sm:$0xff]
        %v316 = vld [vmem:[%s287 + $0x38] sm:$0xff]
        %v317 = vld [vmem:[%s287 + $0x40] sm:$0xff]
        %v318 = vld [vmem:[%s287 + $0x48] sm:$0xff]
        %v319 = vld [vmem:[%s287 + $0x50] sm:$0xff]
        %v320 = vld [vmem:[%s287 + $0x58] sm:$0xff]
        %v321 = vld [vmem:[%s287 + $0x60] sm:$0xff]
        %v322 = vld [vmem:[%s287 + $0x68] sm:$0xff]
        %v323 = vld [vmem:[%s287 + $0x70] sm:$0xff]
        %v324 = vld [vmem:[%s287 + $0x78] sm:$0xff]
        %v326 = vlaneseq
        %v327 = vshrl.u32 %v326, 7
        %v328 = vsub.s32 0, %v327
        %v329 = vrot.slane %v303, %v328
        %v330 = vlaneseq
        %v331 = vshrl.u32 %v330, 7
        %v332 = vsub.s32 1, %v331
        %v333 = vrot.slane %v303, %v332
        %vm336 = vcmask 261120
        %v338 = vsel %vm336, %v309, 0
        %v341 = vsel %vm336, %v310, 0
        %v344 = vsel %vm336, %v311, 0
        %v347 = vsel %vm336, %v312, 0
        %v350 = vsel %vm336, %v313, 0
        %v353 = vsel %vm336, %v314, 0
        %v356 = vsel %vm336, %v315, 0
        %v359 = vsel %vm336, %v316, 0
        %v362 = vsel %vm336, %v317, 0
        %v365 = vsel %vm336, %v318, 0
        %v368 = vsel %vm336, %v319, 0
        %v371 = vsel %vm336, %v320, 0
        %v374 = vsel %vm336, %v321, 0
        %v377 = vsel %vm336, %v322, 0
        %v380 = vsel %vm336, %v323, 0
        %v383 = vsel %vm336, %v324, 0
        %385 = vmatprep.subr.mxu0 %v296
        %386 = vmatpush1.msra.mxu0 %v295
        %387 = vmatprep.subr.mxu0 %v298
        %388 = vmatpush1.msra.mxu0 %v297
        %389 = vmatprep.subr.mxu0 %v300
        %390 = vmatpush1.msra.mxu0 %v299
        %391 = vmatprep.subr.mxu0 %v302
        %392 = vmatpush1.msra.mxu0 %v301
        %393 = vmatprep.subr.mxu0 0.0
        %394 = vmatpush1.msra.mxu0 0.0
        %395 = vmatprep.subr.mxu0 0.0
        %396 = vmatpush1.msra.mxu0 0.0
        %397 = vmatprep.subr.mxu0 0.0
        %398 = vmatpush1.msra.mxu0 0.0
        %399 = vmatprep.subr.mxu0 0.0
        %400 = vmatpush1.msra.mxu0 0.0
        %401 = vmatprep.subr.mxu0 0.0
        %402 = vmatpush1.msra.mxu0 0.0
        %403 = vmatprep.subr.mxu0 0.0
        %404 = vmatpush1.msra.mxu0 0.0
        %405 = vmatprep.subr.mxu0 0.0
        %406 = vmatpush1.msra.mxu0 0.0
        %407 = vmatprep.subr.mxu0 0.0
        %408 = vmatpush1.msra.mxu0 0.0
        %409 = vmatprep.subr.mxu0 0.0
        %410 = vmatpush1.msra.mxu0 0.0
        %411 = vmatprep.subr.mxu0 0.0
        %412 = vmatpush1.msra.mxu0 0.0
        %413 = vmatprep.subr.mxu0 0.0
        %414 = vmatpush1.msra.mxu0 0.0
        %415 = vmatprep.subr.mxu0 0.0
        %416 = vmatpush1.msra.mxu0 0.0
        %417 = vmatprep.subr.mxu0 0.0
        %418 = vmatpush1.msra.mxu0 0.0
        %419 = vmatprep.subr.mxu0 0.0
        %420 = vmatpush1.msra.mxu0 0.0
        %421 = vmatprep.subr.mxu0 0.0
        %422 = vmatpush1.msra.mxu0 0.0
        %423 = vmatprep.subr.mxu0 0.0
        %424 = vmatpush1.msra.mxu0 0.0
        %425 = vmatprep.subr.mxu0 0.0
        %426 = vmatpush1.msra.mxu0 0.0
        %427 = vmatprep.subr.mxu0 0.0
        %428 = vmatpush1.msra.mxu0 0.0
        %429 = vmatprep.subr.mxu0 0.0
        %430 = vmatpush1.msra.mxu0 0.0
        %431 = vmatprep.subr.mxu0 0.0
        %432 = vmatpush1.msra.mxu0 0.0
        %433 = vmatprep.subr.mxu0 0.0
        %434 = vmatpush1.msra.mxu0 0.0
        %435 = vmatprep.subr.mxu0 0.0
        %436 = vmatpush1.msra.mxu0 0.0
        %437 = vmatprep.subr.mxu0 0.0
        %438 = vmatpush1.msra.mxu0 0.0
        %439 = vmatprep.subr.mxu0 0.0
        %440 = vmatpush1.msra.mxu0 0.0
        %441 = vmatprep.subr.mxu0 0.0
        %442 = vmatpush1.msra.mxu0 0.0
        %443 = vmatprep.subr.mxu0 0.0
        %444 = vmatpush1.msra.mxu0 0.0
        %445 = vmatprep.subr.mxu0 0.0
        %446 = vmatpush1.msra.mxu0 0.0
        %447 = vmatprep.subr.mxu0 0.0
        %448 = vmatpush1.msra.mxu0 0.0
        %449 = vmatprep.mubr.f32.mxu0 0.0
        %450 = vmatmul.mubr.f32.gmra.mrb[0].mxu0 %v338
        %v451 = vpop.f32.mrb[0].mxu0
        %v452 = vadd.f32 %v329, %v451
        %v453 = vpop.f32.mrb[0].mxu0
        %v454 = vadd.f32 %v333, %v453
        %455 = vmatprep.mubr.f32.mxu0 0.0
        %456 = vmatmul.mubr.f32.gmra.mrb[0].mxu0 %v341
        %v457 = vpop.f32.mrb[0].mxu0
        %v458 = vadd.f32 %v329, %v457
        %v459 = vpop.f32.mrb[0].mxu0
        %v460 = vadd.f32 %v333, %v459
        %461 = vmatprep.mubr.f32.mxu0 0.0
        %462 = vmatmul.mubr.f32.gmra.mrb[0].mxu0 %v344
        %v463 = vpop.f32.mrb[0].mxu0
        %v464 = vadd.f32 %v329, %v463
        %v465 = vpop.f32.mrb[0].mxu0
        %v466 = vadd.f32 %v333, %v465
        %467 = vmatprep.mubr.f32.mxu0 0.0
        %468 = vmatmul.mubr.f32.gmra.mrb[0].mxu0 %v347
        %v469 = vpop.f32.mrb[0].mxu0
        %v470 = vadd.f32 %v329, %v469
        %v471 = vpop.f32.mrb[0].mxu0
        %v472 = vadd.f32 %v333, %v471
        %473 = vmatprep.mubr.f32.mxu0 0.0
        %474 = vmatmul.mubr.f32.gmra.mrb[0].mxu0 %v350
        %v475 = vpop.f32.mrb[0].mxu0
        %v476 = vadd.f32 %v329, %v475
        %v477 = vpop.f32.mrb[0].mxu0
        %v478 = vadd.f32 %v333, %v477
        %479 = vmatprep.mubr.f32.mxu0 0.0
        %480 = vmatmul.mubr.f32.gmra.mrb[0].mxu0 %v353
        %v481 = vpop.f32.mrb[0].mxu0
        %v482 = vadd.f32 %v329, %v481
        %v483 = vpop.f32.mrb[0].mxu0
        %v484 = vadd.f32 %v333, %v483
        %485 = vmatprep.mubr.f32.mxu0 0.0
        %486 = vmatmul.mubr.f32.gmra.mrb[0].mxu0 %v356
        %v487 = vpop.f32.mrb[0].mxu0
        %v488 = vadd.f32 %v329, %v487
        %v489 = vpop.f32.mrb[0].mxu0
        %v490 = vadd.f32 %v333, %v489
        %491 = vmatprep.mubr.f32.mxu0 0.0
        %492 = vmatmul.mubr.f32.gmra.mrb[0].mxu0 %v359
        %v493 = vpop.f32.mrb[0].mxu0
        %v494 = vadd.f32 %v329, %v493
        %v495 = vpop.f32.mrb[0].mxu0
        %v496 = vadd.f32 %v333, %v495
        %497 = vmatprep.mubr.f32.mxu0 0.0
        %498 = vmatmul.mubr.f32.gmra.mrb[0].mxu0 %v362
        %v499 = vpop.f32.mrb[0].mxu0
        %v500 = vadd.f32 %v329, %v499
        %v501 = vpop.f32.mrb[0].mxu0
        %v502 = vadd.f32 %v333, %v501
        %503 = vmatprep.mubr.f32.mxu0 0.0
        %504 = vmatmul.mubr.f32.gmra.mrb[0].mxu0 %v365
        %v505 = vpop.f32.mrb[0].mxu0
        %v506 = vadd.f32 %v329, %v505
        %v507 = vpop.f32.mrb[0].mxu0
        %v508 = vadd.f32 %v333, %v507
        %509 = vmatprep.mubr.f32.mxu0 0.0
        %510 = vmatmul.mubr.f32.gmra.mrb[0].mxu0 %v368
        %v511 = vpop.f32.mrb[0].mxu0
        %v512 = vadd.f32 %v329, %v511
        %v513 = vpop.f32.mrb[0].mxu0
        %v514 = vadd.f32 %v333, %v513
        %515 = vmatprep.mubr.f32.mxu0 0.0
        %516 = vmatmul.mubr.f32.gmra.mrb[0].mxu0 %v371
        %v517 = vpop.f32.mrb[0].mxu0
        %v518 = vadd.f32 %v329, %v517
        %v519 = vpop.f32.mrb[0].mxu0
        %v520 = vadd.f32 %v333, %v519
        %521 = vmatprep.mubr.f32.mxu0 0.0
        %522 = vmatmul.mubr.f32.gmra.mrb[0].mxu0 %v374
        %v523 = vpop.f32.mrb[0].mxu0
        %v524 = vadd.f32 %v329, %v523
        %v525 = vpop.f32.mrb[0].mxu0
        %v526 = vadd.f32 %v333, %v525
        %527 = vmatprep.mubr.f32.mxu0 0.0
        %528 = vmatmul.mubr.f32.gmra.mrb[0].mxu0 %v377
        %v529 = vpop.f32.mrb[0].mxu0
        %v530 = vadd.f32 %v329, %v529
        %v531 = vpop.f32.mrb[0].mxu0
        %v532 = vadd.f32 %v333, %v531
        %533 = vmatprep.mubr.f32.mxu0 0.0
        %534 = vmatmul.mubr.f32.gmra.mrb[0].mxu0 %v380
        %v535 = vpop.f32.mrb[0].mxu0
        %v536 = vadd.f32 %v329, %v535
        %v537 = vpop.f32.mrb[0].mxu0
        %v538 = vadd.f32 %v333, %v537
        %539 = vmatprep.mubr.f32.mxu0 0.0
        %540 = vmatmul.mubr.f32.gmra.mrb[0].mxu0 %v383
        %v541 = vpop.f32.mrb[0].mxu0
        %v542 = vadd.f32 %v329, %v541
        %v543 = vpop.f32.mrb[0].mxu0
        %v544 = vadd.f32 %v333, %v543
        %545 = vdwg.mxu0
        %562 = vrot.lane.b32.xlu0 %v454, 96
        %v563 = vpop.permute.xlu0 %562
        %564 = vrot.lane.b32.xlu0 %v460, 96
        %v565 = vpop.permute.xlu0 %564
        %566 = vrot.lane.b32.xlu0 %v466, 96
        %v567 = vpop.permute.xlu0 %566
        %568 = vrot.lane.b32.xlu0 %v472, 96
        %v569 = vpop.permute.xlu0 %568
        %570 = vrot.lane.b32.xlu0 %v478, 96
        %v571 = vpop.permute.xlu0 %570
        %572 = vrot.lane.b32.xlu0 %v484, 96
        %v573 = vpop.permute.xlu0 %572
        %574 = vrot.lane.b32.xlu0 %v490, 96
        %v575 = vpop.permute.xlu0 %574
        %576 = vrot.lane.b32.xlu0 %v496, 96
        %v577 = vpop.permute.xlu0 %576
        %578 = vrot.lane.b32.xlu0 %v502, 96
        %v579 = vpop.permute.xlu0 %578
        %580 = vrot.lane.b32.xlu0 %v508, 96
        %v581 = vpop.permute.xlu0 %580
        %582 = vrot.lane.b32.xlu0 %v514, 96
        %v583 = vpop.permute.xlu0 %582
        %584 = vrot.lane.b32.xlu0 %v520, 96
        %v585 = vpop.permute.xlu0 %584
        %586 = vrot.lane.b32.xlu0 %v526, 96
        %v587 = vpop.permute.xlu0 %586
        %588 = vrot.lane.b32.xlu0 %v532, 96
        %v589 = vpop.permute.xlu0 %588
        %590 = vrot.lane.b32.xlu0 %v538, 96
        %v591 = vpop.permute.xlu0 %590
        %592 = vrot.lane.b32.xlu0 %v544, 96
        %v593 = vpop.permute.xlu0 %592
        %v594 = vld [vmem:[%s249] sm:$0xff]
        %v595 = vld [vmem:[%s249 + $0x8] sm:$0xff]
        %v596 = vld [vmem:[%s249 + $0x10] sm:$0xff]
        %v597 = vld [vmem:[%s249 + $0x18] sm:$0xff]
        %v598 = vld [vmem:[%s249 + $0x20] sm:$0xff]
        %v599 = vld [vmem:[%s249 + $0x28] sm:$0xff]
        %v600 = vld [vmem:[%s249 + $0x30] sm:$0xff]
        %v601 = vld [vmem:[%s249 + $0x38] sm:$0xff]
        %v602 = vld [vmem:[%s249 + $0x40] sm:$0xff]
        %v603 = vld [vmem:[%s249 + $0x48] sm:$0xff]
        %v604 = vld [vmem:[%s249 + $0x50] sm:$0xff]
        %v605 = vld [vmem:[%s249 + $0x58] sm:$0xff]
        %v606 = vld [vmem:[%s249 + $0x60] sm:$0xff]
        %v607 = vld [vmem:[%s249 + $0x68] sm:$0xff]
        %v608 = vld [vmem:[%s249 + $0x70] sm:$0xff]
        %v609 = vld [vmem:[%s249 + $0x78] sm:$0xff]
        %v610 = vld [vmem:[%s249 + $0x80] sm:$0xff]
        %v611 = vld [vmem:[%s249 + $0x88] sm:$0xff]
        %v612 = vld [vmem:[%s249 + $0x90] sm:$0xff]
        %v613 = vld [vmem:[%s249 + $0x98] sm:$0xff]
        %v614 = vld [vmem:[%s249 + $0xa0] sm:$0xff]
        %v615 = vld [vmem:[%s249 + $0xa8] sm:$0xff]
        %v616 = vld [vmem:[%s249 + $0xb0] sm:$0xff]
        %v617 = vld [vmem:[%s249 + $0xb8] sm:$0xff]
        %v618 = vld [vmem:[%s249 + $0xc0] sm:$0xff]
        %v619 = vld [vmem:[%s249 + $0xc8] sm:$0xff]
        %v620 = vld [vmem:[%s249 + $0xd0] sm:$0xff]
        %v621 = vld [vmem:[%s249 + $0xd8] sm:$0xff]
        %v622 = vld [vmem:[%s249 + $0xe0] sm:$0xff]
        %v623 = vld [vmem:[%s249 + $0xe8] sm:$0xff]
        %v624 = vld [vmem:[%s249 + $0xf0] sm:$0xff]
        %v625 = vld [vmem:[%s249 + $0xf8] sm:$0xff]
        %642 = vrot.lane.b32.xlu0 %v452, 32
        %v643 = vpop.permute.xlu0 %642
        %644 = vrot.lane.b32.xlu0 %v458, 32
        %v645 = vpop.permute.xlu0 %644
        %646 = vrot.lane.b32.xlu0 %v464, 32
        %v647 = vpop.permute.xlu0 %646
        %648 = vrot.lane.b32.xlu0 %v470, 32
        %v649 = vpop.permute.xlu0 %648
        %650 = vrot.lane.b32.xlu0 %v476, 32
        %v651 = vpop.permute.xlu0 %650
        %652 = vrot.lane.b32.xlu0 %v482, 32
        %v653 = vpop.permute.xlu0 %652
        %654 = vrot.lane.b32.xlu0 %v488, 32
        %v655 = vpop.permute.xlu0 %654
        %656 = vrot.lane.b32.xlu0 %v494, 32
        %v657 = vpop.permute.xlu0 %656
        %658 = vrot.lane.b32.xlu0 %v500, 32
        %v659 = vpop.permute.xlu0 %658
        %660 = vrot.lane.b32.xlu0 %v506, 32
        %v661 = vpop.permute.xlu0 %660
        %662 = vrot.lane.b32.xlu0 %v512, 32
        %v663 = vpop.permute.xlu0 %662
        %664 = vrot.lane.b32.xlu0 %v518, 32
        %v665 = vpop.permute.xlu0 %664
        %666 = vrot.lane.b32.xlu0 %v524, 32
        %v667 = vpop.permute.xlu0 %666
        %668 = vrot.lane.b32.xlu0 %v530, 32
        %v669 = vpop.permute.xlu0 %668
        %670 = vrot.lane.b32.xlu0 %v536, 32
        %v671 = vpop.permute.xlu0 %670
        %672 = vrot.lane.b32.xlu0 %v542, 32
        %v673 = vpop.permute.xlu0 %672
        %674 = vrot.lane.b32.xlu0 %v563, 32
        %v675 = vpop.permute.xlu0 %674
        %676 = vrot.lane.b32.xlu0 %v565, 32
        %v677 = vpop.permute.xlu0 %676
        %678 = vrot.lane.b32.xlu0 %v567, 32
        %v679 = vpop.permute.xlu0 %678
        %680 = vrot.lane.b32.xlu0 %v569, 32
        %v681 = vpop.permute.xlu0 %680
        %682 = vrot.lane.b32.xlu0 %v571, 32
        %v683 = vpop.permute.xlu0 %682
        %684 = vrot.lane.b32.xlu0 %v573, 32
        %v685 = vpop.permute.xlu0 %684
        %686 = vrot.lane.b32.xlu0 %v575, 32
        %v687 = vpop.permute.xlu0 %686
        %688 = vrot.lane.b32.xlu0 %v577, 32
        %v689 = vpop.permute.xlu0 %688
        %690 = vrot.lane.b32.xlu0 %v579, 32
        %v691 = vpop.permute.xlu0 %690
        %692 = vrot.lane.b32.xlu0 %v581, 32
        %v693 = vpop.permute.xlu0 %692
        %694 = vrot.lane.b32.xlu0 %v583, 32
        %v695 = vpop.permute.xlu0 %694
        %696 = vrot.lane.b32.xlu0 %v585, 32
        %v697 = vpop.permute.xlu0 %696
        %698 = vrot.lane.b32.xlu0 %v587, 32
        %v699 = vpop.permute.xlu0 %698
        %700 = vrot.lane.b32.xlu0 %v589, 32
        %v701 = vpop.permute.xlu0 %700
        %702 = vrot.lane.b32.xlu0 %v591, 32
        %v703 = vpop.permute.xlu0 %702
        %704 = vrot.lane.b32.xlu0 %v593, 32
        %v705 = vpop.permute.xlu0 %704
        %738 = vmatprep.subr.mxu0 0.0
        %739 = vmatpush1.msra.mxu0 %v643
        %740 = vmatprep.subr.mxu0 0.0
        %741 = vmatpush1.msra.mxu0 %v645
        %742 = vmatprep.subr.mxu0 0.0
        %743 = vmatpush1.msra.mxu0 %v647
        %744 = vmatprep.subr.mxu0 0.0
        %745 = vmatpush1.msra.mxu0 %v649
        %746 = vmatprep.subr.mxu0 0.0
        %747 = vmatpush1.msra.mxu0 %v651
        %748 = vmatprep.subr.mxu0 0.0
        %749 = vmatpush1.msra.mxu0 %v653
        %750 = vmatprep.subr.mxu0 0.0
        %751 = vmatpush1.msra.mxu0 %v655
        %752 = vmatprep.subr.mxu0 0.0
        %753 = vmatpush1.msra.mxu0 %v657
        %754 = vmatprep.subr.mxu0 0.0
        %755 = vmatpush1.msra.mxu0 %v659
        %756 = vmatprep.subr.mxu0 0.0
        %757 = vmatpush1.msra.mxu0 %v661
        %758 = vmatprep.subr.mxu0 0.0
        %759 = vmatpush1.msra.mxu0 %v663
        %760 = vmatprep.subr.mxu0 0.0
        %761 = vmatpush1.msra.mxu0 %v665
        %762 = vmatprep.subr.mxu0 0.0
        %763 = vmatpush1.msra.mxu0 %v667
        %764 = vmatprep.subr.mxu0 0.0
        %765 = vmatpush1.msra.mxu0 %v669
        %766 = vmatprep.subr.mxu0 0.0
        %767 = vmatpush1.msra.mxu0 %v671
        %768 = vmatprep.subr.mxu0 0.0
        %769 = vmatpush1.msra.mxu0 %v673
        %770 = vmatprep.subr.mxu0 0.0
        %771 = vmatpush1.msra.mxu0 %v675
        %772 = vmatprep.subr.mxu0 0.0
        %773 = vmatpush1.msra.mxu0 %v677
        %774 = vmatprep.subr.mxu0 0.0
        %775 = vmatpush1.msra.mxu0 %v679
        %776 = vmatprep.subr.mxu0 0.0
        %777 = vmatpush1.msra.mxu0 %v681
        %778 = vmatprep.subr.mxu0 0.0
        %779 = vmatpush1.msra.mxu0 %v683
        %780 = vmatprep.subr.mxu0 0.0
        %781 = vmatpush1.msra.mxu0 %v685
        %782 = vmatprep.subr.mxu0 0.0
        %783 = vmatpush1.msra.mxu0 %v687
        %784 = vmatprep.subr.mxu0 0.0
        %785 = vmatpush1.msra.mxu0 %v689
        %786 = vmatprep.subr.mxu0 0.0
        %787 = vmatpush1.msra.mxu0 %v691
        %788 = vmatprep.subr.mxu0 0.0
        %789 = vmatpush1.msra.mxu0 %v693
        %790 = vmatprep.subr.mxu0 0.0
        %791 = vmatpush1.msra.mxu0 %v695
        %792 = vmatprep.subr.mxu0 0.0
        %793 = vmatpush1.msra.mxu0 %v697
        %794 = vmatprep.subr.mxu0 0.0
        %795 = vmatpush1.msra.mxu0 %v699
        %796 = vmatprep.subr.mxu0 0.0
        %797 = vmatpush1.msra.mxu0 %v701
        %798 = vmatprep.subr.mxu0 0.0
        %799 = vmatpush1.msra.mxu0 %v703
        %800 = vmatprep.subr.mxu0 0.0
        %801 = vmatpush1.msra.mxu0 %v705
        %802 = vmatprep.mubr.f32.mxu0 %v595
        %803 = vmatmul.mubr.f32.gmra.mrb[0].mxu0 %v594
        %v804 = vpop.f32.mrb[0].mxu0
        %v805 = vadd.f32 0.0, %v804
        %v806 = vpop.f32.mrb[0].mxu0
        %807 = vmatprep.mubr.f32.mxu0 %v597
        %808 = vmatmul.mubr.f32.gmra.mrb[0].mxu0 %v596
        %v809 = vpop.f32.mrb[0].mxu0
        %v810 = vadd.f32 0.0, %v809
        %v811 = vpop.f32.mrb[0].mxu0
        %812 = vmatprep.mubr.f32.mxu0 %v599
        %813 = vmatmul.mubr.f32.gmra.mrb[0].mxu0 %v598
        %v814 = vpop.f32.mrb[0].mxu0
        %v815 = vadd.f32 0.0, %v814
        %v816 = vpop.f32.mrb[0].mxu0
        %817 = vmatprep.mubr.f32.mxu0 %v601
        %818 = vmatmul.mubr.f32.gmra.mrb[0].mxu0 %v600
        %v819 = vpop.f32.mrb[0].mxu0
        %v820 = vadd.f32 0.0, %v819
        %v821 = vpop.f32.mrb[0].mxu0
        %822 = vmatprep.mubr.f32.mxu0 %v603
        %823 = vmatmul.mubr.f32.gmra.mrb[0].mxu0 %v602
        %v824 = vpop.f32.mrb[0].mxu0
        %v825 = vadd.f32 0.0, %v824
        %v826 = vpop.f32.mrb[0].mxu0
        %827 = vmatprep.mubr.f32.mxu0 %v605
        %828 = vmatmul.mubr.f32.gmra.mrb[0].mxu0 %v604
        %v829 = vpop.f32.mrb[0].mxu0
        %v830 = vadd.f32 0.0, %v829
        %v831 = vpop.f32.mrb[0].mxu0
        %832 = vmatprep.mubr.f32.mxu0 %v607
        %833 = vmatmul.mubr.f32.gmra.mrb[0].mxu0 %v606
        %v834 = vpop.f32.mrb[0].mxu0
        %v835 = vadd.f32 0.0, %v834
        %v836 = vpop.f32.mrb[0].mxu0
        %837 = vmatprep.mubr.f32.mxu0 %v609
        %838 = vmatmul.mubr.f32.gmra.mrb[0].mxu0 %v608
        %v839 = vpop.f32.mrb[0].mxu0
        %v840 = vadd.f32 0.0, %v839
        %v841 = vpop.f32.mrb[0].mxu0
        %842 = vmatprep.mubr.f32.mxu0 %v611
        %843 = vmatmul.mubr.f32.gmra.mrb[0].mxu0 %v610
        %v844 = vpop.f32.mrb[0].mxu0
        %v845 = vadd.f32 0.0, %v844
        %v846 = vpop.f32.mrb[0].mxu0
        %847 = vmatprep.mubr.f32.mxu0 %v613
        %848 = vmatmul.mubr.f32.gmra.mrb[0].mxu0 %v612
        %v849 = vpop.f32.mrb[0].mxu0
        %v850 = vadd.f32 0.0, %v849
        %v851 = vpop.f32.mrb[0].mxu0
        %852 = vmatprep.mubr.f32.mxu0 %v615
        %853 = vmatmul.mubr.f32.gmra.mrb[0].mxu0 %v614
        %v854 = vpop.f32.mrb[0].mxu0
        %v855 = vadd.f32 0.0, %v854
        %v856 = vpop.f32.mrb[0].mxu0
        %857 = vmatprep.mubr.f32.mxu0 %v617
        %858 = vmatmul.mubr.f32.gmra.mrb[0].mxu0 %v616
        %v859 = vpop.f32.mrb[0].mxu0
        %v860 = vadd.f32 0.0, %v859
        %v861 = vpop.f32.mrb[0].mxu0
        %862 = vmatprep.mubr.f32.mxu0 %v619
        %863 = vmatmul.mubr.f32.gmra.mrb[0].mxu0 %v618
        %v864 = vpop.f32.mrb[0].mxu0
        %v865 = vadd.f32 0.0, %v864
        %v866 = vpop.f32.mrb[0].mxu0
        %867 = vmatprep.mubr.f32.mxu0 %v621
        %868 = vmatmul.mubr.f32.gmra.mrb[0].mxu0 %v620
        %v869 = vpop.f32.mrb[0].mxu0
        %v870 = vadd.f32 0.0, %v869
        %v871 = vpop.f32.mrb[0].mxu0
        %872 = vmatprep.mubr.f32.mxu0 %v623
        %873 = vmatmul.mubr.f32.gmra.mrb[0].mxu0 %v622
        %v874 = vpop.f32.mrb[0].mxu0
        %v875 = vadd.f32 0.0, %v874
        %v876 = vpop.f32.mrb[0].mxu0
        %877 = vmatprep.mubr.f32.mxu0 %v625
        %878 = vmatmul.mubr.f32.gmra.mrb[0].mxu0 %v624
        %v879 = vpop.f32.mrb[0].mxu0
        %v880 = vadd.f32 0.0, %v879
        %v881 = vpop.f32.mrb[0].mxu0
        %882 = vdwg.mxu0
        %v884 = vlaneseq
        %v885 = vshrl.u32 %v884, 7
        %v886 = vsub.s32 0, %v885
        %v887 = vrot.slane %v308, %v886
        %v890 = vsel %vm336, %v805, 0
        %v893 = vsel %vm336, %v810, 0
        %v896 = vsel %vm336, %v815, 0
        %v899 = vsel %vm336, %v820, 0
        %v902 = vsel %vm336, %v825, 0
        %v905 = vsel %vm336, %v830, 0
        %v908 = vsel %vm336, %v835, 0
        %v911 = vsel %vm336, %v840, 0
        %v914 = vsel %vm336, %v845, 0
        %v917 = vsel %vm336, %v850, 0
        %v920 = vsel %vm336, %v855, 0
        %v923 = vsel %vm336, %v860, 0
        %v926 = vsel %vm336, %v865, 0
        %v929 = vsel %vm336, %v870, 0
        %v932 = vsel %vm336, %v875, 0
        %v935 = vsel %vm336, %v880, 0
        %937 = vmatprep.subr.mxu0 0.0
        %938 = vmatpush1.msra.mxu0 %v304
        %939 = vmatprep.subr.mxu0 0.0
        %940 = vmatpush1.msra.mxu0 %v305
        %941 = vmatprep.subr.mxu0 0.0
        %942 = vmatpush1.msra.mxu0 %v306
        %943 = vmatprep.subr.mxu0 0.0
        %944 = vmatpush1.msra.mxu0 %v307
        %945 = vmatprep.subr.mxu0 0.0
        %946 = vmatpush1.msra.mxu0 0.0
        %947 = vmatprep.subr.mxu0 0.0
        %948 = vmatpush1.msra.mxu0 0.0
        %949 = vmatprep.subr.mxu0 0.0
        %950 = vmatpush1.msra.mxu0 0.0
        %951 = vmatprep.subr.mxu0 0.0
        %952 = vmatpush1.msra.mxu0 0.0
        %953 = vmatprep.subr.mxu0 0.0
        %954 = vmatpush1.msra.mxu0 0.0
        %955 = vmatprep.subr.mxu0 0.0
        %956 = vmatpush1.msra.mxu0 0.0
        %957 = vmatprep.subr.mxu0 0.0
        %958 = vmatpush1.msra.mxu0 0.0
        %959 = vmatprep.subr.mxu0 0.0
        %960 = vmatpush1.msra.mxu0 0.0
        %961 = vmatprep.subr.mxu0 0.0
        %962 = vmatpush1.msra.mxu0 0.0
        %963 = vmatprep.subr.mxu0 0.0
        %964 = vmatpush1.msra.mxu0 0.0
        %965 = vmatprep.subr.mxu0 0.0
        %966 = vmatpush1.msra.mxu0 0.0
        %967 = vmatprep.subr.mxu0 0.0
        %968 = vmatpush1.msra.mxu0 0.0
        %969 = vmatprep.subr.mxu0 0.0
        %970 = vmatpush1.msra.mxu0 0.0
        %971 = vmatprep.subr.mxu0 0.0
        %972 = vmatpush1.msra.mxu0 0.0
        %973 = vmatprep.subr.mxu0 0.0
        %974 = vmatpush1.msra.mxu0 0.0
        %975 = vmatprep.subr.mxu0 0.0
        %976 = vmatpush1.msra.mxu0 0.0
        %977 = vmatprep.subr.mxu0 0.0
        %978 = vmatpush1.msra.mxu0 0.0
        %979 = vmatprep.subr.mxu0 0.0
        %980 = vmatpush1.msra.mxu0 0.0
        %981 = vmatprep.subr.mxu0 0.0
        %982 = vmatpush1.msra.mxu0 0.0
        %983 = vmatprep.subr.mxu0 0.0
        %984 = vmatpush1.msra.mxu0 0.0
        %985 = vmatprep.subr.mxu0 0.0
        %986 = vmatpush1.msra.mxu0 0.0
        %987 = vmatprep.subr.mxu0 0.0
        %988 = vmatpush1.msra.mxu0 0.0
        %989 = vmatprep.subr.mxu0 0.0
        %990 = vmatpush1.msra.mxu0 0.0
        %991 = vmatprep.subr.mxu0 0.0
        %992 = vmatpush1.msra.mxu0 0.0
        %993 = vmatprep.subr.mxu0 0.0
        %994 = vmatpush1.msra.mxu0 0.0
        %995 = vmatprep.subr.mxu0 0.0
        %996 = vmatpush1.msra.mxu0 0.0
        %997 = vmatprep.subr.mxu0 0.0
        %998 = vmatpush1.msra.mxu0 0.0
        %999 = vmatprep.subr.mxu0 0.0
        %1000 = vmatpush1.msra.mxu0 0.0
        %1001 = vmatprep.mubr.f32.mxu0 0.0
        %1002 = vmatmul.mubr.f32.gmra.mrb[0].mxu0 %v890
        %v1003 = vpop.f32.mrb[0].mxu0
        %v1004 = vadd.f32 %v887, %v1003
        %v1005 = vpop.f32.mrb[0].mxu0
        %1006 = vmatprep.mubr.f32.mxu0 0.0
        %1007 = vmatmul.mubr.f32.gmra.mrb[0].mxu0 %v893
        %v1008 = vpop.f32.mrb[0].mxu0
        %v1009 = vadd.f32 %v887, %v1008
        %v1010 = vpop.f32.mrb[0].mxu0
        %1011 = vmatprep.mubr.f32.mxu0 0.0
        %1012 = vmatmul.mubr.f32.gmra.mrb[0].mxu0 %v896
        %v1013 = vpop.f32.mrb[0].mxu0
        %v1014 = vadd.f32 %v887, %v1013
        %v1015 = vpop.f32.mrb[0].mxu0
        %1016 = vmatprep.mubr.f32.mxu0 0.0
        %1017 = vmatmul.mubr.f32.gmra.mrb[0].mxu0 %v899
        %v1018 = vpop.f32.mrb[0].mxu0
        %v1019 = vadd.f32 %v887, %v1018
        %v1020 = vpop.f32.mrb[0].mxu0
        %1021 = vmatprep.mubr.f32.mxu0 0.0
        %1022 = vmatmul.mubr.f32.gmra.mrb[0].mxu0 %v902
        %v1023 = vpop.f32.mrb[0].mxu0
        %v1024 = vadd.f32 %v887, %v1023
        %v1025 = vpop.f32.mrb[0].mxu0
        %1026 = vmatprep.mubr.f32.mxu0 0.0
        %1027 = vmatmul.mubr.f32.gmra.mrb[0].mxu0 %v905
        %v1028 = vpop.f32.mrb[0].mxu0
        %v1029 = vadd.f32 %v887, %v1028
        %v1030 = vpop.f32.mrb[0].mxu0
        %1031 = vmatprep.mubr.f32.mxu0 0.0
        %1032 = vmatmul.mubr.f32.gmra.mrb[0].mxu0 %v908
        %v1033 = vpop.f32.mrb[0].mxu0
        %v1034 = vadd.f32 %v887, %v1033
        %v1035 = vpop.f32.mrb[0].mxu0
        %1036 = vmatprep.mubr.f32.mxu0 0.0
        %1037 = vmatmul.mubr.f32.gmra.mrb[0].mxu0 %v911
        %v1038 = vpop.f32.mrb[0].mxu0
        %v1039 = vadd.f32 %v887, %v1038
        %v1040 = vpop.f32.mrb[0].mxu0
        %1041 = vmatprep.mubr.f32.mxu0 0.0
        %1042 = vmatmul.mubr.f32.gmra.mrb[0].mxu0 %v914
        %v1043 = vpop.f32.mrb[0].mxu0
        %v1044 = vadd.f32 %v887, %v1043
        %v1045 = vpop.f32.mrb[0].mxu0
        %1046 = vmatprep.mubr.f32.mxu0 0.0
        %1047 = vmatmul.mubr.f32.gmra.mrb[0].mxu0 %v917
        %v1048 = vpop.f32.mrb[0].mxu0
        %v1049 = vadd.f32 %v887, %v1048
        %v1050 = vpop.f32.mrb[0].mxu0
        %1051 = vmatprep.mubr.f32.mxu0 0.0
        %1052 = vmatmul.mubr.f32.gmra.mrb[0].mxu0 %v920
        %v1053 = vpop.f32.mrb[0].mxu0
        %v1054 = vadd.f32 %v887, %v1053
        %v1055 = vpop.f32.mrb[0].mxu0
        %1056 = vmatprep.mubr.f32.mxu0 0.0
        %1057 = vmatmul.mubr.f32.gmra.mrb[0].mxu0 %v923
        %v1058 = vpop.f32.mrb[0].mxu0
        %v1059 = vadd.f32 %v887, %v1058
        %v1060 = vpop.f32.mrb[0].mxu0
        %1061 = vmatprep.mubr.f32.mxu0 0.0
        %1062 = vmatmul.mubr.f32.gmra.mrb[0].mxu0 %v926
        %v1063 = vpop.f32.mrb[0].mxu0
        %v1064 = vadd.f32 %v887, %v1063
        %v1065 = vpop.f32.mrb[0].mxu0
        %1066 = vmatprep.mubr.f32.mxu0 0.0
        %1067 = vmatmul.mubr.f32.gmra.mrb[0].mxu0 %v929
        %v1068 = vpop.f32.mrb[0].mxu0
        %v1069 = vadd.f32 %v887, %v1068
        %v1070 = vpop.f32.mrb[0].mxu0
        %1071 = vmatprep.mubr.f32.mxu0 0.0
        %1072 = vmatmul.mubr.f32.gmra.mrb[0].mxu0 %v932
        %v1073 = vpop.f32.mrb[0].mxu0
        %v1074 = vadd.f32 %v887, %v1073
        %v1075 = vpop.f32.mrb[0].mxu0
        %1076 = vmatprep.mubr.f32.mxu0 0.0
        %1077 = vmatmul.mubr.f32.gmra.mrb[0].mxu0 %v935
        %v1078 = vpop.f32.mrb[0].mxu0
        %v1079 = vadd.f32 %v887, %v1078
        %v1080 = vpop.f32.mrb[0].mxu0
        %1081 = vdwg.mxu0
        %v1082 = vadd.f32 %v1004, %v452
        %v1083 = vadd.f32 %v1009, %v458
        %v1084 = vadd.f32 %v1014, %v464
        %v1085 = vadd.f32 %v1019, %v470
        %v1086 = vadd.f32 %v1024, %v476
        %v1087 = vadd.f32 %v1029, %v482
        %v1088 = vadd.f32 %v1034, %v488
        %v1089 = vadd.f32 %v1039, %v494
        %v1090 = vadd.f32 %v1044, %v500
        %v1091 = vadd.f32 %v1049, %v506
        %v1092 = vadd.f32 %v1054, %v512
        %v1093 = vadd.f32 %v1059, %v518
        %v1094 = vadd.f32 %v1064, %v524
        %v1095 = vadd.f32 %v1069, %v530
        %v1096 = vadd.f32 %v1074, %v536
        %v1097 = vadd.f32 %v1079, %v542
        %v1098 = vxor.u32 %v1082, 2147483648
        %v1099 = vxor.u32 %v1083, 2147483648
        %v1100 = vxor.u32 %v1084, 2147483648
        %v1101 = vxor.u32 %v1085, 2147483648
        %v1102 = vxor.u32 %v1086, 2147483648
        %v1103 = vxor.u32 %v1087, 2147483648
        %v1104 = vxor.u32 %v1088, 2147483648
        %v1105 = vxor.u32 %v1089, 2147483648
        %v1106 = vxor.u32 %v1090, 2147483648
        %v1107 = vxor.u32 %v1091, 2147483648
        %v1108 = vxor.u32 %v1092, 2147483648
        %v1109 = vxor.u32 %v1093, 2147483648
        %v1110 = vxor.u32 %v1094, 2147483648
        %v1111 = vxor.u32 %v1095, 2147483648
        %v1112 = vxor.u32 %v1096, 2147483648
        %v1113 = vxor.u32 %v1097, 2147483648
        %v1114 = vmul.f32 %v1098, 1.442695
        %v1115 = vpow.pop %v1114
        %v1116 = vmul.f32 %v1099, 1.442695
        %v1117 = vpow.pop %v1116
        %v1118 = vmul.f32 %v1100, 1.442695
        %v1119 = vpow.pop %v1118
        %v1120 = vmul.f32 %v1101, 1.442695
        %v1121 = vpow.pop %v1120
        %v1122 = vmul.f32 %v1102, 1.442695
        %v1123 = vpow.pop %v1122
        %v1124 = vmul.f32 %v1103, 1.442695
        %v1125 = vpow.pop %v1124
        %v1126 = vmul.f32 %v1104, 1.442695
        %v1127 = vpow.pop %v1126
        %v1128 = vmul.f32 %v1105, 1.442695
        %v1129 = vpow.pop %v1128
        %v1130 = vmul.f32 %v1106, 1.442695
        %v1131 = vpow.pop %v1130
        %v1132 = vmul.f32 %v1107, 1.442695
        %v1133 = vpow.pop %v1132
        %v1134 = vmul.f32 %v1108, 1.442695
        %v1135 = vpow.pop %v1134
        %v1136 = vmul.f32 %v1109, 1.442695
        %v1137 = vpow.pop %v1136
        %v1138 = vmul.f32 %v1110, 1.442695
        %v1139 = vpow.pop %v1138
        %v1140 = vmul.f32 %v1111, 1.442695
        %v1141 = vpow.pop %v1140
        %v1142 = vmul.f32 %v1112, 1.442695
        %v1143 = vpow.pop %v1142
        %v1144 = vmul.f32 %v1113, 1.442695
        %v1145 = vpow.pop %v1144
        %v1146 = vadd.f32 %v1115, 1.0
        %v1147 = vadd.f32 %v1117, 1.0
        %v1148 = vadd.f32 %v1119, 1.0
        %v1149 = vadd.f32 %v1121, 1.0
        %v1150 = vadd.f32 %v1123, 1.0
        %v1151 = vadd.f32 %v1125, 1.0
        %v1152 = vadd.f32 %v1127, 1.0
        %v1153 = vadd.f32 %v1129, 1.0
        %v1154 = vadd.f32 %v1131, 1.0
        %v1155 = vadd.f32 %v1133, 1.0
        %v1156 = vadd.f32 %v1135, 1.0
        %v1157 = vadd.f32 %v1137, 1.0
        %v1158 = vadd.f32 %v1139, 1.0
        %v1159 = vadd.f32 %v1141, 1.0
        %v1160 = vadd.f32 %v1143, 1.0
        %v1161 = vadd.f32 %v1145, 1.0
        %v1162 = vrcp.pop %v1146
        %v1163 = vmul.f32 1.0, %v1162
        %v1164 = vrcp.pop %v1147
        %v1165 = vmul.f32 1.0, %v1164
        %v1166 = vrcp.pop %v1148
        %v1167 = vmul.f32 1.0, %v1166
        %v1168 = vrcp.pop %v1149
        %v1169 = vmul.f32 1.0, %v1168
        %v1170 = vrcp.pop %v1150
        %v1171 = vmul.f32 1.0, %v1170
        %v1172 = vrcp.pop %v1151
        %v1173 = vmul.f32 1.0, %v1172
        %v1174 = vrcp.pop %v1152
        %v1175 = vmul.f32 1.0, %v1174
        %v1176 = vrcp.pop %v1153
        %v1177 = vmul.f32 1.0, %v1176
        %v1178 = vrcp.pop %v1154
        %v1179 = vmul.f32 1.0, %v1178
        %v1180 = vrcp.pop %v1155
        %v1181 = vmul.f32 1.0, %v1180
        %v1182 = vrcp.pop %v1156
        %v1183 = vmul.f32 1.0, %v1182
        %v1184 = vrcp.pop %v1157
        %v1185 = vmul.f32 1.0, %v1184
        %v1186 = vrcp.pop %v1158
        %v1187 = vmul.f32 1.0, %v1186
        %v1188 = vrcp.pop %v1159
        %v1189 = vmul.f32 1.0, %v1188
        %v1190 = vrcp.pop %v1160
        %v1191 = vmul.f32 1.0, %v1190
        %v1192 = vrcp.pop %v1161
        %v1193 = vmul.f32 1.0, %v1192
        %1194 = vrot.lane.b32.xlu0 %v452, 64
        %v1195 = vpop.permute.xlu0 %1194
        %1196 = vrot.lane.b32.xlu0 %v458, 64
        %v1197 = vpop.permute.xlu0 %1196
        %1198 = vrot.lane.b32.xlu0 %v464, 64
        %v1199 = vpop.permute.xlu0 %1198
        %1200 = vrot.lane.b32.xlu0 %v470, 64
        %v1201 = vpop.permute.xlu0 %1200
        %1202 = vrot.lane.b32.xlu0 %v476, 64
        %v1203 = vpop.permute.xlu0 %1202
        %1204 = vrot.lane.b32.xlu0 %v482, 64
        %v1205 = vpop.permute.xlu0 %1204
        %1206 = vrot.lane.b32.xlu0 %v488, 64
        %v1207 = vpop.permute.xlu0 %1206
        %1208 = vrot.lane.b32.xlu0 %v494, 64
        %v1209 = vpop.permute.xlu0 %1208
        %1210 = vrot.lane.b32.xlu0 %v500, 64
        %v1211 = vpop.permute.xlu0 %1210
        %1212 = vrot.lane.b32.xlu0 %v506, 64
        %v1213 = vpop.permute.xlu0 %1212
        %1214 = vrot.lane.b32.xlu0 %v512, 64
        %v1215 = vpop.permute.xlu0 %1214
        %1216 = vrot.lane.b32.xlu0 %v518, 64
        %v1217 = vpop.permute.xlu0 %1216
        %1218 = vrot.lane.b32.xlu0 %v524, 64
        %v1219 = vpop.permute.xlu0 %1218
        %1220 = vrot.lane.b32.xlu0 %v530, 64
        %v1221 = vpop.permute.xlu0 %1220
        %1222 = vrot.lane.b32.xlu0 %v536, 64
        %v1223 = vpop.permute.xlu0 %1222
        %1224 = vrot.lane.b32.xlu0 %v542, 64
        %v1225 = vpop.permute.xlu0 %1224
        %v1242 = vmul.f32 %v1163, %v1195
        %v1243 = vmul.f32 %v1165, %v1197
        %v1244 = vmul.f32 %v1167, %v1199
        %v1245 = vmul.f32 %v1169, %v1201
        %v1246 = vmul.f32 %v1171, %v1203
        %v1247 = vmul.f32 %v1173, %v1205
        %v1248 = vmul.f32 %v1175, %v1207
        %v1249 = vmul.f32 %v1177, %v1209
        %v1250 = vmul.f32 %v1179, %v1211
        %v1251 = vmul.f32 %v1181, %v1213
        %v1252 = vmul.f32 %v1183, %v1215
        %v1253 = vmul.f32 %v1185, %v1217
        %v1254 = vmul.f32 %v1187, %v1219
        %v1255 = vmul.f32 %v1189, %v1221
        %v1256 = vmul.f32 %v1191, %v1223
        %v1257 = vmul.f32 %v1193, %v1225
        %1274 = vrot.lane.b32.xlu0 %v1242, 64
        %v1275 = vpop.permute.xlu0 %1274
        %1276 = vrot.lane.b32.xlu0 %v1243, 64
        %v1277 = vpop.permute.xlu0 %1276
        %1278 = vrot.lane.b32.xlu0 %v1244, 64
        %v1279 = vpop.permute.xlu0 %1278
        %1280 = vrot.lane.b32.xlu0 %v1245, 64
        %v1281 = vpop.permute.xlu0 %1280
        %1282 = vrot.lane.b32.xlu0 %v1246, 64
        %v1283 = vpop.permute.xlu0 %1282
        %1284 = vrot.lane.b32.xlu0 %v1247, 64
        %v1285 = vpop.permute.xlu0 %1284
        %1286 = vrot.lane.b32.xlu0 %v1248, 64
        %v1287 = vpop.permute.xlu0 %1286
        %1288 = vrot.lane.b32.xlu0 %v1249, 64
        %v1289 = vpop.permute.xlu0 %1288
        %1290 = vrot.lane.b32.xlu0 %v1250, 64
        %v1291 = vpop.permute.xlu0 %1290
        %1292 = vrot.lane.b32.xlu0 %v1251, 64
        %v1293 = vpop.permute.xlu0 %1292
        %1294 = vrot.lane.b32.xlu0 %v1252, 64
        %v1295 = vpop.permute.xlu0 %1294
        %1296 = vrot.lane.b32.xlu0 %v1253, 64
        %v1297 = vpop.permute.xlu0 %1296
        %1298 = vrot.lane.b32.xlu0 %v1254, 64
        %v1299 = vpop.permute.xlu0 %1298
        %1300 = vrot.lane.b32.xlu0 %v1255, 64
        %v1301 = vpop.permute.xlu0 %1300
        %1302 = vrot.lane.b32.xlu0 %v1256, 64
        %v1303 = vpop.permute.xlu0 %1302
        %1304 = vrot.lane.b32.xlu0 %v1257, 64
        %v1305 = vpop.permute.xlu0 %1304
        %v1322 = vadd.f32 %v1004, %v1275
        %v1323 = vadd.f32 %v1009, %v1277
        %v1324 = vadd.f32 %v1014, %v1279
        %v1325 = vadd.f32 %v1019, %v1281
        %v1326 = vadd.f32 %v1024, %v1283
        %v1327 = vadd.f32 %v1029, %v1285
        %v1328 = vadd.f32 %v1034, %v1287
        %v1329 = vadd.f32 %v1039, %v1289
        %v1330 = vadd.f32 %v1044, %v1291
        %v1331 = vadd.f32 %v1049, %v1293
        %v1332 = vadd.f32 %v1054, %v1295
        %v1333 = vadd.f32 %v1059, %v1297
        %v1334 = vadd.f32 %v1064, %v1299
        %v1335 = vadd.f32 %v1069, %v1301
        %v1336 = vadd.f32 %v1074, %v1303
        %v1337 = vadd.f32 %v1079, %v1305
        %v1338 = vtanh.pop %v1322
        %v1339 = vtanh.pop %v1323
        %v1340 = vtanh.pop %v1324
        %v1341 = vtanh.pop %v1325
        %v1342 = vtanh.pop %v1326
        %v1343 = vtanh.pop %v1327
        %v1344 = vtanh.pop %v1328
        %v1345 = vtanh.pop %v1329
        %v1346 = vtanh.pop %v1330
        %v1347 = vtanh.pop %v1331
        %v1348 = vtanh.pop %v1332
        %v1349 = vtanh.pop %v1333
        %v1350 = vtanh.pop %v1334
        %v1351 = vtanh.pop %v1335
        %v1352 = vtanh.pop %v1336
        %v1353 = vtanh.pop %v1337
        %v1354 = vsub.f32 1.0, %v1163
        %v1355 = vsub.f32 1.0, %v1165
        %v1356 = vsub.f32 1.0, %v1167
        %v1357 = vsub.f32 1.0, %v1169
        %v1358 = vsub.f32 1.0, %v1171
        %v1359 = vsub.f32 1.0, %v1173
        %v1360 = vsub.f32 1.0, %v1175
        %v1361 = vsub.f32 1.0, %v1177
        %v1362 = vsub.f32 1.0, %v1179
        %v1363 = vsub.f32 1.0, %v1181
        %v1364 = vsub.f32 1.0, %v1183
        %v1365 = vsub.f32 1.0, %v1185
        %v1366 = vsub.f32 1.0, %v1187
        %v1367 = vsub.f32 1.0, %v1189
        %v1368 = vsub.f32 1.0, %v1191
        %v1369 = vsub.f32 1.0, %v1193
        %1386 = vrot.lane.b32.xlu0 %v1338, 96
        %v1387 = vpop.permute.xlu0 %1386
        %1388 = vrot.lane.b32.xlu0 %v1339, 96
        %v1389 = vpop.permute.xlu0 %1388
        %1390 = vrot.lane.b32.xlu0 %v1340, 96
        %v1391 = vpop.permute.xlu0 %1390
        %1392 = vrot.lane.b32.xlu0 %v1341, 96
        %v1393 = vpop.permute.xlu0 %1392
        %1394 = vrot.lane.b32.xlu0 %v1342, 96
        %v1395 = vpop.permute.xlu0 %1394
        %1396 = vrot.lane.b32.xlu0 %v1343, 96
        %v1397 = vpop.permute.xlu0 %1396
        %1398 = vrot.lane.b32.xlu0 %v1344, 96
        %v1399 = vpop.permute.xlu0 %1398
        %1400 = vrot.lane.b32.xlu0 %v1345, 96
        %v1401 = vpop.permute.xlu0 %1400
        %1402 = vrot.lane.b32.xlu0 %v1346, 96
        %v1403 = vpop.permute.xlu0 %1402
        %1404 = vrot.lane.b32.xlu0 %v1347, 96
        %v1405 = vpop.permute.xlu0 %1404
        %1406 = vrot.lane.b32.xlu0 %v1348, 96
        %v1407 = vpop.permute.xlu0 %1406
        %1408 = vrot.lane.b32.xlu0 %v1349, 96
        %v1409 = vpop.permute.xlu0 %1408
        %1410 = vrot.lane.b32.xlu0 %v1350, 96
        %v1411 = vpop.permute.xlu0 %1410
        %1412 = vrot.lane.b32.xlu0 %v1351, 96
        %v1413 = vpop.permute.xlu0 %1412
        %1414 = vrot.lane.b32.xlu0 %v1352, 96
        %v1415 = vpop.permute.xlu0 %1414
        %1416 = vrot.lane.b32.xlu0 %v1353, 96
        %v1417 = vpop.permute.xlu0 %1416
        %v1434 = vmul.f32 %v1354, %v1387
        %v1435 = vmul.f32 %v1355, %v1389
        %v1436 = vmul.f32 %v1356, %v1391
        %v1437 = vmul.f32 %v1357, %v1393
        %v1438 = vmul.f32 %v1358, %v1395
        %v1439 = vmul.f32 %v1359, %v1397
        %v1440 = vmul.f32 %v1360, %v1399
        %v1441 = vmul.f32 %v1361, %v1401
        %v1442 = vmul.f32 %v1362, %v1403
        %v1443 = vmul.f32 %v1363, %v1405
        %v1444 = vmul.f32 %v1364, %v1407
        %v1445 = vmul.f32 %v1365, %v1409
        %v1446 = vmul.f32 %v1366, %v1411
        %v1447 = vmul.f32 %v1367, %v1413
        %v1448 = vmul.f32 %v1368, %v1415
        %v1449 = vmul.f32 %v1369, %v1417
        %1450 = vrot.lane.b32.xlu0 %v309, 32
        %v1451 = vpop.permute.xlu0 %1450
        %1452 = vrot.lane.b32.xlu0 %v310, 32
        %v1453 = vpop.permute.xlu0 %1452
        %1454 = vrot.lane.b32.xlu0 %v311, 32
        %v1455 = vpop.permute.xlu0 %1454
        %1456 = vrot.lane.b32.xlu0 %v312, 32
        %v1457 = vpop.permute.xlu0 %1456
        %1458 = vrot.lane.b32.xlu0 %v313, 32
        %v1459 = vpop.permute.xlu0 %1458
        %1460 = vrot.lane.b32.xlu0 %v314, 32
        %v1461 = vpop.permute.xlu0 %1460
        %1462 = vrot.lane.b32.xlu0 %v315, 32
        %v1463 = vpop.permute.xlu0 %1462
        %1464 = vrot.lane.b32.xlu0 %v316, 32
        %v1465 = vpop.permute.xlu0 %1464
        %1466 = vrot.lane.b32.xlu0 %v317, 32
        %v1467 = vpop.permute.xlu0 %1466
        %1468 = vrot.lane.b32.xlu0 %v318, 32
        %v1469 = vpop.permute.xlu0 %1468
        %1470 = vrot.lane.b32.xlu0 %v319, 32
        %v1471 = vpop.permute.xlu0 %1470
        %1472 = vrot.lane.b32.xlu0 %v320, 32
        %v1473 = vpop.permute.xlu0 %1472
        %1474 = vrot.lane.b32.xlu0 %v321, 32
        %v1475 = vpop.permute.xlu0 %1474
        %1476 = vrot.lane.b32.xlu0 %v322, 32
        %v1477 = vpop.permute.xlu0 %1476
        %1478 = vrot.lane.b32.xlu0 %v323, 32
        %v1479 = vpop.permute.xlu0 %1478
        %1480 = vrot.lane.b32.xlu0 %v324, 32
        %v1481 = vpop.permute.xlu0 %1480
        %v1498 = vmul.f32 %v1163, %v1451
        %v1499 = vmul.f32 %v1165, %v1453
        %v1500 = vmul.f32 %v1167, %v1455
        %v1501 = vmul.f32 %v1169, %v1457
        %v1502 = vmul.f32 %v1171, %v1459
        %v1503 = vmul.f32 %v1173, %v1461
        %v1504 = vmul.f32 %v1175, %v1463
        %v1505 = vmul.f32 %v1177, %v1465
        %v1506 = vmul.f32 %v1179, %v1467
        %v1507 = vmul.f32 %v1181, %v1469
        %v1508 = vmul.f32 %v1183, %v1471
        %v1509 = vmul.f32 %v1185, %v1473
        %v1510 = vmul.f32 %v1187, %v1475
        %v1511 = vmul.f32 %v1189, %v1477
        %v1512 = vmul.f32 %v1191, %v1479
        %v1513 = vmul.f32 %v1193, %v1481
        %v1514 = vadd.f32 %v1434, %v1498
        %v1515 = vadd.f32 %v1435, %v1499
        %v1516 = vadd.f32 %v1436, %v1500
        %v1517 = vadd.f32 %v1437, %v1501
        %v1518 = vadd.f32 %v1438, %v1502
        %v1519 = vadd.f32 %v1439, %v1503
        %v1520 = vadd.f32 %v1440, %v1504
        %v1521 = vadd.f32 %v1441, %v1505
        %v1522 = vadd.f32 %v1442, %v1506
        %v1523 = vadd.f32 %v1443, %v1507
        %v1524 = vadd.f32 %v1444, %v1508
        %v1525 = vadd.f32 %v1445, %v1509
        %v1526 = vadd.f32 %v1446, %v1510
        %v1527 = vadd.f32 %v1447, %v1511
        %v1528 = vadd.f32 %v1448, %v1512
        %v1529 = vadd.f32 %v1449, %v1513
        %1546 = vrot.lane.b32.xlu0 %v1514, 96
        %v1547 = vpop.permute.xlu0 %1546
        %1548 = vrot.lane.b32.xlu0 %v1515, 96
        %v1549 = vpop.permute.xlu0 %1548
        %1550 = vrot.lane.b32.xlu0 %v1516, 96
        %v1551 = vpop.permute.xlu0 %1550
        %1552 = vrot.lane.b32.xlu0 %v1517, 96
        %v1553 = vpop.permute.xlu0 %1552
        %1554 = vrot.lane.b32.xlu0 %v1518, 96
        %v1555 = vpop.permute.xlu0 %1554
        %1556 = vrot.lane.b32.xlu0 %v1519, 96
        %v1557 = vpop.permute.xlu0 %1556
        %1558 = vrot.lane.b32.xlu0 %v1520, 96
        %v1559 = vpop.permute.xlu0 %1558
        %1560 = vrot.lane.b32.xlu0 %v1521, 96
        %v1561 = vpop.permute.xlu0 %1560
        %1562 = vrot.lane.b32.xlu0 %v1522, 96
        %v1563 = vpop.permute.xlu0 %1562
        %1564 = vrot.lane.b32.xlu0 %v1523, 96
        %v1565 = vpop.permute.xlu0 %1564
        %1566 = vrot.lane.b32.xlu0 %v1524, 96
        %v1567 = vpop.permute.xlu0 %1566
        %1568 = vrot.lane.b32.xlu0 %v1525, 96
        %v1569 = vpop.permute.xlu0 %1568
        %1570 = vrot.lane.b32.xlu0 %v1526, 96
        %v1571 = vpop.permute.xlu0 %1570
        %1572 = vrot.lane.b32.xlu0 %v1527, 96
        %v1573 = vpop.permute.xlu0 %1572
        %1574 = vrot.lane.b32.xlu0 %v1528, 96
        %v1575 = vpop.permute.xlu0 %1574
        %1576 = vrot.lane.b32.xlu0 %v1529, 96
        %v1577 = vpop.permute.xlu0 %1576
        %v1578 = vsel %vm336, %v1547, 0
        %v1580 = vsel %vm336, %v1549, 0
        %v1582 = vsel %vm336, %v1551, 0
        %v1584 = vsel %vm336, %v1553, 0
        %v1586 = vsel %vm336, %v1555, 0
        %v1588 = vsel %vm336, %v1557, 0
        %v1590 = vsel %vm336, %v1559, 0
        %v1592 = vsel %vm336, %v1561, 0
        %v1594 = vsel %vm336, %v1563, 0
        %v1596 = vsel %vm336, %v1565, 0
        %v1598 = vsel %vm336, %v1567, 0
        %v1600 = vsel %vm336, %v1569, 0
        %v1602 = vsel %vm336, %v1571, 0
        %v1604 = vsel %vm336, %v1573, 0
        %v1606 = vsel %vm336, %v1575, 0
        %v1608 = vsel %vm336, %v1577, 0
        %1610 = vmatprep.subr.mxu0 %v296
        %1611 = vmatpush1.msra.mxu0 %v295
        %1612 = vmatprep.subr.mxu0 %v298
        %1613 = vmatpush1.msra.mxu0 %v297
        %1614 = vmatprep.subr.mxu0 %v300
        %1615 = vmatpush1.msra.mxu0 %v299
        %1616 = vmatprep.subr.mxu0 %v302
        %1617 = vmatpush1.msra.mxu0 %v301
        %1618 = vmatprep.subr.mxu0 0.0
        %1619 = vmatpush1.msra.mxu0 0.0
        %1620 = vmatprep.subr.mxu0 0.0
        %1621 = vmatpush1.msra.mxu0 0.0
        %1622 = vmatprep.subr.mxu0 0.0
        %1623 = vmatpush1.msra.mxu0 0.0
        %1624 = vmatprep.subr.mxu0 0.0
        %1625 = vmatpush1.msra.mxu0 0.0
        %1626 = vmatprep.subr.mxu0 0.0
        %1627 = vmatpush1.msra.mxu0 0.0
        %1628 = vmatprep.subr.mxu0 0.0
        %1629 = vmatpush1.msra.mxu0 0.0
        %1630 = vmatprep.subr.mxu0 0.0
        %1631 = vmatpush1.msra.mxu0 0.0
        %1632 = vmatprep.subr.mxu0 0.0
        %1633 = vmatpush1.msra.mxu0 0.0
        %1634 = vmatprep.subr.mxu0 0.0
        %1635 = vmatpush1.msra.mxu0 0.0
        %1636 = vmatprep.subr.mxu0 0.0
        %1637 = vmatpush1.msra.mxu0 0.0
        %1638 = vmatprep.subr.mxu0 0.0
        %1639 = vmatpush1.msra.mxu0 0.0
        %1640 = vmatprep.subr.mxu0 0.0
        %1641 = vmatpush1.msra.mxu0 0.0
        %1642 = vmatprep.subr.mxu0 0.0
        %1643 = vmatpush1.msra.mxu0 0.0
        %1644 = vmatprep.subr.mxu0 0.0
        %1645 = vmatpush1.msra.mxu0 0.0
        %1646 = vmatprep.subr.mxu0 0.0
        %1647 = vmatpush1.msra.mxu0 0.0
        %1648 = vmatprep.subr.mxu0 0.0
        %1649 = vmatpush1.msra.mxu0 0.0
        %1650 = vmatprep.subr.mxu0 0.0
        %1651 = vmatpush1.msra.mxu0 0.0
        %1652 = vmatprep.subr.mxu0 0.0
        %1653 = vmatpush1.msra.mxu0 0.0
        %1654 = vmatprep.subr.mxu0 0.0
        %1655 = vmatpush1.msra.mxu0 0.0
        %1656 = vmatprep.subr.mxu0 0.0
        %1657 = vmatpush1.msra.mxu0 0.0
        %1658 = vmatprep.subr.mxu0 0.0
        %1659 = vmatpush1.msra.mxu0 0.0
        %1660 = vmatprep.subr.mxu0 0.0
        %1661 = vmatpush1.msra.mxu0 0.0
        %1662 = vmatprep.subr.mxu0 0.0
        %1663 = vmatpush1.msra.mxu0 0.0
        %1664 = vmatprep.subr.mxu0 0.0
        %1665 = vmatpush1.msra.mxu0 0.0
        %1666 = vmatprep.subr.mxu0 0.0
        %1667 = vmatpush1.msra.mxu0 0.0
        %1668 = vmatprep.subr.mxu0 0.0
        %1669 = vmatpush1.msra.mxu0 0.0
        %1670 = vmatprep.subr.mxu0 0.0
        %1671 = vmatpush1.msra.mxu0 0.0
        %1672 = vmatprep.subr.mxu0 0.0
        %1673 = vmatpush1.msra.mxu0 0.0
        %1674 = vmatprep.mubr.f32.mxu0 0.0
        %1675 = vmatmul.mubr.f32.gmra.mrb[0].mxu0 %v1578
        %v1676 = vpop.f32.mrb[0].mxu0
        %v1677 = vadd.f32 %v329, %v1676
        %v1678 = vpop.f32.mrb[0].mxu0
        %v1679 = vadd.f32 %v333, %v1678
        %1680 = vmatprep.mubr.f32.mxu0 0.0
        %1681 = vmatmul.mubr.f32.gmra.mrb[0].mxu0 %v1580
        %v1682 = vpop.f32.mrb[0].mxu0
        %v1683 = vadd.f32 %v329, %v1682
        %v1684 = vpop.f32.mrb[0].mxu0
        %v1685 = vadd.f32 %v333, %v1684
        %1686 = vmatprep.mubr.f32.mxu0 0.0
        %1687 = vmatmul.mubr.f32.gmra.mrb[0].mxu0 %v1582
        %v1688 = vpop.f32.mrb[0].mxu0
        %v1689 = vadd.f32 %v329, %v1688
        %v1690 = vpop.f32.mrb[0].mxu0
        %v1691 = vadd.f32 %v333, %v1690
        %1692 = vmatprep.mubr.f32.mxu0 0.0
        %1693 = vmatmul.mubr.f32.gmra.mrb[0].mxu0 %v1584
        %v1694 = vpop.f32.mrb[0].mxu0
        %v1695 = vadd.f32 %v329, %v1694
        %v1696 = vpop.f32.mrb[0].mxu0
        %v1697 = vadd.f32 %v333, %v1696
        %1698 = vmatprep.mubr.f32.mxu0 0.0
        %1699 = vmatmul.mubr.f32.gmra.mrb[0].mxu0 %v1586
        %v1700 = vpop.f32.mrb[0].mxu0
        %v1701 = vadd.f32 %v329, %v1700
        %v1702 = vpop.f32.mrb[0].mxu0
        %v1703 = vadd.f32 %v333, %v1702
        %1704 = vmatprep.mubr.f32.mxu0 0.0
        %1705 = vmatmul.mubr.f32.gmra.mrb[0].mxu0 %v1588
        %v1706 = vpop.f32.mrb[0].mxu0
        %v1707 = vadd.f32 %v329, %v1706
        %v1708 = vpop.f32.mrb[0].mxu0
        %v1709 = vadd.f32 %v333, %v1708
        %1710 = vmatprep.mubr.f32.mxu0 0.0
        %1711 = vmatmul.mubr.f32.gmra.mrb[0].mxu0 %v1590
        %v1712 = vpop.f32.mrb[0].mxu0
        %v1713 = vadd.f32 %v329, %v1712
        %v1714 = vpop.f32.mrb[0].mxu0
        %v1715 = vadd.f32 %v333, %v1714
        %1716 = vmatprep.mubr.f32.mxu0 0.0
        %1717 = vmatmul.mubr.f32.gmra.mrb[0].mxu0 %v1592
        %v1718 = vpop.f32.mrb[0].mxu0
        %v1719 = vadd.f32 %v329, %v1718
        %v1720 = vpop.f32.mrb[0].mxu0
        %v1721 = vadd.f32 %v333, %v1720
        %1722 = vmatprep.mubr.f32.mxu0 0.0
        %1723 = vmatmul.mubr.f32.gmra.mrb[0].mxu0 %v1594
        %v1724 = vpop.f32.mrb[0].mxu0
        %v1725 = vadd.f32 %v329, %v1724
        %v1726 = vpop.f32.mrb[0].mxu0
        %v1727 = vadd.f32 %v333, %v1726
        %1728 = vmatprep.mubr.f32.mxu0 0.0
        %1729 = vmatmul.mubr.f32.gmra.mrb[0].mxu0 %v1596
        %v1730 = vpop.f32.mrb[0].mxu0
        %v1731 = vadd.f32 %v329, %v1730
        %v1732 = vpop.f32.mrb[0].mxu0
        %v1733 = vadd.f32 %v333, %v1732
        %1734 = vmatprep.mubr.f32.mxu0 0.0
        %1735 = vmatmul.mubr.f32.gmra.mrb[0].mxu0 %v1598
        %v1736 = vpop.f32.mrb[0].mxu0
        %v1737 = vadd.f32 %v329, %v1736
        %v1738 = vpop.f32.mrb[0].mxu0
        %v1739 = vadd.f32 %v333, %v1738
        %1740 = vmatprep.mubr.f32.mxu0 0.0
        %1741 = vmatmul.mubr.f32.gmra.mrb[0].mxu0 %v1600
        %v1742 = vpop.f32.mrb[0].mxu0
        %v1743 = vadd.f32 %v329, %v1742
        %v1744 = vpop.f32.mrb[0].mxu0
        %v1745 = vadd.f32 %v333, %v1744
        %1746 = vmatprep.mubr.f32.mxu0 0.0
        %1747 = vmatmul.mubr.f32.gmra.mrb[0].mxu0 %v1602
        %v1748 = vpop.f32.mrb[0].mxu0
        %v1749 = vadd.f32 %v329, %v1748
        %v1750 = vpop.f32.mrb[0].mxu0
        %v1751 = vadd.f32 %v333, %v1750
        %1752 = vmatprep.mubr.f32.mxu0 0.0
        %1753 = vmatmul.mubr.f32.gmra.mrb[0].mxu0 %v1604
        %v1754 = vpop.f32.mrb[0].mxu0
        %v1755 = vadd.f32 %v329, %v1754
        %v1756 = vpop.f32.mrb[0].mxu0
        %v1757 = vadd.f32 %v333, %v1756
        %1758 = vmatprep.mubr.f32.mxu0 0.0
        %1759 = vmatmul.mubr.f32.gmra.mrb[0].mxu0 %v1606
        %v1760 = vpop.f32.mrb[0].mxu0
        %v1761 = vadd.f32 %v329, %v1760
        %v1762 = vpop.f32.mrb[0].mxu0
        %v1763 = vadd.f32 %v333, %v1762
        %1764 = vmatprep.mubr.f32.mxu0 0.0
        %1765 = vmatmul.mubr.f32.gmra.mrb[0].mxu0 %v1608
        %v1766 = vpop.f32.mrb[0].mxu0
        %v1767 = vadd.f32 %v329, %v1766
        %v1768 = vpop.f32.mrb[0].mxu0
        %v1769 = vadd.f32 %v333, %v1768
        %1770 = vdwg.mxu0
        %1787 = vrot.lane.b32.xlu0 %v1679, 96
        %v1788 = vpop.permute.xlu0 %1787
        %1789 = vrot.lane.b32.xlu0 %v1685, 96
        %v1790 = vpop.permute.xlu0 %1789
        %1791 = vrot.lane.b32.xlu0 %v1691, 96
        %v1792 = vpop.permute.xlu0 %1791
        %1793 = vrot.lane.b32.xlu0 %v1697, 96
        %v1794 = vpop.permute.xlu0 %1793
        %1795 = vrot.lane.b32.xlu0 %v1703, 96
        %v1796 = vpop.permute.xlu0 %1795
        %1797 = vrot.lane.b32.xlu0 %v1709, 96
        %v1798 = vpop.permute.xlu0 %1797
        %1799 = vrot.lane.b32.xlu0 %v1715, 96
        %v1800 = vpop.permute.xlu0 %1799
        %1801 = vrot.lane.b32.xlu0 %v1721, 96
        %v1802 = vpop.permute.xlu0 %1801
        %1803 = vrot.lane.b32.xlu0 %v1727, 96
        %v1804 = vpop.permute.xlu0 %1803
        %1805 = vrot.lane.b32.xlu0 %v1733, 96
        %v1806 = vpop.permute.xlu0 %1805
        %1807 = vrot.lane.b32.xlu0 %v1739, 96
        %v1808 = vpop.permute.xlu0 %1807
        %1809 = vrot.lane.b32.xlu0 %v1745, 96
        %v1810 = vpop.permute.xlu0 %1809
        %1811 = vrot.lane.b32.xlu0 %v1751, 96
        %v1812 = vpop.permute.xlu0 %1811
        %1813 = vrot.lane.b32.xlu0 %v1757, 96
        %v1814 = vpop.permute.xlu0 %1813
        %1815 = vrot.lane.b32.xlu0 %v1763, 96
        %v1816 = vpop.permute.xlu0 %1815
        %1817 = vrot.lane.b32.xlu0 %v1769, 96
        %v1818 = vpop.permute.xlu0 %1817
        %1835 = vrot.lane.b32.xlu0 %v1677, 32
        %v1836 = vpop.permute.xlu0 %1835
        %1837 = vrot.lane.b32.xlu0 %v1683, 32
        %v1838 = vpop.permute.xlu0 %1837
        %1839 = vrot.lane.b32.xlu0 %v1689, 32
        %v1840 = vpop.permute.xlu0 %1839
        %1841 = vrot.lane.b32.xlu0 %v1695, 32
        %v1842 = vpop.permute.xlu0 %1841
        %1843 = vrot.lane.b32.xlu0 %v1701, 32
        %v1844 = vpop.permute.xlu0 %1843
        %1845 = vrot.lane.b32.xlu0 %v1707, 32
        %v1846 = vpop.permute.xlu0 %1845
        %1847 = vrot.lane.b32.xlu0 %v1713, 32
        %v1848 = vpop.permute.xlu0 %1847
        %1849 = vrot.lane.b32.xlu0 %v1719, 32
        %v1850 = vpop.permute.xlu0 %1849
        %1851 = vrot.lane.b32.xlu0 %v1725, 32
        %v1852 = vpop.permute.xlu0 %1851
        %1853 = vrot.lane.b32.xlu0 %v1731, 32
        %v1854 = vpop.permute.xlu0 %1853
        %1855 = vrot.lane.b32.xlu0 %v1737, 32
        %v1856 = vpop.permute.xlu0 %1855
        %1857 = vrot.lane.b32.xlu0 %v1743, 32
        %v1858 = vpop.permute.xlu0 %1857
        %1859 = vrot.lane.b32.xlu0 %v1749, 32
        %v1860 = vpop.permute.xlu0 %1859
        %1861 = vrot.lane.b32.xlu0 %v1755, 32
        %v1862 = vpop.permute.xlu0 %1861
        %1863 = vrot.lane.b32.xlu0 %v1761, 32
        %v1864 = vpop.permute.xlu0 %1863
        %1865 = vrot.lane.b32.xlu0 %v1767, 32
        %v1866 = vpop.permute.xlu0 %1865
        %1867 = vrot.lane.b32.xlu0 %v1788, 32
        %v1868 = vpop.permute.xlu0 %1867
        %1869 = vrot.lane.b32.xlu0 %v1790, 32
        %v1870 = vpop.permute.xlu0 %1869
        %1871 = vrot.lane.b32.xlu0 %v1792, 32
        %v1872 = vpop.permute.xlu0 %1871
        %1873 = vrot.lane.b32.xlu0 %v1794, 32
        %v1874 = vpop.permute.xlu0 %1873
        %1875 = vrot.lane.b32.xlu0 %v1796, 32
        %v1876 = vpop.permute.xlu0 %1875
        %1877 = vrot.lane.b32.xlu0 %v1798, 32
        %v1878 = vpop.permute.xlu0 %1877
        %1879 = vrot.lane.b32.xlu0 %v1800, 32
        %v1880 = vpop.permute.xlu0 %1879
        %1881 = vrot.lane.b32.xlu0 %v1802, 32
        %v1882 = vpop.permute.xlu0 %1881
        %1883 = vrot.lane.b32.xlu0 %v1804, 32
        %v1884 = vpop.permute.xlu0 %1883
        %1885 = vrot.lane.b32.xlu0 %v1806, 32
        %v1886 = vpop.permute.xlu0 %1885
        %1887 = vrot.lane.b32.xlu0 %v1808, 32
        %v1888 = vpop.permute.xlu0 %1887
        %1889 = vrot.lane.b32.xlu0 %v1810, 32
        %v1890 = vpop.permute.xlu0 %1889
        %1891 = vrot.lane.b32.xlu0 %v1812, 32
        %v1892 = vpop.permute.xlu0 %1891
        %1893 = vrot.lane.b32.xlu0 %v1814, 32
        %v1894 = vpop.permute.xlu0 %1893
        %1895 = vrot.lane.b32.xlu0 %v1816, 32
        %v1896 = vpop.permute.xlu0 %1895
        %1897 = vrot.lane.b32.xlu0 %v1818, 32
        %v1898 = vpop.permute.xlu0 %1897
        %1931 = vmatprep.subr.mxu0 0.0
        %1932 = vmatpush1.msra.mxu0 %v1836
        %1933 = vmatprep.subr.mxu0 0.0
        %1934 = vmatpush1.msra.mxu0 %v1838
        %1935 = vmatprep.subr.mxu0 0.0
        %1936 = vmatpush1.msra.mxu0 %v1840
        %1937 = vmatprep.subr.mxu0 0.0
        %1938 = vmatpush1.msra.mxu0 %v1842
        %1939 = vmatprep.subr.mxu0 0.0
        %1940 = vmatpush1.msra.mxu0 %v1844
        %1941 = vmatprep.subr.mxu0 0.0
        %1942 = vmatpush1.msra.mxu0 %v1846
        %1943 = vmatprep.subr.mxu0 0.0
        %1944 = vmatpush1.msra.mxu0 %v1848
        %1945 = vmatprep.subr.mxu0 0.0
        %1946 = vmatpush1.msra.mxu0 %v1850
        %1947 = vmatprep.subr.mxu0 0.0
        %1948 = vmatpush1.msra.mxu0 %v1852
        %1949 = vmatprep.subr.mxu0 0.0
        %1950 = vmatpush1.msra.mxu0 %v1854
        %1951 = vmatprep.subr.mxu0 0.0
        %1952 = vmatpush1.msra.mxu0 %v1856
        %1953 = vmatprep.subr.mxu0 0.0
        %1954 = vmatpush1.msra.mxu0 %v1858
        %1955 = vmatprep.subr.mxu0 0.0
        %1956 = vmatpush1.msra.mxu0 %v1860
        %1957 = vmatprep.subr.mxu0 0.0
        %1958 = vmatpush1.msra.mxu0 %v1862
        %1959 = vmatprep.subr.mxu0 0.0
        %1960 = vmatpush1.msra.mxu0 %v1864
        %1961 = vmatprep.subr.mxu0 0.0
        %1962 = vmatpush1.msra.mxu0 %v1866
        %1963 = vmatprep.subr.mxu0 0.0
        %1964 = vmatpush1.msra.mxu0 %v1868
        %1965 = vmatprep.subr.mxu0 0.0
        %1966 = vmatpush1.msra.mxu0 %v1870
        %1967 = vmatprep.subr.mxu0 0.0
        %1968 = vmatpush1.msra.mxu0 %v1872
        %1969 = vmatprep.subr.mxu0 0.0
        %1970 = vmatpush1.msra.mxu0 %v1874
        %1971 = vmatprep.subr.mxu0 0.0
        %1972 = vmatpush1.msra.mxu0 %v1876
        %1973 = vmatprep.subr.mxu0 0.0
        %1974 = vmatpush1.msra.mxu0 %v1878
        %1975 = vmatprep.subr.mxu0 0.0
        %1976 = vmatpush1.msra.mxu0 %v1880
        %1977 = vmatprep.subr.mxu0 0.0
        %1978 = vmatpush1.msra.mxu0 %v1882
        %1979 = vmatprep.subr.mxu0 0.0
        %1980 = vmatpush1.msra.mxu0 %v1884
        %1981 = vmatprep.subr.mxu0 0.0
        %1982 = vmatpush1.msra.mxu0 %v1886
        %1983 = vmatprep.subr.mxu0 0.0
        %1984 = vmatpush1.msra.mxu0 %v1888
        %1985 = vmatprep.subr.mxu0 0.0
        %1986 = vmatpush1.msra.mxu0 %v1890
        %1987 = vmatprep.subr.mxu0 0.0
        %1988 = vmatpush1.msra.mxu0 %v1892
        %1989 = vmatprep.subr.mxu0 0.0
        %1990 = vmatpush1.msra.mxu0 %v1894
        %1991 = vmatprep.subr.mxu0 0.0
        %1992 = vmatpush1.msra.mxu0 %v1896
        %1993 = vmatprep.subr.mxu0 0.0
        %1994 = vmatpush1.msra.mxu0 %v1898
        %1995 = vmatprep.mubr.f32.mxu0 %v595
        %1996 = vmatmul.mubr.f32.gmra.mrb[0].mxu0 %v594
        %v1997 = vpop.f32.mrb[0].mxu0
        %v1998 = vadd.f32 0.0, %v1997
        %v1999 = vpop.f32.mrb[0].mxu0
        %2000 = vmatprep.mubr.f32.mxu0 %v597
        %2001 = vmatmul.mubr.f32.gmra.mrb[0].mxu0 %v596
        %v2002 = vpop.f32.mrb[0].mxu0
        %v2003 = vadd.f32 0.0, %v2002
        %v2004 = vpop.f32.mrb[0].mxu0
        %2005 = vmatprep.mubr.f32.mxu0 %v599
        %2006 = vmatmul.mubr.f32.gmra.mrb[0].mxu0 %v598
        %v2007 = vpop.f32.mrb[0].mxu0
        %v2008 = vadd.f32 0.0, %v2007
        %v2009 = vpop.f32.mrb[0].mxu0
        %2010 = vmatprep.mubr.f32.mxu0 %v601
        %2011 = vmatmul.mubr.f32.gmra.mrb[0].mxu0 %v600
        %v2012 = vpop.f32.mrb[0].mxu0
        %v2013 = vadd.f32 0.0, %v2012
        %v2014 = vpop.f32.mrb[0].mxu0
        %2015 = vmatprep.mubr.f32.mxu0 %v603
        %2016 = vmatmul.mubr.f32.gmra.mrb[0].mxu0 %v602
        %v2017 = vpop.f32.mrb[0].mxu0
        %v2018 = vadd.f32 0.0, %v2017
        %v2019 = vpop.f32.mrb[0].mxu0
        %2020 = vmatprep.mubr.f32.mxu0 %v605
        %2021 = vmatmul.mubr.f32.gmra.mrb[0].mxu0 %v604
        %v2022 = vpop.f32.mrb[0].mxu0
        %v2023 = vadd.f32 0.0, %v2022
        %v2024 = vpop.f32.mrb[0].mxu0
        %2025 = vmatprep.mubr.f32.mxu0 %v607
        %2026 = vmatmul.mubr.f32.gmra.mrb[0].mxu0 %v606
        %v2027 = vpop.f32.mrb[0].mxu0
        %v2028 = vadd.f32 0.0, %v2027
        %v2029 = vpop.f32.mrb[0].mxu0
        %2030 = vmatprep.mubr.f32.mxu0 %v609
        %2031 = vmatmul.mubr.f32.gmra.mrb[0].mxu0 %v608
        %v2032 = vpop.f32.mrb[0].mxu0
        %v2033 = vadd.f32 0.0, %v2032
        %v2034 = vpop.f32.mrb[0].mxu0
        %2035 = vmatprep.mubr.f32.mxu0 %v611
        %2036 = vmatmul.mubr.f32.gmra.mrb[0].mxu0 %v610
        %v2037 = vpop.f32.mrb[0].mxu0
        %v2038 = vadd.f32 0.0, %v2037
        %v2039 = vpop.f32.mrb[0].mxu0
        %2040 = vmatprep.mubr.f32.mxu0 %v613
        %2041 = vmatmul.mubr.f32.gmra.mrb[0].mxu0 %v612
        %v2042 = vpop.f32.mrb[0].mxu0
        %v2043 = vadd.f32 0.0, %v2042
        %v2044 = vpop.f32.mrb[0].mxu0
        %2045 = vmatprep.mubr.f32.mxu0 %v615
        %2046 = vmatmul.mubr.f32.gmra.mrb[0].mxu0 %v614
        %v2047 = vpop.f32.mrb[0].mxu0
        %v2048 = vadd.f32 0.0, %v2047
        %v2049 = vpop.f32.mrb[0].mxu0
        %2050 = vmatprep.mubr.f32.mxu0 %v617
        %2051 = vmatmul.mubr.f32.gmra.mrb[0].mxu0 %v616
        %v2052 = vpop.f32.mrb[0].mxu0
        %v2053 = vadd.f32 0.0, %v2052
        %v2054 = vpop.f32.mrb[0].mxu0
        %2055 = vmatprep.mubr.f32.mxu0 %v619
        %2056 = vmatmul.mubr.f32.gmra.mrb[0].mxu0 %v618
        %v2057 = vpop.f32.mrb[0].mxu0
        %v2058 = vadd.f32 0.0, %v2057
        %v2059 = vpop.f32.mrb[0].mxu0
        %2060 = vmatprep.mubr.f32.mxu0 %v621
        %2061 = vmatmul.mubr.f32.gmra.mrb[0].mxu0 %v620
        %v2062 = vpop.f32.mrb[0].mxu0
        %v2063 = vadd.f32 0.0, %v2062
        %v2064 = vpop.f32.mrb[0].mxu0
        %2065 = vmatprep.mubr.f32.mxu0 %v623
        %2066 = vmatmul.mubr.f32.gmra.mrb[0].mxu0 %v622
        %v2067 = vpop.f32.mrb[0].mxu0
        %v2068 = vadd.f32 0.0, %v2067
        %v2069 = vpop.f32.mrb[0].mxu0
        %2070 = vmatprep.mubr.f32.mxu0 %v625
        %2071 = vmatmul.mubr.f32.gmra.mrb[0].mxu0 %v624
        %v2072 = vpop.f32.mrb[0].mxu0
        %v2073 = vadd.f32 0.0, %v2072
        %v2074 = vpop.f32.mrb[0].mxu0
        %2075 = vdwg.mxu0
        %v2077 = vsel %vm336, %v1998, 0
        %v2080 = vsel %vm336, %v2003, 0
        %v2083 = vsel %vm336, %v2008, 0
        %v2086 = vsel %vm336, %v2013, 0
        %v2089 = vsel %vm336, %v2018, 0
        %v2092 = vsel %vm336, %v2023, 0
        %v2095 = vsel %vm336, %v2028, 0
        %v2098 = vsel %vm336, %v2033, 0
        %v2101 = vsel %vm336, %v2038, 0
        %v2104 = vsel %vm336, %v2043, 0
        %v2107 = vsel %vm336, %v2048, 0
        %v2110 = vsel %vm336, %v2053, 0
        %v2113 = vsel %vm336, %v2058, 0
        %v2116 = vsel %vm336, %v2063, 0
        %v2119 = vsel %vm336, %v2068, 0
        %v2122 = vsel %vm336, %v2073, 0
        %2124 = vmatprep.subr.mxu0 0.0
        %2125 = vmatpush1.msra.mxu0 %v304
        %2126 = vmatprep.subr.mxu0 0.0
        %2127 = vmatpush1.msra.mxu0 %v305
        %2128 = vmatprep.subr.mxu0 0.0
        %2129 = vmatpush1.msra.mxu0 %v306
        %2130 = vmatprep.subr.mxu0 0.0
        %2131 = vmatpush1.msra.mxu0 %v307
        %2132 = vmatprep.subr.mxu0 0.0
        %2133 = vmatpush1.msra.mxu0 0.0
        %2134 = vmatprep.subr.mxu0 0.0
        %2135 = vmatpush1.msra.mxu0 0.0
        %2136 = vmatprep.subr.mxu0 0.0
        %2137 = vmatpush1.msra.mxu0 0.0
        %2138 = vmatprep.subr.mxu0 0.0
        %2139 = vmatpush1.msra.mxu0 0.0
        %2140 = vmatprep.subr.mxu0 0.0
        %2141 = vmatpush1.msra.mxu0 0.0
        %2142 = vmatprep.subr.mxu0 0.0
        %2143 = vmatpush1.msra.mxu0 0.0
        %2144 = vmatprep.subr.mxu0 0.0
        %2145 = vmatpush1.msra.mxu0 0.0
        %2146 = vmatprep.subr.mxu0 0.0
        %2147 = vmatpush1.msra.mxu0 0.0
        %2148 = vmatprep.subr.mxu0 0.0
        %2149 = vmatpush1.msra.mxu0 0.0
        %2150 = vmatprep.subr.mxu0 0.0
        %2151 = vmatpush1.msra.mxu0 0.0
        %2152 = vmatprep.subr.mxu0 0.0
        %2153 = vmatpush1.msra.mxu0 0.0
        %2154 = vmatprep.subr.mxu0 0.0
        %2155 = vmatpush1.msra.mxu0 0.0
        %2156 = vmatprep.subr.mxu0 0.0
        %2157 = vmatpush1.msra.mxu0 0.0
        %2158 = vmatprep.subr.mxu0 0.0
        %2159 = vmatpush1.msra.mxu0 0.0
        %2160 = vmatprep.subr.mxu0 0.0
        %2161 = vmatpush1.msra.mxu0 0.0
        %2162 = vmatprep.subr.mxu0 0.0
        %2163 = vmatpush1.msra.mxu0 0.0
        %2164 = vmatprep.subr.mxu0 0.0
        %2165 = vmatpush1.msra.mxu0 0.0
        %2166 = vmatprep.subr.mxu0 0.0
        %2167 = vmatpush1.msra.mxu0 0.0
        %2168 = vmatprep.subr.mxu0 0.0
        %2169 = vmatpush1.msra.mxu0 0.0
        %2170 = vmatprep.subr.mxu0 0.0
        %2171 = vmatpush1.msra.mxu0 0.0
        %2172 = vmatprep.subr.mxu0 0.0
        %2173 = vmatpush1.msra.mxu0 0.0
        %2174 = vmatprep.subr.mxu0 0.0
        %2175 = vmatpush1.msra.mxu0 0.0
        %2176 = vmatprep.subr.mxu0 0.0
        %2177 = vmatpush1.msra.mxu0 0.0
        %2178 = vmatprep.subr.mxu0 0.0
        %2179 = vmatpush1.msra.mxu0 0.0
        %2180 = vmatprep.subr.mxu0 0.0
        %2181 = vmatpush1.msra.mxu0 0.0
        %2182 = vmatprep.subr.mxu0 0.0
        %2183 = vmatpush1.msra.mxu0 0.0
        %2184 = vmatprep.subr.mxu0 0.0
        %2185 = vmatpush1.msra.mxu0 0.0
        %2186 = vmatprep.subr.mxu0 0.0
        %2187 = vmatpush1.msra.mxu0 0.0
        %2188 = vmatprep.mubr.f32.mxu0 0.0
        %2189 = vmatmul.mubr.f32.gmra.mrb[0].mxu0 %v2077
        %v2190 = vpop.f32.mrb[0].mxu0
        %v2191 = vadd.f32 %v887, %v2190
        %v2192 = vpop.f32.mrb[0].mxu0
        %2193 = vmatprep.mubr.f32.mxu0 0.0
        %2194 = vmatmul.mubr.f32.gmra.mrb[0].mxu0 %v2080
        %v2195 = vpop.f32.mrb[0].mxu0
        %v2196 = vadd.f32 %v887, %v2195
        %v2197 = vpop.f32.mrb[0].mxu0
        %2198 = vmatprep.mubr.f32.mxu0 0.0
        %2199 = vmatmul.mubr.f32.gmra.mrb[0].mxu0 %v2083
        %v2200 = vpop.f32.mrb[0].mxu0
        %v2201 = vadd.f32 %v887, %v2200
        %v2202 = vpop.f32.mrb[0].mxu0
        %2203 = vmatprep.mubr.f32.mxu0 0.0
        %2204 = vmatmul.mubr.f32.gmra.mrb[0].mxu0 %v2086
        %v2205 = vpop.f32.mrb[0].mxu0
        %v2206 = vadd.f32 %v887, %v2205
        %v2207 = vpop.f32.mrb[0].mxu0
        %2208 = vmatprep.mubr.f32.mxu0 0.0
        %2209 = vmatmul.mubr.f32.gmra.mrb[0].mxu0 %v2089
        %v2210 = vpop.f32.mrb[0].mxu0
        %v2211 = vadd.f32 %v887, %v2210
        %v2212 = vpop.f32.mrb[0].mxu0
        %2213 = vmatprep.mubr.f32.mxu0 0.0
        %2214 = vmatmul.mubr.f32.gmra.mrb[0].mxu0 %v2092
        %v2215 = vpop.f32.mrb[0].mxu0
        %v2216 = vadd.f32 %v887, %v2215
        %v2217 = vpop.f32.mrb[0].mxu0
        %2218 = vmatprep.mubr.f32.mxu0 0.0
        %2219 = vmatmul.mubr.f32.gmra.mrb[0].mxu0 %v2095
        %v2220 = vpop.f32.mrb[0].mxu0
        %v2221 = vadd.f32 %v887, %v2220
        %v2222 = vpop.f32.mrb[0].mxu0
        %2223 = vmatprep.mubr.f32.mxu0 0.0
        %2224 = vmatmul.mubr.f32.gmra.mrb[0].mxu0 %v2098
        %v2225 = vpop.f32.mrb[0].mxu0
        %v2226 = vadd.f32 %v887, %v2225
        %v2227 = vpop.f32.mrb[0].mxu0
        %2228 = vmatprep.mubr.f32.mxu0 0.0
        %2229 = vmatmul.mubr.f32.gmra.mrb[0].mxu0 %v2101
        %v2230 = vpop.f32.mrb[0].mxu0
        %v2231 = vadd.f32 %v887, %v2230
        %v2232 = vpop.f32.mrb[0].mxu0
        %2233 = vmatprep.mubr.f32.mxu0 0.0
        %2234 = vmatmul.mubr.f32.gmra.mrb[0].mxu0 %v2104
        %v2235 = vpop.f32.mrb[0].mxu0
        %v2236 = vadd.f32 %v887, %v2235
        %v2237 = vpop.f32.mrb[0].mxu0
        %2238 = vmatprep.mubr.f32.mxu0 0.0
        %2239 = vmatmul.mubr.f32.gmra.mrb[0].mxu0 %v2107
        %v2240 = vpop.f32.mrb[0].mxu0
        %v2241 = vadd.f32 %v887, %v2240
        %v2242 = vpop.f32.mrb[0].mxu0
        %2243 = vmatprep.mubr.f32.mxu0 0.0
        %2244 = vmatmul.mubr.f32.gmra.mrb[0].mxu0 %v2110
        %v2245 = vpop.f32.mrb[0].mxu0
        %v2246 = vadd.f32 %v887, %v2245
        %v2247 = vpop.f32.mrb[0].mxu0
        %2248 = vmatprep.mubr.f32.mxu0 0.0
        %2249 = vmatmul.mubr.f32.gmra.mrb[0].mxu0 %v2113
        %v2250 = vpop.f32.mrb[0].mxu0
        %v2251 = vadd.f32 %v887, %v2250
        %v2252 = vpop.f32.mrb[0].mxu0
        %2253 = vmatprep.mubr.f32.mxu0 0.0
        %2254 = vmatmul.mubr.f32.gmra.mrb[0].mxu0 %v2116
        %v2255 = vpop.f32.mrb[0].mxu0
        %v2256 = vadd.f32 %v887, %v2255
        %v2257 = vpop.f32.mrb[0].mxu0
        %2258 = vmatprep.mubr.f32.mxu0 0.0
        %2259 = vmatmul.mubr.f32.gmra.mrb[0].mxu0 %v2119
        %v2260 = vpop.f32.mrb[0].mxu0
        %v2261 = vadd.f32 %v887, %v2260
        %v2262 = vpop.f32.mrb[0].mxu0
        %2263 = vmatprep.mubr.f32.mxu0 0.0
        %2264 = vmatmul.mubr.f32.gmra.mrb[0].mxu0 %v2122
        %v2265 = vpop.f32.mrb[0].mxu0
        %v2266 = vadd.f32 %v887, %v2265
        %v2267 = vpop.f32.mrb[0].mxu0
        %2268 = vdwg.mxu0
        %v2269 = vadd.f32 %v2191, %v1677
        %v2270 = vadd.f32 %v2196, %v1683
        %v2271 = vadd.f32 %v2201, %v1689
        %v2272 = vadd.f32 %v2206, %v1695
        %v2273 = vadd.f32 %v2211, %v1701
        %v2274 = vadd.f32 %v2216, %v1707
        %v2275 = vadd.f32 %v2221, %v1713
        %v2276 = vadd.f32 %v2226, %v1719
        %v2277 = vadd.f32 %v2231, %v1725
        %v2278 = vadd.f32 %v2236, %v1731
        %v2279 = vadd.f32 %v2241, %v1737
        %v2280 = vadd.f32 %v2246, %v1743
        %v2281 = vadd.f32 %v2251, %v1749
        %v2282 = vadd.f32 %v2256, %v1755
        %v2283 = vadd.f32 %v2261, %v1761
        %v2284 = vadd.f32 %v2266, %v1767
        %v2285 = vxor.u32 %v2269, 2147483648
        %v2286 = vxor.u32 %v2270, 2147483648
        %v2287 = vxor.u32 %v2271, 2147483648
        %v2288 = vxor.u32 %v2272, 2147483648
        %v2289 = vxor.u32 %v2273, 2147483648
        %v2290 = vxor.u32 %v2274, 2147483648
        %v2291 = vxor.u32 %v2275, 2147483648
        %v2292 = vxor.u32 %v2276, 2147483648
        %v2293 = vxor.u32 %v2277, 2147483648
        %v2294 = vxor.u32 %v2278, 2147483648
        %v2295 = vxor.u32 %v2279, 2147483648
        %v2296 = vxor.u32 %v2280, 2147483648
        %v2297 = vxor.u32 %v2281, 2147483648
        %v2298 = vxor.u32 %v2282, 2147483648
        %v2299 = vxor.u32 %v2283, 2147483648
        %v2300 = vxor.u32 %v2284, 2147483648
        %v2301 = vmul.f32 %v2285, 1.442695
        %v2302 = vpow.pop %v2301
        %v2303 = vmul.f32 %v2286, 1.442695
        %v2304 = vpow.pop %v2303
        %v2305 = vmul.f32 %v2287, 1.442695
        %v2306 = vpow.pop %v2305
        %v2307 = vmul.f32 %v2288, 1.442695
        %v2308 = vpow.pop %v2307
        %v2309 = vmul.f32 %v2289, 1.442695
        %v2310 = vpow.pop %v2309
        %v2311 = vmul.f32 %v2290, 1.442695
        %v2312 = vpow.pop %v2311
        %v2313 = vmul.f32 %v2291, 1.442695
        %v2314 = vpow.pop %v2313
        %v2315 = vmul.f32 %v2292, 1.442695
        %v2316 = vpow.pop %v2315
        %v2317 = vmul.f32 %v2293, 1.442695
        %v2318 = vpow.pop %v2317
        %v2319 = vmul.f32 %v2294, 1.442695
        %v2320 = vpow.pop %v2319
        %v2321 = vmul.f32 %v2295, 1.442695
        %v2322 = vpow.pop %v2321
        %v2323 = vmul.f32 %v2296, 1.442695
        %v2324 = vpow.pop %v2323
        %v2325 = vmul.f32 %v2297, 1.442695
        %v2326 = vpow.pop %v2325
        %v2327 = vmul.f32 %v2298, 1.442695
        %v2328 = vpow.pop %v2327
        %v2329 = vmul.f32 %v2299, 1.442695
        %v2330 = vpow.pop %v2329
        %v2331 = vmul.f32 %v2300, 1.442695
        %v2332 = vpow.pop %v2331
        %v2333 = vadd.f32 %v2302, 1.0
        %v2334 = vadd.f32 %v2304, 1.0
        %v2335 = vadd.f32 %v2306, 1.0
        %v2336 = vadd.f32 %v2308, 1.0
        %v2337 = vadd.f32 %v2310, 1.0
        %v2338 = vadd.f32 %v2312, 1.0
        %v2339 = vadd.f32 %v2314, 1.0
        %v2340 = vadd.f32 %v2316, 1.0
        %v2341 = vadd.f32 %v2318, 1.0
        %v2342 = vadd.f32 %v2320, 1.0
        %v2343 = vadd.f32 %v2322, 1.0
        %v2344 = vadd.f32 %v2324, 1.0
        %v2345 = vadd.f32 %v2326, 1.0
        %v2346 = vadd.f32 %v2328, 1.0
        %v2347 = vadd.f32 %v2330, 1.0
        %v2348 = vadd.f32 %v2332, 1.0
        %v2349 = vrcp.pop %v2333
        %v2350 = vmul.f32 1.0, %v2349
        %v2351 = vrcp.pop %v2334
        %v2352 = vmul.f32 1.0, %v2351
        %v2353 = vrcp.pop %v2335
        %v2354 = vmul.f32 1.0, %v2353
        %v2355 = vrcp.pop %v2336
        %v2356 = vmul.f32 1.0, %v2355
        %v2357 = vrcp.pop %v2337
        %v2358 = vmul.f32 1.0, %v2357
        %v2359 = vrcp.pop %v2338
        %v2360 = vmul.f32 1.0, %v2359
        %v2361 = vrcp.pop %v2339
        %v2362 = vmul.f32 1.0, %v2361
        %v2363 = vrcp.pop %v2340
        %v2364 = vmul.f32 1.0, %v2363
        %v2365 = vrcp.pop %v2341
        %v2366 = vmul.f32 1.0, %v2365
        %v2367 = vrcp.pop %v2342
        %v2368 = vmul.f32 1.0, %v2367
        %v2369 = vrcp.pop %v2343
        %v2370 = vmul.f32 1.0, %v2369
        %v2371 = vrcp.pop %v2344
        %v2372 = vmul.f32 1.0, %v2371
        %v2373 = vrcp.pop %v2345
        %v2374 = vmul.f32 1.0, %v2373
        %v2375 = vrcp.pop %v2346
        %v2376 = vmul.f32 1.0, %v2375
        %v2377 = vrcp.pop %v2347
        %v2378 = vmul.f32 1.0, %v2377
        %v2379 = vrcp.pop %v2348
        %v2380 = vmul.f32 1.0, %v2379
        %2381 = vrot.lane.b32.xlu0 %v1677, 64
        %v2382 = vpop.permute.xlu0 %2381
        %2383 = vrot.lane.b32.xlu0 %v1683, 64
        %v2384 = vpop.permute.xlu0 %2383
        %2385 = vrot.lane.b32.xlu0 %v1689, 64
        %v2386 = vpop.permute.xlu0 %2385
        %2387 = vrot.lane.b32.xlu0 %v1695, 64
        %v2388 = vpop.permute.xlu0 %2387
        %2389 = vrot.lane.b32.xlu0 %v1701, 64
        %v2390 = vpop.permute.xlu0 %2389
        %2391 = vrot.lane.b32.xlu0 %v1707, 64
        %v2392 = vpop.permute.xlu0 %2391
        %2393 = vrot.lane.b32.xlu0 %v1713, 64
        %v2394 = vpop.permute.xlu0 %2393
        %2395 = vrot.lane.b32.xlu0 %v1719, 64
        %v2396 = vpop.permute.xlu0 %2395
        %2397 = vrot.lane.b32.xlu0 %v1725, 64
        %v2398 = vpop.permute.xlu0 %2397
        %2399 = vrot.lane.b32.xlu0 %v1731, 64
        %v2400 = vpop.permute.xlu0 %2399
        %2401 = vrot.lane.b32.xlu0 %v1737, 64
        %v2402 = vpop.permute.xlu0 %2401
        %2403 = vrot.lane.b32.xlu0 %v1743, 64
        %v2404 = vpop.permute.xlu0 %2403
        %2405 = vrot.lane.b32.xlu0 %v1749, 64
        %v2406 = vpop.permute.xlu0 %2405
        %2407 = vrot.lane.b32.xlu0 %v1755, 64
        %v2408 = vpop.permute.xlu0 %2407
        %2409 = vrot.lane.b32.xlu0 %v1761, 64
        %v2410 = vpop.permute.xlu0 %2409
        %2411 = vrot.lane.b32.xlu0 %v1767, 64
        %v2412 = vpop.permute.xlu0 %2411
        %v2429 = vmul.f32 %v2350, %v2382
        %v2430 = vmul.f32 %v2352, %v2384
        %v2431 = vmul.f32 %v2354, %v2386
        %v2432 = vmul.f32 %v2356, %v2388
        %v2433 = vmul.f32 %v2358, %v2390
        %v2434 = vmul.f32 %v2360, %v2392
        %v2435 = vmul.f32 %v2362, %v2394
        %v2436 = vmul.f32 %v2364, %v2396
        %v2437 = vmul.f32 %v2366, %v2398
        %v2438 = vmul.f32 %v2368, %v2400
        %v2439 = vmul.f32 %v2370, %v2402
        %v2440 = vmul.f32 %v2372, %v2404
        %v2441 = vmul.f32 %v2374, %v2406
        %v2442 = vmul.f32 %v2376, %v2408
        %v2443 = vmul.f32 %v2378, %v2410
        %v2444 = vmul.f32 %v2380, %v2412
        %2461 = vrot.lane.b32.xlu0 %v2429, 64
        %v2462 = vpop.permute.xlu0 %2461
        %2463 = vrot.lane.b32.xlu0 %v2430, 64
        %v2464 = vpop.permute.xlu0 %2463
        %2465 = vrot.lane.b32.xlu0 %v2431, 64
        %v2466 = vpop.permute.xlu0 %2465
        %2467 = vrot.lane.b32.xlu0 %v2432, 64
        %v2468 = vpop.permute.xlu0 %2467
        %2469 = vrot.lane.b32.xlu0 %v2433, 64
        %v2470 = vpop.permute.xlu0 %2469
        %2471 = vrot.lane.b32.xlu0 %v2434, 64
        %v2472 = vpop.permute.xlu0 %2471
        %2473 = vrot.lane.b32.xlu0 %v2435, 64
        %v2474 = vpop.permute.xlu0 %2473
        %2475 = vrot.lane.b32.xlu0 %v2436, 64
        %v2476 = vpop.permute.xlu0 %2475
        %2477 = vrot.lane.b32.xlu0 %v2437, 64
        %v2478 = vpop.permute.xlu0 %2477
        %2479 = vrot.lane.b32.xlu0 %v2438, 64
        %v2480 = vpop.permute.xlu0 %2479
        %2481 = vrot.lane.b32.xlu0 %v2439, 64
        %v2482 = vpop.permute.xlu0 %2481
        %2483 = vrot.lane.b32.xlu0 %v2440, 64
        %v2484 = vpop.permute.xlu0 %2483
        %2485 = vrot.lane.b32.xlu0 %v2441, 64
        %v2486 = vpop.permute.xlu0 %2485
        %2487 = vrot.lane.b32.xlu0 %v2442, 64
        %v2488 = vpop.permute.xlu0 %2487
        %2489 = vrot.lane.b32.xlu0 %v2443, 64
        %v2490 = vpop.permute.xlu0 %2489
        %2491 = vrot.lane.b32.xlu0 %v2444, 64
        %v2492 = vpop.permute.xlu0 %2491
        %v2509 = vadd.f32 %v2191, %v2462
        %v2510 = vadd.f32 %v2196, %v2464
        %v2511 = vadd.f32 %v2201, %v2466
        %v2512 = vadd.f32 %v2206, %v2468
        %v2513 = vadd.f32 %v2211, %v2470
        %v2514 = vadd.f32 %v2216, %v2472
        %v2515 = vadd.f32 %v2221, %v2474
        %v2516 = vadd.f32 %v2226, %v2476
        %v2517 = vadd.f32 %v2231, %v2478
        %v2518 = vadd.f32 %v2236, %v2480
        %v2519 = vadd.f32 %v2241, %v2482
        %v2520 = vadd.f32 %v2246, %v2484
        %v2521 = vadd.f32 %v2251, %v2486
        %v2522 = vadd.f32 %v2256, %v2488
        %v2523 = vadd.f32 %v2261, %v2490
        %v2524 = vadd.f32 %v2266, %v2492
        %v2525 = vtanh.pop %v2509
        %v2526 = vtanh.pop %v2510
        %v2527 = vtanh.pop %v2511
        %v2528 = vtanh.pop %v2512
        %v2529 = vtanh.pop %v2513
        %v2530 = vtanh.pop %v2514
        %v2531 = vtanh.pop %v2515
        %v2532 = vtanh.pop %v2516
        %v2533 = vtanh.pop %v2517
        %v2534 = vtanh.pop %v2518
        %v2535 = vtanh.pop %v2519
        %v2536 = vtanh.pop %v2520
        %v2537 = vtanh.pop %v2521
        %v2538 = vtanh.pop %v2522
        %v2539 = vtanh.pop %v2523
        %v2540 = vtanh.pop %v2524
        %v2541 = vsub.f32 1.0, %v2350
        %v2542 = vsub.f32 1.0, %v2352
        %v2543 = vsub.f32 1.0, %v2354
        %v2544 = vsub.f32 1.0, %v2356
        %v2545 = vsub.f32 1.0, %v2358
        %v2546 = vsub.f32 1.0, %v2360
        %v2547 = vsub.f32 1.0, %v2362
        %v2548 = vsub.f32 1.0, %v2364
        %v2549 = vsub.f32 1.0, %v2366
        %v2550 = vsub.f32 1.0, %v2368
        %v2551 = vsub.f32 1.0, %v2370
        %v2552 = vsub.f32 1.0, %v2372
        %v2553 = vsub.f32 1.0, %v2374
        %v2554 = vsub.f32 1.0, %v2376
        %v2555 = vsub.f32 1.0, %v2378
        %v2556 = vsub.f32 1.0, %v2380
        %2573 = vrot.lane.b32.xlu0 %v2525, 96
        %v2574 = vpop.permute.xlu0 %2573
        %2575 = vrot.lane.b32.xlu0 %v2526, 96
        %v2576 = vpop.permute.xlu0 %2575
        %2577 = vrot.lane.b32.xlu0 %v2527, 96
        %v2578 = vpop.permute.xlu0 %2577
        %2579 = vrot.lane.b32.xlu0 %v2528, 96
        %v2580 = vpop.permute.xlu0 %2579
        %2581 = vrot.lane.b32.xlu0 %v2529, 96
        %v2582 = vpop.permute.xlu0 %2581
        %2583 = vrot.lane.b32.xlu0 %v2530, 96
        %v2584 = vpop.permute.xlu0 %2583
        %2585 = vrot.lane.b32.xlu0 %v2531, 96
        %v2586 = vpop.permute.xlu0 %2585
        %2587 = vrot.lane.b32.xlu0 %v2532, 96
        %v2588 = vpop.permute.xlu0 %2587
        %2589 = vrot.lane.b32.xlu0 %v2533, 96
        %v2590 = vpop.permute.xlu0 %2589
        %2591 = vrot.lane.b32.xlu0 %v2534, 96
        %v2592 = vpop.permute.xlu0 %2591
        %2593 = vrot.lane.b32.xlu0 %v2535, 96
        %v2594 = vpop.permute.xlu0 %2593
        %2595 = vrot.lane.b32.xlu0 %v2536, 96
        %v2596 = vpop.permute.xlu0 %2595
        %2597 = vrot.lane.b32.xlu0 %v2537, 96
        %v2598 = vpop.permute.xlu0 %2597
        %2599 = vrot.lane.b32.xlu0 %v2538, 96
        %v2600 = vpop.permute.xlu0 %2599
        %2601 = vrot.lane.b32.xlu0 %v2539, 96
        %v2602 = vpop.permute.xlu0 %2601
        %2603 = vrot.lane.b32.xlu0 %v2540, 96
        %v2604 = vpop.permute.xlu0 %2603
        %v2621 = vmul.f32 %v2541, %v2574
        %v2622 = vmul.f32 %v2542, %v2576
        %v2623 = vmul.f32 %v2543, %v2578
        %v2624 = vmul.f32 %v2544, %v2580
        %v2625 = vmul.f32 %v2545, %v2582
        %v2626 = vmul.f32 %v2546, %v2584
        %v2627 = vmul.f32 %v2547, %v2586
        %v2628 = vmul.f32 %v2548, %v2588
        %v2629 = vmul.f32 %v2549, %v2590
        %v2630 = vmul.f32 %v2550, %v2592
        %v2631 = vmul.f32 %v2551, %v2594
        %v2632 = vmul.f32 %v2552, %v2596
        %v2633 = vmul.f32 %v2553, %v2598
        %v2634 = vmul.f32 %v2554, %v2600
        %v2635 = vmul.f32 %v2555, %v2602
        %v2636 = vmul.f32 %v2556, %v2604
        %v2637 = vmul.f32 %v2350, %v1514
        %v2638 = vmul.f32 %v2352, %v1515
        %v2639 = vmul.f32 %v2354, %v1516
        %v2640 = vmul.f32 %v2356, %v1517
        %v2641 = vmul.f32 %v2358, %v1518
        %v2642 = vmul.f32 %v2360, %v1519
        %v2643 = vmul.f32 %v2362, %v1520
        %v2644 = vmul.f32 %v2364, %v1521
        %v2645 = vmul.f32 %v2366, %v1522
        %v2646 = vmul.f32 %v2368, %v1523
        %v2647 = vmul.f32 %v2370, %v1524
        %v2648 = vmul.f32 %v2372, %v1525
        %v2649 = vmul.f32 %v2374, %v1526
        %v2650 = vmul.f32 %v2376, %v1527
        %v2651 = vmul.f32 %v2378, %v1528
        %v2652 = vmul.f32 %v2380, %v1529
        %v2653 = vadd.f32 %v2621, %v2637
        %v2654 = vadd.f32 %v2622, %v2638
        %v2655 = vadd.f32 %v2623, %v2639
        %v2656 = vadd.f32 %v2624, %v2640
        %v2657 = vadd.f32 %v2625, %v2641
        %v2658 = vadd.f32 %v2626, %v2642
        %v2659 = vadd.f32 %v2627, %v2643
        %v2660 = vadd.f32 %v2628, %v2644
        %v2661 = vadd.f32 %v2629, %v2645
        %v2662 = vadd.f32 %v2630, %v2646
        %v2663 = vadd.f32 %v2631, %v2647
        %v2664 = vadd.f32 %v2632, %v2648
        %v2665 = vadd.f32 %v2633, %v2649
        %v2666 = vadd.f32 %v2634, %v2650
        %v2667 = vadd.f32 %v2635, %v2651
        %v2668 = vadd.f32 %v2636, %v2652
        %2685 = vrot.lane.b32.xlu0 %v2653, 96
        %v2686 = vpop.permute.xlu0 %2685
        %2687 = vrot.lane.b32.xlu0 %v2654, 96
        %v2688 = vpop.permute.xlu0 %2687
        %2689 = vrot.lane.b32.xlu0 %v2655, 96
        %v2690 = vpop.permute.xlu0 %2689
        %2691 = vrot.lane.b32.xlu0 %v2656, 96
        %v2692 = vpop.permute.xlu0 %2691
        %2693 = vrot.lane.b32.xlu0 %v2657, 96
        %v2694 = vpop.permute.xlu0 %2693
        %2695 = vrot.lane.b32.xlu0 %v2658, 96
        %v2696 = vpop.permute.xlu0 %2695
        %2697 = vrot.lane.b32.xlu0 %v2659, 96
        %v2698 = vpop.permute.xlu0 %2697
        %2699 = vrot.lane.b32.xlu0 %v2660, 96
        %v2700 = vpop.permute.xlu0 %2699
        %2701 = vrot.lane.b32.xlu0 %v2661, 96
        %v2702 = vpop.permute.xlu0 %2701
        %2703 = vrot.lane.b32.xlu0 %v2662, 96
        %v2704 = vpop.permute.xlu0 %2703
        %2705 = vrot.lane.b32.xlu0 %v2663, 96
        %v2706 = vpop.permute.xlu0 %2705
        %2707 = vrot.lane.b32.xlu0 %v2664, 96
        %v2708 = vpop.permute.xlu0 %2707
        %2709 = vrot.lane.b32.xlu0 %v2665, 96
        %v2710 = vpop.permute.xlu0 %2709
        %2711 = vrot.lane.b32.xlu0 %v2666, 96
        %v2712 = vpop.permute.xlu0 %2711
        %2713 = vrot.lane.b32.xlu0 %v2667, 96
        %v2714 = vpop.permute.xlu0 %2713
        %2715 = vrot.lane.b32.xlu0 %v2668, 96
        %v2716 = vpop.permute.xlu0 %2715
        %v2717 = vsel %vm336, %v2686, 0
        %v2719 = vsel %vm336, %v2688, 0
        %v2721 = vsel %vm336, %v2690, 0
        %v2723 = vsel %vm336, %v2692, 0
        %v2725 = vsel %vm336, %v2694, 0
        %v2727 = vsel %vm336, %v2696, 0
        %v2729 = vsel %vm336, %v2698, 0
        %v2731 = vsel %vm336, %v2700, 0
        %v2733 = vsel %vm336, %v2702, 0
        %v2735 = vsel %vm336, %v2704, 0
        %v2737 = vsel %vm336, %v2706, 0
        %v2739 = vsel %vm336, %v2708, 0
        %v2741 = vsel %vm336, %v2710, 0
        %v2743 = vsel %vm336, %v2712, 0
        %v2745 = vsel %vm336, %v2714, 0
        %v2747 = vsel %vm336, %v2716, 0
        %2749 = vmatprep.subr.mxu0 %v296
        %2750 = vmatpush1.msra.mxu0 %v295
        %2751 = vmatprep.subr.mxu0 %v298
        %2752 = vmatpush1.msra.mxu0 %v297
        %2753 = vmatprep.subr.mxu0 %v300
        %2754 = vmatpush1.msra.mxu0 %v299
        %2755 = vmatprep.subr.mxu0 %v302
        %2756 = vmatpush1.msra.mxu0 %v301
        %2757 = vmatprep.subr.mxu0 0.0
        %2758 = vmatpush1.msra.mxu0 0.0
        %2759 = vmatprep.subr.mxu0 0.0
        %2760 = vmatpush1.msra.mxu0 0.0
        %2761 = vmatprep.subr.mxu0 0.0
        %2762 = vmatpush1.msra.mxu0 0.0
        %2763 = vmatprep.subr.mxu0 0.0
        %2764 = vmatpush1.msra.mxu0 0.0
        %2765 = vmatprep.subr.mxu0 0.0
        %2766 = vmatpush1.msra.mxu0 0.0
        %2767 = vmatprep.subr.mxu0 0.0
        %2768 = vmatpush1.msra.mxu0 0.0
        %2769 = vmatprep.subr.mxu0 0.0
        %2770 = vmatpush1.msra.mxu0 0.0
        %2771 = vmatprep.subr.mxu0 0.0
        %2772 = vmatpush1.msra.mxu0 0.0
        %2773 = vmatprep.subr.mxu0 0.0
        %2774 = vmatpush1.msra.mxu0 0.0
        %2775 = vmatprep.subr.mxu0 0.0
        %2776 = vmatpush1.msra.mxu0 0.0
        %2777 = vmatprep.subr.mxu0 0.0
        %2778 = vmatpush1.msra.mxu0 0.0
        %2779 = vmatprep.subr.mxu0 0.0
        %2780 = vmatpush1.msra.mxu0 0.0
        %2781 = vmatprep.subr.mxu0 0.0
        %2782 = vmatpush1.msra.mxu0 0.0
        %2783 = vmatprep.subr.mxu0 0.0
        %2784 = vmatpush1.msra.mxu0 0.0
        %2785 = vmatprep.subr.mxu0 0.0
        %2786 = vmatpush1.msra.mxu0 0.0
        %2787 = vmatprep.subr.mxu0 0.0
        %2788 = vmatpush1.msra.mxu0 0.0
        %2789 = vmatprep.subr.mxu0 0.0
        %2790 = vmatpush1.msra.mxu0 0.0
        %2791 = vmatprep.subr.mxu0 0.0
        %2792 = vmatpush1.msra.mxu0 0.0
        %2793 = vmatprep.subr.mxu0 0.0
        %2794 = vmatpush1.msra.mxu0 0.0
        %2795 = vmatprep.subr.mxu0 0.0
        %2796 = vmatpush1.msra.mxu0 0.0
        %2797 = vmatprep.subr.mxu0 0.0
        %2798 = vmatpush1.msra.mxu0 0.0
        %2799 = vmatprep.subr.mxu0 0.0
        %2800 = vmatpush1.msra.mxu0 0.0
        %2801 = vmatprep.subr.mxu0 0.0
        %2802 = vmatpush1.msra.mxu0 0.0
        %2803 = vmatprep.subr.mxu0 0.0
        %2804 = vmatpush1.msra.mxu0 0.0
        %2805 = vmatprep.subr.mxu0 0.0
        %2806 = vmatpush1.msra.mxu0 0.0
        %2807 = vmatprep.subr.mxu0 0.0
        %2808 = vmatpush1.msra.mxu0 0.0
        %2809 = vmatprep.subr.mxu0 0.0
        %2810 = vmatpush1.msra.mxu0 0.0
        %2811 = vmatprep.subr.mxu0 0.0
        %2812 = vmatpush1.msra.mxu0 0.0
        %2813 = vmatprep.mubr.f32.mxu0 0.0
        %2814 = vmatmul.mubr.f32.gmra.mrb[0].mxu0 %v2717
        %v2815 = vpop.f32.mrb[0].mxu0
        %v2816 = vadd.f32 %v329, %v2815
        %v2817 = vpop.f32.mrb[0].mxu0
        %v2818 = vadd.f32 %v333, %v2817
        %2819 = vmatprep.mubr.f32.mxu0 0.0
        %2820 = vmatmul.mubr.f32.gmra.mrb[0].mxu0 %v2719
        %v2821 = vpop.f32.mrb[0].mxu0
        %v2822 = vadd.f32 %v329, %v2821
        %v2823 = vpop.f32.mrb[0].mxu0
        %v2824 = vadd.f32 %v333, %v2823
        %2825 = vmatprep.mubr.f32.mxu0 0.0
        %2826 = vmatmul.mubr.f32.gmra.mrb[0].mxu0 %v2721
        %v2827 = vpop.f32.mrb[0].mxu0
        %v2828 = vadd.f32 %v329, %v2827
        %v2829 = vpop.f32.mrb[0].mxu0
        %v2830 = vadd.f32 %v333, %v2829
        %2831 = vmatprep.mubr.f32.mxu0 0.0
        %2832 = vmatmul.mubr.f32.gmra.mrb[0].mxu0 %v2723
        %v2833 = vpop.f32.mrb[0].mxu0
        %v2834 = vadd.f32 %v329, %v2833
        %v2835 = vpop.f32.mrb[0].mxu0
        %v2836 = vadd.f32 %v333, %v2835
        %2837 = vmatprep.mubr.f32.mxu0 0.0
        %2838 = vmatmul.mubr.f32.gmra.mrb[0].mxu0 %v2725
        %v2839 = vpop.f32.mrb[0].mxu0
        %v2840 = vadd.f32 %v329, %v2839
        %v2841 = vpop.f32.mrb[0].mxu0
        %v2842 = vadd.f32 %v333, %v2841
        %2843 = vmatprep.mubr.f32.mxu0 0.0
        %2844 = vmatmul.mubr.f32.gmra.mrb[0].mxu0 %v2727
        %v2845 = vpop.f32.mrb[0].mxu0
        %v2846 = vadd.f32 %v329, %v2845
        %v2847 = vpop.f32.mrb[0].mxu0
        %v2848 = vadd.f32 %v333, %v2847
        %2849 = vmatprep.mubr.f32.mxu0 0.0
        %2850 = vmatmul.mubr.f32.gmra.mrb[0].mxu0 %v2729
        %v2851 = vpop.f32.mrb[0].mxu0
        %v2852 = vadd.f32 %v329, %v2851
        %v2853 = vpop.f32.mrb[0].mxu0
        %v2854 = vadd.f32 %v333, %v2853
        %2855 = vmatprep.mubr.f32.mxu0 0.0
        %2856 = vmatmul.mubr.f32.gmra.mrb[0].mxu0 %v2731
        %v2857 = vpop.f32.mrb[0].mxu0
        %v2858 = vadd.f32 %v329, %v2857
        %v2859 = vpop.f32.mrb[0].mxu0
        %v2860 = vadd.f32 %v333, %v2859
        %2861 = vmatprep.mubr.f32.mxu0 0.0
        %2862 = vmatmul.mubr.f32.gmra.mrb[0].mxu0 %v2733
        %v2863 = vpop.f32.mrb[0].mxu0
        %v2864 = vadd.f32 %v329, %v2863
        %v2865 = vpop.f32.mrb[0].mxu0
        %v2866 = vadd.f32 %v333, %v2865
        %2867 = vmatprep.mubr.f32.mxu0 0.0
        %2868 = vmatmul.mubr.f32.gmra.mrb[0].mxu0 %v2735
        %v2869 = vpop.f32.mrb[0].mxu0
        %v2870 = vadd.f32 %v329, %v2869
        %v2871 = vpop.f32.mrb[0].mxu0
        %v2872 = vadd.f32 %v333, %v2871
        %2873 = vmatprep.mubr.f32.mxu0 0.0
        %2874 = vmatmul.mubr.f32.gmra.mrb[0].mxu0 %v2737
        %v2875 = vpop.f32.mrb[0].mxu0
        %v2876 = vadd.f32 %v329, %v2875
        %v2877 = vpop.f32.mrb[0].mxu0
        %v2878 = vadd.f32 %v333, %v2877
        %2879 = vmatprep.mubr.f32.mxu0 0.0
        %2880 = vmatmul.mubr.f32.gmra.mrb[0].mxu0 %v2739
        %v2881 = vpop.f32.mrb[0].mxu0
        %v2882 = vadd.f32 %v329, %v2881
        %v2883 = vpop.f32.mrb[0].mxu0
        %v2884 = vadd.f32 %v333, %v2883
        %2885 = vmatprep.mubr.f32.mxu0 0.0
        %2886 = vmatmul.mubr.f32.gmra.mrb[0].mxu0 %v2741
        %v2887 = vpop.f32.mrb[0].mxu0
        %v2888 = vadd.f32 %v329, %v2887
        %v2889 = vpop.f32.mrb[0].mxu0
        %v2890 = vadd.f32 %v333, %v2889
        %2891 = vmatprep.mubr.f32.mxu0 0.0
        %2892 = vmatmul.mubr.f32.gmra.mrb[0].mxu0 %v2743
        %v2893 = vpop.f32.mrb[0].mxu0
        %v2894 = vadd.f32 %v329, %v2893
        %v2895 = vpop.f32.mrb[0].mxu0
        %v2896 = vadd.f32 %v333, %v2895
        %2897 = vmatprep.mubr.f32.mxu0 0.0
        %2898 = vmatmul.mubr.f32.gmra.mrb[0].mxu0 %v2745
        %v2899 = vpop.f32.mrb[0].mxu0
        %v2900 = vadd.f32 %v329, %v2899
        %v2901 = vpop.f32.mrb[0].mxu0
        %v2902 = vadd.f32 %v333, %v2901
        %2903 = vmatprep.mubr.f32.mxu0 0.0
        %2904 = vmatmul.mubr.f32.gmra.mrb[0].mxu0 %v2747
        %v2905 = vpop.f32.mrb[0].mxu0
        %v2906 = vadd.f32 %v329, %v2905
        %v2907 = vpop.f32.mrb[0].mxu0
        %v2908 = vadd.f32 %v333, %v2907
        %2909 = vdwg.mxu0
        %2926 = vrot.lane.b32.xlu0 %v2818, 96
        %v2927 = vpop.permute.xlu0 %2926
        %2928 = vrot.lane.b32.xlu0 %v2824, 96
        %v2929 = vpop.permute.xlu0 %2928
        %2930 = vrot.lane.b32.xlu0 %v2830, 96
        %v2931 = vpop.permute.xlu0 %2930
        %2932 = vrot.lane.b32.xlu0 %v2836, 96
        %v2933 = vpop.permute.xlu0 %2932
        %2934 = vrot.lane.b32.xlu0 %v2842, 96
        %v2935 = vpop.permute.xlu0 %2934
        %2936 = vrot.lane.b32.xlu0 %v2848, 96
        %v2937 = vpop.permute.xlu0 %2936
        %2938 = vrot.lane.b32.xlu0 %v2854, 96
        %v2939 = vpop.permute.xlu0 %2938
        %2940 = vrot.lane.b32.xlu0 %v2860, 96
        %v2941 = vpop.permute.xlu0 %2940
        %2942 = vrot.lane.b32.xlu0 %v2866, 96
        %v2943 = vpop.permute.xlu0 %2942
        %2944 = vrot.lane.b32.xlu0 %v2872, 96
        %v2945 = vpop.permute.xlu0 %2944
        %2946 = vrot.lane.b32.xlu0 %v2878, 96
        %v2947 = vpop.permute.xlu0 %2946
        %2948 = vrot.lane.b32.xlu0 %v2884, 96
        %v2949 = vpop.permute.xlu0 %2948
        %2950 = vrot.lane.b32.xlu0 %v2890, 96
        %v2951 = vpop.permute.xlu0 %2950
        %2952 = vrot.lane.b32.xlu0 %v2896, 96
        %v2953 = vpop.permute.xlu0 %2952
        %2954 = vrot.lane.b32.xlu0 %v2902, 96
        %v2955 = vpop.permute.xlu0 %2954
        %2956 = vrot.lane.b32.xlu0 %v2908, 96
        %v2957 = vpop.permute.xlu0 %2956
        %2974 = vrot.lane.b32.xlu0 %v2816, 32
        %v2975 = vpop.permute.xlu0 %2974
        %2976 = vrot.lane.b32.xlu0 %v2822, 32
        %v2977 = vpop.permute.xlu0 %2976
        %2978 = vrot.lane.b32.xlu0 %v2828, 32
        %v2979 = vpop.permute.xlu0 %2978
        %2980 = vrot.lane.b32.xlu0 %v2834, 32
        %v2981 = vpop.permute.xlu0 %2980
        %2982 = vrot.lane.b32.xlu0 %v2840, 32
        %v2983 = vpop.permute.xlu0 %2982
        %2984 = vrot.lane.b32.xlu0 %v2846, 32
        %v2985 = vpop.permute.xlu0 %2984
        %2986 = vrot.lane.b32.xlu0 %v2852, 32
        %v2987 = vpop.permute.xlu0 %2986
        %2988 = vrot.lane.b32.xlu0 %v2858, 32
        %v2989 = vpop.permute.xlu0 %2988
        %2990 = vrot.lane.b32.xlu0 %v2864, 32
        %v2991 = vpop.permute.xlu0 %2990
        %2992 = vrot.lane.b32.xlu0 %v2870, 32
        %v2993 = vpop.permute.xlu0 %2992
        %2994 = vrot.lane.b32.xlu0 %v2876, 32
        %v2995 = vpop.permute.xlu0 %2994
        %2996 = vrot.lane.b32.xlu0 %v2882, 32
        %v2997 = vpop.permute.xlu0 %2996
        %2998 = vrot.lane.b32.xlu0 %v2888, 32
        %v2999 = vpop.permute.xlu0 %2998
        %3000 = vrot.lane.b32.xlu0 %v2894, 32
        %v3001 = vpop.permute.xlu0 %3000
        %3002 = vrot.lane.b32.xlu0 %v2900, 32
        %v3003 = vpop.permute.xlu0 %3002
        %3004 = vrot.lane.b32.xlu0 %v2906, 32
        %v3005 = vpop.permute.xlu0 %3004
        %3006 = vrot.lane.b32.xlu0 %v2927, 32
        %v3007 = vpop.permute.xlu0 %3006
        %3008 = vrot.lane.b32.xlu0 %v2929, 32
        %v3009 = vpop.permute.xlu0 %3008
        %3010 = vrot.lane.b32.xlu0 %v2931, 32
        %v3011 = vpop.permute.xlu0 %3010
        %3012 = vrot.lane.b32.xlu0 %v2933, 32
        %v3013 = vpop.permute.xlu0 %3012
        %3014 = vrot.lane.b32.xlu0 %v2935, 32
        %v3015 = vpop.permute.xlu0 %3014
        %3016 = vrot.lane.b32.xlu0 %v2937, 32
        %v3017 = vpop.permute.xlu0 %3016
        %3018 = vrot.lane.b32.xlu0 %v2939, 32
        %v3019 = vpop.permute.xlu0 %3018
        %3020 = vrot.lane.b32.xlu0 %v2941, 32
        %v3021 = vpop.permute.xlu0 %3020
        %3022 = vrot.lane.b32.xlu0 %v2943, 32
        %v3023 = vpop.permute.xlu0 %3022
        %3024 = vrot.lane.b32.xlu0 %v2945, 32
        %v3025 = vpop.permute.xlu0 %3024
        %3026 = vrot.lane.b32.xlu0 %v2947, 32
        %v3027 = vpop.permute.xlu0 %3026
        %3028 = vrot.lane.b32.xlu0 %v2949, 32
        %v3029 = vpop.permute.xlu0 %3028
        %3030 = vrot.lane.b32.xlu0 %v2951, 32
        %v3031 = vpop.permute.xlu0 %3030
        %3032 = vrot.lane.b32.xlu0 %v2953, 32
        %v3033 = vpop.permute.xlu0 %3032
        %3034 = vrot.lane.b32.xlu0 %v2955, 32
        %v3035 = vpop.permute.xlu0 %3034
        %3036 = vrot.lane.b32.xlu0 %v2957, 32
        %v3037 = vpop.permute.xlu0 %3036
        %3070 = vmatprep.subr.mxu0 0.0
        %3071 = vmatpush1.msra.mxu0 %v2975
        %3072 = vmatprep.subr.mxu0 0.0
        %3073 = vmatpush1.msra.mxu0 %v2977
        %3074 = vmatprep.subr.mxu0 0.0
        %3075 = vmatpush1.msra.mxu0 %v2979
        %3076 = vmatprep.subr.mxu0 0.0
        %3077 = vmatpush1.msra.mxu0 %v2981
        %3078 = vmatprep.subr.mxu0 0.0
        %3079 = vmatpush1.msra.mxu0 %v2983
        %3080 = vmatprep.subr.mxu0 0.0
        %3081 = vmatpush1.msra.mxu0 %v2985
        %3082 = vmatprep.subr.mxu0 0.0
        %3083 = vmatpush1.msra.mxu0 %v2987
        %3084 = vmatprep.subr.mxu0 0.0
        %3085 = vmatpush1.msra.mxu0 %v2989
        %3086 = vmatprep.subr.mxu0 0.0
        %3087 = vmatpush1.msra.mxu0 %v2991
        %3088 = vmatprep.subr.mxu0 0.0
        %3089 = vmatpush1.msra.mxu0 %v2993
        %3090 = vmatprep.subr.mxu0 0.0
        %3091 = vmatpush1.msra.mxu0 %v2995
        %3092 = vmatprep.subr.mxu0 0.0
        %3093 = vmatpush1.msra.mxu0 %v2997
        %3094 = vmatprep.subr.mxu0 0.0
        %3095 = vmatpush1.msra.mxu0 %v2999
        %3096 = vmatprep.subr.mxu0 0.0
        %3097 = vmatpush1.msra.mxu0 %v3001
        %3098 = vmatprep.subr.mxu0 0.0
        %3099 = vmatpush1.msra.mxu0 %v3003
        %3100 = vmatprep.subr.mxu0 0.0
        %3101 = vmatpush1.msra.mxu0 %v3005
        %3102 = vmatprep.subr.mxu0 0.0
        %3103 = vmatpush1.msra.mxu0 %v3007
        %3104 = vmatprep.subr.mxu0 0.0
        %3105 = vmatpush1.msra.mxu0 %v3009
        %3106 = vmatprep.subr.mxu0 0.0
        %3107 = vmatpush1.msra.mxu0 %v3011
        %3108 = vmatprep.subr.mxu0 0.0
        %3109 = vmatpush1.msra.mxu0 %v3013
        %3110 = vmatprep.subr.mxu0 0.0
        %3111 = vmatpush1.msra.mxu0 %v3015
        %3112 = vmatprep.subr.mxu0 0.0
        %3113 = vmatpush1.msra.mxu0 %v3017
        %3114 = vmatprep.subr.mxu0 0.0
        %3115 = vmatpush1.msra.mxu0 %v3019
        %3116 = vmatprep.subr.mxu0 0.0
        %3117 = vmatpush1.msra.mxu0 %v3021
        %3118 = vmatprep.subr.mxu0 0.0
        %3119 = vmatpush1.msra.mxu0 %v3023
        %3120 = vmatprep.subr.mxu0 0.0
        %3121 = vmatpush1.msra.mxu0 %v3025
        %3122 = vmatprep.subr.mxu0 0.0
        %3123 = vmatpush1.msra.mxu0 %v3027
        %3124 = vmatprep.subr.mxu0 0.0
        %3125 = vmatpush1.msra.mxu0 %v3029
        %3126 = vmatprep.subr.mxu0 0.0
        %3127 = vmatpush1.msra.mxu0 %v3031
        %3128 = vmatprep.subr.mxu0 0.0
        %3129 = vmatpush1.msra.mxu0 %v3033
        %3130 = vmatprep.subr.mxu0 0.0
        %3131 = vmatpush1.msra.mxu0 %v3035
        %3132 = vmatprep.subr.mxu0 0.0
        %3133 = vmatpush1.msra.mxu0 %v3037
        %3134 = vmatprep.mubr.f32.mxu0 %v595
        %3135 = vmatmul.mubr.f32.gmra.mrb[0].mxu0 %v594
        %v3136 = vpop.f32.mrb[0].mxu0
        %v3137 = vadd.f32 0.0, %v3136
        %v3138 = vpop.f32.mrb[0].mxu0
        %3139 = vmatprep.mubr.f32.mxu0 %v597
        %3140 = vmatmul.mubr.f32.gmra.mrb[0].mxu0 %v596
        %v3141 = vpop.f32.mrb[0].mxu0
        %v3142 = vadd.f32 0.0, %v3141
        %v3143 = vpop.f32.mrb[0].mxu0
        %3144 = vmatprep.mubr.f32.mxu0 %v599
        %3145 = vmatmul.mubr.f32.gmra.mrb[0].mxu0 %v598
        %v3146 = vpop.f32.mrb[0].mxu0
        %v3147 = vadd.f32 0.0, %v3146
        %v3148 = vpop.f32.mrb[0].mxu0
        %3149 = vmatprep.mubr.f32.mxu0 %v601
        %3150 = vmatmul.mubr.f32.gmra.mrb[0].mxu0 %v600
        %v3151 = vpop.f32.mrb[0].mxu0
        %v3152 = vadd.f32 0.0, %v3151
        %v3153 = vpop.f32.mrb[0].mxu0
        %3154 = vmatprep.mubr.f32.mxu0 %v603
        %3155 = vmatmul.mubr.f32.gmra.mrb[0].mxu0 %v602
        %v3156 = vpop.f32.mrb[0].mxu0
        %v3157 = vadd.f32 0.0, %v3156
        %v3158 = vpop.f32.mrb[0].mxu0
        %3159 = vmatprep.mubr.f32.mxu0 %v605
        %3160 = vmatmul.mubr.f32.gmra.mrb[0].mxu0 %v604
        %v3161 = vpop.f32.mrb[0].mxu0
        %v3162 = vadd.f32 0.0, %v3161
        %v3163 = vpop.f32.mrb[0].mxu0
        %3164 = vmatprep.mubr.f32.mxu0 %v607
        %3165 = vmatmul.mubr.f32.gmra.mrb[0].mxu0 %v606
        %v3166 = vpop.f32.mrb[0].mxu0
        %v3167 = vadd.f32 0.0, %v3166
        %v3168 = vpop.f32.mrb[0].mxu0
        %3169 = vmatprep.mubr.f32.mxu0 %v609
        %3170 = vmatmul.mubr.f32.gmra.mrb[0].mxu0 %v608
        %v3171 = vpop.f32.mrb[0].mxu0
        %v3172 = vadd.f32 0.0, %v3171
        %v3173 = vpop.f32.mrb[0].mxu0
        %3174 = vmatprep.mubr.f32.mxu0 %v611
        %3175 = vmatmul.mubr.f32.gmra.mrb[0].mxu0 %v610
        %v3176 = vpop.f32.mrb[0].mxu0
        %v3177 = vadd.f32 0.0, %v3176
        %v3178 = vpop.f32.mrb[0].mxu0
        %3179 = vmatprep.mubr.f32.mxu0 %v613
        %3180 = vmatmul.mubr.f32.gmra.mrb[0].mxu0 %v612
        %v3181 = vpop.f32.mrb[0].mxu0
        %v3182 = vadd.f32 0.0, %v3181
        %v3183 = vpop.f32.mrb[0].mxu0
        %3184 = vmatprep.mubr.f32.mxu0 %v615
        %3185 = vmatmul.mubr.f32.gmra.mrb[0].mxu0 %v614
        %v3186 = vpop.f32.mrb[0].mxu0
        %v3187 = vadd.f32 0.0, %v3186
        %v3188 = vpop.f32.mrb[0].mxu0
        %3189 = vmatprep.mubr.f32.mxu0 %v617
        %3190 = vmatmul.mubr.f32.gmra.mrb[0].mxu0 %v616
        %v3191 = vpop.f32.mrb[0].mxu0
        %v3192 = vadd.f32 0.0, %v3191
        %v3193 = vpop.f32.mrb[0].mxu0
        %3194 = vmatprep.mubr.f32.mxu0 %v619
        %3195 = vmatmul.mubr.f32.gmra.mrb[0].mxu0 %v618
        %v3196 = vpop.f32.mrb[0].mxu0
        %v3197 = vadd.f32 0.0, %v3196
        %v3198 = vpop.f32.mrb[0].mxu0
        %3199 = vmatprep.mubr.f32.mxu0 %v621
        %3200 = vmatmul.mubr.f32.gmra.mrb[0].mxu0 %v620
        %v3201 = vpop.f32.mrb[0].mxu0
        %v3202 = vadd.f32 0.0, %v3201
        %v3203 = vpop.f32.mrb[0].mxu0
        %3204 = vmatprep.mubr.f32.mxu0 %v623
        %3205 = vmatmul.mubr.f32.gmra.mrb[0].mxu0 %v622
        %v3206 = vpop.f32.mrb[0].mxu0
        %v3207 = vadd.f32 0.0, %v3206
        %v3208 = vpop.f32.mrb[0].mxu0
        %3209 = vmatprep.mubr.f32.mxu0 %v625
        %3210 = vmatmul.mubr.f32.gmra.mrb[0].mxu0 %v624
        %v3211 = vpop.f32.mrb[0].mxu0
        %v3212 = vadd.f32 0.0, %v3211
        %v3213 = vpop.f32.mrb[0].mxu0
        %3214 = vdwg.mxu0
        %v3216 = vsel %vm336, %v3137, 0
        %v3219 = vsel %vm336, %v3142, 0
        %v3222 = vsel %vm336, %v3147, 0
        %v3225 = vsel %vm336, %v3152, 0
        %v3228 = vsel %vm336, %v3157, 0
        %v3231 = vsel %vm336, %v3162, 0
        %v3234 = vsel %vm336, %v3167, 0
        %v3237 = vsel %vm336, %v3172, 0
        %v3240 = vsel %vm336, %v3177, 0
        %v3243 = vsel %vm336, %v3182, 0
        %v3246 = vsel %vm336, %v3187, 0
        %v3249 = vsel %vm336, %v3192, 0
        %v3252 = vsel %vm336, %v3197, 0
        %v3255 = vsel %vm336, %v3202, 0
        %v3258 = vsel %vm336, %v3207, 0
        %v3261 = vsel %vm336, %v3212, 0
        %3263 = vmatprep.subr.mxu0 0.0
        %3264 = vmatpush1.msra.mxu0 %v304
        %3265 = vmatprep.subr.mxu0 0.0
        %3266 = vmatpush1.msra.mxu0 %v305
        %3267 = vmatprep.subr.mxu0 0.0
        %3268 = vmatpush1.msra.mxu0 %v306
        %3269 = vmatprep.subr.mxu0 0.0
        %3270 = vmatpush1.msra.mxu0 %v307
        %3271 = vmatprep.subr.mxu0 0.0
        %3272 = vmatpush1.msra.mxu0 0.0
        %3273 = vmatprep.subr.mxu0 0.0
        %3274 = vmatpush1.msra.mxu0 0.0
        %3275 = vmatprep.subr.mxu0 0.0
        %3276 = vmatpush1.msra.mxu0 0.0
        %3277 = vmatprep.subr.mxu0 0.0
        %3278 = vmatpush1.msra.mxu0 0.0
        %3279 = vmatprep.subr.mxu0 0.0
        %3280 = vmatpush1.msra.mxu0 0.0
        %3281 = vmatprep.subr.mxu0 0.0
        %3282 = vmatpush1.msra.mxu0 0.0
        %3283 = vmatprep.subr.mxu0 0.0
        %3284 = vmatpush1.msra.mxu0 0.0
        %3285 = vmatprep.subr.mxu0 0.0
        %3286 = vmatpush1.msra.mxu0 0.0
        %3287 = vmatprep.subr.mxu0 0.0
        %3288 = vmatpush1.msra.mxu0 0.0
        %3289 = vmatprep.subr.mxu0 0.0
        %3290 = vmatpush1.msra.mxu0 0.0
        %3291 = vmatprep.subr.mxu0 0.0
        %3292 = vmatpush1.msra.mxu0 0.0
        %3293 = vmatprep.subr.mxu0 0.0
        %3294 = vmatpush1.msra.mxu0 0.0
        %3295 = vmatprep.subr.mxu0 0.0
        %3296 = vmatpush1.msra.mxu0 0.0
        %3297 = vmatprep.subr.mxu0 0.0
        %3298 = vmatpush1.msra.mxu0 0.0
        %3299 = vmatprep.subr.mxu0 0.0
        %3300 = vmatpush1.msra.mxu0 0.0
        %3301 = vmatprep.subr.mxu0 0.0
        %3302 = vmatpush1.msra.mxu0 0.0
        %3303 = vmatprep.subr.mxu0 0.0
        %3304 = vmatpush1.msra.mxu0 0.0
        %3305 = vmatprep.subr.mxu0 0.0
        %3306 = vmatpush1.msra.mxu0 0.0
        %3307 = vmatprep.subr.mxu0 0.0
        %3308 = vmatpush1.msra.mxu0 0.0
        %3309 = vmatprep.subr.mxu0 0.0
        %3310 = vmatpush1.msra.mxu0 0.0
        %3311 = vmatprep.subr.mxu0 0.0
        %3312 = vmatpush1.msra.mxu0 0.0
        %3313 = vmatprep.subr.mxu0 0.0
        %3314 = vmatpush1.msra.mxu0 0.0
        %3315 = vmatprep.subr.mxu0 0.0
        %3316 = vmatpush1.msra.mxu0 0.0
        %3317 = vmatprep.subr.mxu0 0.0
        %3318 = vmatpush1.msra.mxu0 0.0
        %3319 = vmatprep.subr.mxu0 0.0
        %3320 = vmatpush1.msra.mxu0 0.0
        %3321 = vmatprep.subr.mxu0 0.0
        %3322 = vmatpush1.msra.mxu0 0.0
        %3323 = vmatprep.subr.mxu0 0.0
        %3324 = vmatpush1.msra.mxu0 0.0
        %3325 = vmatprep.subr.mxu0 0.0
        %3326 = vmatpush1.msra.mxu0 0.0
        %3327 = vmatprep.mubr.f32.mxu0 0.0
        %3328 = vmatmul.mubr.f32.gmra.mrb[0].mxu0 %v3216
        %v3329 = vpop.f32.mrb[0].mxu0
        %v3330 = vadd.f32 %v887, %v3329
        %v3331 = vpop.f32.mrb[0].mxu0
        %3332 = vmatprep.mubr.f32.mxu0 0.0
        %3333 = vmatmul.mubr.f32.gmra.mrb[0].mxu0 %v3219
        %v3334 = vpop.f32.mrb[0].mxu0
        %v3335 = vadd.f32 %v887, %v3334
        %v3336 = vpop.f32.mrb[0].mxu0
        %3337 = vmatprep.mubr.f32.mxu0 0.0
        %3338 = vmatmul.mubr.f32.gmra.mrb[0].mxu0 %v3222
        %v3339 = vpop.f32.mrb[0].mxu0
        %v3340 = vadd.f32 %v887, %v3339
        %v3341 = vpop.f32.mrb[0].mxu0
        %3342 = vmatprep.mubr.f32.mxu0 0.0
        %3343 = vmatmul.mubr.f32.gmra.mrb[0].mxu0 %v3225
        %v3344 = vpop.f32.mrb[0].mxu0
        %v3345 = vadd.f32 %v887, %v3344
        %v3346 = vpop.f32.mrb[0].mxu0
        %3347 = vmatprep.mubr.f32.mxu0 0.0
        %3348 = vmatmul.mubr.f32.gmra.mrb[0].mxu0 %v3228
        %v3349 = vpop.f32.mrb[0].mxu0
        %v3350 = vadd.f32 %v887, %v3349
        %v3351 = vpop.f32.mrb[0].mxu0
        %3352 = vmatprep.mubr.f32.mxu0 0.0
        %3353 = vmatmul.mubr.f32.gmra.mrb[0].mxu0 %v3231
        %v3354 = vpop.f32.mrb[0].mxu0
        %v3355 = vadd.f32 %v887, %v3354
        %v3356 = vpop.f32.mrb[0].mxu0
        %3357 = vmatprep.mubr.f32.mxu0 0.0
        %3358 = vmatmul.mubr.f32.gmra.mrb[0].mxu0 %v3234
        %v3359 = vpop.f32.mrb[0].mxu0
        %v3360 = vadd.f32 %v887, %v3359
        %v3361 = vpop.f32.mrb[0].mxu0
        %3362 = vmatprep.mubr.f32.mxu0 0.0
        %3363 = vmatmul.mubr.f32.gmra.mrb[0].mxu0 %v3237
        %v3364 = vpop.f32.mrb[0].mxu0
        %v3365 = vadd.f32 %v887, %v3364
        %v3366 = vpop.f32.mrb[0].mxu0
        %3367 = vmatprep.mubr.f32.mxu0 0.0
        %3368 = vmatmul.mubr.f32.gmra.mrb[0].mxu0 %v3240
        %v3369 = vpop.f32.mrb[0].mxu0
        %v3370 = vadd.f32 %v887, %v3369
        %v3371 = vpop.f32.mrb[0].mxu0
        %3372 = vmatprep.mubr.f32.mxu0 0.0
        %3373 = vmatmul.mubr.f32.gmra.mrb[0].mxu0 %v3243
        %v3374 = vpop.f32.mrb[0].mxu0
        %v3375 = vadd.f32 %v887, %v3374
        %v3376 = vpop.f32.mrb[0].mxu0
        %3377 = vmatprep.mubr.f32.mxu0 0.0
        %3378 = vmatmul.mubr.f32.gmra.mrb[0].mxu0 %v3246
        %v3379 = vpop.f32.mrb[0].mxu0
        %v3380 = vadd.f32 %v887, %v3379
        %v3381 = vpop.f32.mrb[0].mxu0
        %3382 = vmatprep.mubr.f32.mxu0 0.0
        %3383 = vmatmul.mubr.f32.gmra.mrb[0].mxu0 %v3249
        %v3384 = vpop.f32.mrb[0].mxu0
        %v3385 = vadd.f32 %v887, %v3384
        %v3386 = vpop.f32.mrb[0].mxu0
        %3387 = vmatprep.mubr.f32.mxu0 0.0
        %3388 = vmatmul.mubr.f32.gmra.mrb[0].mxu0 %v3252
        %v3389 = vpop.f32.mrb[0].mxu0
        %v3390 = vadd.f32 %v887, %v3389
        %v3391 = vpop.f32.mrb[0].mxu0
        %3392 = vmatprep.mubr.f32.mxu0 0.0
        %3393 = vmatmul.mubr.f32.gmra.mrb[0].mxu0 %v3255
        %v3394 = vpop.f32.mrb[0].mxu0
        %v3395 = vadd.f32 %v887, %v3394
        %v3396 = vpop.f32.mrb[0].mxu0
        %3397 = vmatprep.mubr.f32.mxu0 0.0
        %3398 = vmatmul.mubr.f32.gmra.mrb[0].mxu0 %v3258
        %v3399 = vpop.f32.mrb[0].mxu0
        %v3400 = vadd.f32 %v887, %v3399
        %v3401 = vpop.f32.mrb[0].mxu0
        %3402 = vmatprep.mubr.f32.mxu0 0.0
        %3403 = vmatmul.mubr.f32.gmra.mrb[0].mxu0 %v3261
        %v3404 = vpop.f32.mrb[0].mxu0
        %v3405 = vadd.f32 %v887, %v3404
        %v3406 = vpop.f32.mrb[0].mxu0
        %3407 = vdwg.mxu0
        %v3408 = vadd.f32 %v3330, %v2816
        %v3409 = vadd.f32 %v3335, %v2822
        %v3410 = vadd.f32 %v3340, %v2828
        %v3411 = vadd.f32 %v3345, %v2834
        %v3412 = vadd.f32 %v3350, %v2840
        %v3413 = vadd.f32 %v3355, %v2846
        %v3414 = vadd.f32 %v3360, %v2852
        %v3415 = vadd.f32 %v3365, %v2858
        %v3416 = vadd.f32 %v3370, %v2864
        %v3417 = vadd.f32 %v3375, %v2870
        %v3418 = vadd.f32 %v3380, %v2876
        %v3419 = vadd.f32 %v3385, %v2882
        %v3420 = vadd.f32 %v3390, %v2888
        %v3421 = vadd.f32 %v3395, %v2894
        %v3422 = vadd.f32 %v3400, %v2900
        %v3423 = vadd.f32 %v3405, %v2906
        %v3424 = vxor.u32 %v3408, 2147483648
        %v3425 = vxor.u32 %v3409, 2147483648
        %v3426 = vxor.u32 %v3410, 2147483648
        %v3427 = vxor.u32 %v3411, 2147483648
        %v3428 = vxor.u32 %v3412, 2147483648
        %v3429 = vxor.u32 %v3413, 2147483648
        %v3430 = vxor.u32 %v3414, 2147483648
        %v3431 = vxor.u32 %v3415, 2147483648
        %v3432 = vxor.u32 %v3416, 2147483648
        %v3433 = vxor.u32 %v3417, 2147483648
        %v3434 = vxor.u32 %v3418, 2147483648
        %v3435 = vxor.u32 %v3419, 2147483648
        %v3436 = vxor.u32 %v3420, 2147483648
        %v3437 = vxor.u32 %v3421, 2147483648
        %v3438 = vxor.u32 %v3422, 2147483648
        %v3439 = vxor.u32 %v3423, 2147483648
        %v3440 = vmul.f32 %v3424, 1.442695
        %v3441 = vpow.pop %v3440
        %v3442 = vmul.f32 %v3425, 1.442695
        %v3443 = vpow.pop %v3442
        %v3444 = vmul.f32 %v3426, 1.442695
        %v3445 = vpow.pop %v3444
        %v3446 = vmul.f32 %v3427, 1.442695
        %v3447 = vpow.pop %v3446
        %v3448 = vmul.f32 %v3428, 1.442695
        %v3449 = vpow.pop %v3448
        %v3450 = vmul.f32 %v3429, 1.442695
        %v3451 = vpow.pop %v3450
        %v3452 = vmul.f32 %v3430, 1.442695
        %v3453 = vpow.pop %v3452
        %v3454 = vmul.f32 %v3431, 1.442695
        %v3455 = vpow.pop %v3454
        %v3456 = vmul.f32 %v3432, 1.442695
        %v3457 = vpow.pop %v3456
        %v3458 = vmul.f32 %v3433, 1.442695
        %v3459 = vpow.pop %v3458
        %v3460 = vmul.f32 %v3434, 1.442695
        %v3461 = vpow.pop %v3460
        %v3462 = vmul.f32 %v3435, 1.442695
        %v3463 = vpow.pop %v3462
        %v3464 = vmul.f32 %v3436, 1.442695
        %v3465 = vpow.pop %v3464
        %v3466 = vmul.f32 %v3437, 1.442695
        %v3467 = vpow.pop %v3466
        %v3468 = vmul.f32 %v3438, 1.442695
        %v3469 = vpow.pop %v3468
        %v3470 = vmul.f32 %v3439, 1.442695
        %v3471 = vpow.pop %v3470
        %v3472 = vadd.f32 %v3441, 1.0
        %v3473 = vadd.f32 %v3443, 1.0
        %v3474 = vadd.f32 %v3445, 1.0
        %v3475 = vadd.f32 %v3447, 1.0
        %v3476 = vadd.f32 %v3449, 1.0
        %v3477 = vadd.f32 %v3451, 1.0
        %v3478 = vadd.f32 %v3453, 1.0
        %v3479 = vadd.f32 %v3455, 1.0
        %v3480 = vadd.f32 %v3457, 1.0
        %v3481 = vadd.f32 %v3459, 1.0
        %v3482 = vadd.f32 %v3461, 1.0
        %v3483 = vadd.f32 %v3463, 1.0
        %v3484 = vadd.f32 %v3465, 1.0
        %v3485 = vadd.f32 %v3467, 1.0
        %v3486 = vadd.f32 %v3469, 1.0
        %v3487 = vadd.f32 %v3471, 1.0
        %v3488 = vrcp.pop %v3472
        %v3489 = vmul.f32 1.0, %v3488
        %v3490 = vrcp.pop %v3473
        %v3491 = vmul.f32 1.0, %v3490
        %v3492 = vrcp.pop %v3474
        %v3493 = vmul.f32 1.0, %v3492
        %v3494 = vrcp.pop %v3475
        %v3495 = vmul.f32 1.0, %v3494
        %v3496 = vrcp.pop %v3476
        %v3497 = vmul.f32 1.0, %v3496
        %v3498 = vrcp.pop %v3477
        %v3499 = vmul.f32 1.0, %v3498
        %v3500 = vrcp.pop %v3478
        %v3501 = vmul.f32 1.0, %v3500
        %v3502 = vrcp.pop %v3479
        %v3503 = vmul.f32 1.0, %v3502
        %v3504 = vrcp.pop %v3480
        %v3505 = vmul.f32 1.0, %v3504
        %v3506 = vrcp.pop %v3481
        %v3507 = vmul.f32 1.0, %v3506
        %v3508 = vrcp.pop %v3482
        %v3509 = vmul.f32 1.0, %v3508
        %v3510 = vrcp.pop %v3483
        %v3511 = vmul.f32 1.0, %v3510
        %v3512 = vrcp.pop %v3484
        %v3513 = vmul.f32 1.0, %v3512
        %v3514 = vrcp.pop %v3485
        %v3515 = vmul.f32 1.0, %v3514
        %v3516 = vrcp.pop %v3486
        %v3517 = vmul.f32 1.0, %v3516
        %v3518 = vrcp.pop %v3487
        %v3519 = vmul.f32 1.0, %v3518
        %3520 = vrot.lane.b32.xlu0 %v2816, 64
        %v3521 = vpop.permute.xlu0 %3520
        %3522 = vrot.lane.b32.xlu0 %v2822, 64
        %v3523 = vpop.permute.xlu0 %3522
        %3524 = vrot.lane.b32.xlu0 %v2828, 64
        %v3525 = vpop.permute.xlu0 %3524
        %3526 = vrot.lane.b32.xlu0 %v2834, 64
        %v3527 = vpop.permute.xlu0 %3526
        %3528 = vrot.lane.b32.xlu0 %v2840, 64
        %v3529 = vpop.permute.xlu0 %3528
        %3530 = vrot.lane.b32.xlu0 %v2846, 64
        %v3531 = vpop.permute.xlu0 %3530
        %3532 = vrot.lane.b32.xlu0 %v2852, 64
        %v3533 = vpop.permute.xlu0 %3532
        %3534 = vrot.lane.b32.xlu0 %v2858, 64
        %v3535 = vpop.permute.xlu0 %3534
        %3536 = vrot.lane.b32.xlu0 %v2864, 64
        %v3537 = vpop.permute.xlu0 %3536
        %3538 = vrot.lane.b32.xlu0 %v2870, 64
        %v3539 = vpop.permute.xlu0 %3538
        %3540 = vrot.lane.b32.xlu0 %v2876, 64
        %v3541 = vpop.permute.xlu0 %3540
        %3542 = vrot.lane.b32.xlu0 %v2882, 64
        %v3543 = vpop.permute.xlu0 %3542
        %3544 = vrot.lane.b32.xlu0 %v2888, 64
        %v3545 = vpop.permute.xlu0 %3544
        %3546 = vrot.lane.b32.xlu0 %v2894, 64
        %v3547 = vpop.permute.xlu0 %3546
        %3548 = vrot.lane.b32.xlu0 %v2900, 64
        %v3549 = vpop.permute.xlu0 %3548
        %3550 = vrot.lane.b32.xlu0 %v2906, 64
        %v3551 = vpop.permute.xlu0 %3550
        %v3568 = vmul.f32 %v3489, %v3521
        %v3569 = vmul.f32 %v3491, %v3523
        %v3570 = vmul.f32 %v3493, %v3525
        %v3571 = vmul.f32 %v3495, %v3527
        %v3572 = vmul.f32 %v3497, %v3529
        %v3573 = vmul.f32 %v3499, %v3531
        %v3574 = vmul.f32 %v3501, %v3533
        %v3575 = vmul.f32 %v3503, %v3535
        %v3576 = vmul.f32 %v3505, %v3537
        %v3577 = vmul.f32 %v3507, %v3539
        %v3578 = vmul.f32 %v3509, %v3541
        %v3579 = vmul.f32 %v3511, %v3543
        %v3580 = vmul.f32 %v3513, %v3545
        %v3581 = vmul.f32 %v3515, %v3547
        %v3582 = vmul.f32 %v3517, %v3549
        %v3583 = vmul.f32 %v3519, %v3551
        %3600 = vrot.lane.b32.xlu0 %v3568, 64
        %v3601 = vpop.permute.xlu0 %3600
        %3602 = vrot.lane.b32.xlu0 %v3569, 64
        %v3603 = vpop.permute.xlu0 %3602
        %3604 = vrot.lane.b32.xlu0 %v3570, 64
        %v3605 = vpop.permute.xlu0 %3604
        %3606 = vrot.lane.b32.xlu0 %v3571, 64
        %v3607 = vpop.permute.xlu0 %3606
        %3608 = vrot.lane.b32.xlu0 %v3572, 64
        %v3609 = vpop.permute.xlu0 %3608
        %3610 = vrot.lane.b32.xlu0 %v3573, 64
        %v3611 = vpop.permute.xlu0 %3610
        %3612 = vrot.lane.b32.xlu0 %v3574, 64
        %v3613 = vpop.permute.xlu0 %3612
        %3614 = vrot.lane.b32.xlu0 %v3575, 64
        %v3615 = vpop.permute.xlu0 %3614
        %3616 = vrot.lane.b32.xlu0 %v3576, 64
        %v3617 = vpop.permute.xlu0 %3616
        %3618 = vrot.lane.b32.xlu0 %v3577, 64
        %v3619 = vpop.permute.xlu0 %3618
        %3620 = vrot.lane.b32.xlu0 %v3578, 64
        %v3621 = vpop.permute.xlu0 %3620
        %3622 = vrot.lane.b32.xlu0 %v3579, 64
        %v3623 = vpop.permute.xlu0 %3622
        %3624 = vrot.lane.b32.xlu0 %v3580, 64
        %v3625 = vpop.permute.xlu0 %3624
        %3626 = vrot.lane.b32.xlu0 %v3581, 64
        %v3627 = vpop.permute.xlu0 %3626
        %3628 = vrot.lane.b32.xlu0 %v3582, 64
        %v3629 = vpop.permute.xlu0 %3628
        %3630 = vrot.lane.b32.xlu0 %v3583, 64
        %v3631 = vpop.permute.xlu0 %3630
        %v3648 = vadd.f32 %v3330, %v3601
        %v3649 = vadd.f32 %v3335, %v3603
        %v3650 = vadd.f32 %v3340, %v3605
        %v3651 = vadd.f32 %v3345, %v3607
        %v3652 = vadd.f32 %v3350, %v3609
        %v3653 = vadd.f32 %v3355, %v3611
        %v3654 = vadd.f32 %v3360, %v3613
        %v3655 = vadd.f32 %v3365, %v3615
        %v3656 = vadd.f32 %v3370, %v3617
        %v3657 = vadd.f32 %v3375, %v3619
        %v3658 = vadd.f32 %v3380, %v3621
        %v3659 = vadd.f32 %v3385, %v3623
        %v3660 = vadd.f32 %v3390, %v3625
        %v3661 = vadd.f32 %v3395, %v3627
        %v3662 = vadd.f32 %v3400, %v3629
        %v3663 = vadd.f32 %v3405, %v3631
        %v3664 = vtanh.pop %v3648
        %v3665 = vtanh.pop %v3649
        %v3666 = vtanh.pop %v3650
        %v3667 = vtanh.pop %v3651
        %v3668 = vtanh.pop %v3652
        %v3669 = vtanh.pop %v3653
        %v3670 = vtanh.pop %v3654
        %v3671 = vtanh.pop %v3655
        %v3672 = vtanh.pop %v3656
        %v3673 = vtanh.pop %v3657
        %v3674 = vtanh.pop %v3658
        %v3675 = vtanh.pop %v3659
        %v3676 = vtanh.pop %v3660
        %v3677 = vtanh.pop %v3661
        %v3678 = vtanh.pop %v3662
        %v3679 = vtanh.pop %v3663
        %v3680 = vsub.f32 1.0, %v3489
        %v3681 = vsub.f32 1.0, %v3491
        %v3682 = vsub.f32 1.0, %v3493
        %v3683 = vsub.f32 1.0, %v3495
        %v3684 = vsub.f32 1.0, %v3497
        %v3685 = vsub.f32 1.0, %v3499
        %v3686 = vsub.f32 1.0, %v3501
        %v3687 = vsub.f32 1.0, %v3503
        %v3688 = vsub.f32 1.0, %v3505
        %v3689 = vsub.f32 1.0, %v3507
        %v3690 = vsub.f32 1.0, %v3509
        %v3691 = vsub.f32 1.0, %v3511
        %v3692 = vsub.f32 1.0, %v3513
        %v3693 = vsub.f32 1.0, %v3515
        %v3694 = vsub.f32 1.0, %v3517
        %v3695 = vsub.f32 1.0, %v3519
        %3712 = vrot.lane.b32.xlu0 %v3664, 96
        %v3713 = vpop.permute.xlu0 %3712
        %3714 = vrot.lane.b32.xlu0 %v3665, 96
        %v3715 = vpop.permute.xlu0 %3714
        %3716 = vrot.lane.b32.xlu0 %v3666, 96
        %v3717 = vpop.permute.xlu0 %3716
        %3718 = vrot.lane.b32.xlu0 %v3667, 96
        %v3719 = vpop.permute.xlu0 %3718
        %3720 = vrot.lane.b32.xlu0 %v3668, 96
        %v3721 = vpop.permute.xlu0 %3720
        %3722 = vrot.lane.b32.xlu0 %v3669, 96
        %v3723 = vpop.permute.xlu0 %3722
        %3724 = vrot.lane.b32.xlu0 %v3670, 96
        %v3725 = vpop.permute.xlu0 %3724
        %3726 = vrot.lane.b32.xlu0 %v3671, 96
        %v3727 = vpop.permute.xlu0 %3726
        %3728 = vrot.lane.b32.xlu0 %v3672, 96
        %v3729 = vpop.permute.xlu0 %3728
        %3730 = vrot.lane.b32.xlu0 %v3673, 96
        %v3731 = vpop.permute.xlu0 %3730
        %3732 = vrot.lane.b32.xlu0 %v3674, 96
        %v3733 = vpop.permute.xlu0 %3732
        %3734 = vrot.lane.b32.xlu0 %v3675, 96
        %v3735 = vpop.permute.xlu0 %3734
        %3736 = vrot.lane.b32.xlu0 %v3676, 96
        %v3737 = vpop.permute.xlu0 %3736
        %3738 = vrot.lane.b32.xlu0 %v3677, 96
        %v3739 = vpop.permute.xlu0 %3738
        %3740 = vrot.lane.b32.xlu0 %v3678, 96
        %v3741 = vpop.permute.xlu0 %3740
        %3742 = vrot.lane.b32.xlu0 %v3679, 96
        %v3743 = vpop.permute.xlu0 %3742
        %v3760 = vmul.f32 %v3680, %v3713
        %v3761 = vmul.f32 %v3681, %v3715
        %v3762 = vmul.f32 %v3682, %v3717
        %v3763 = vmul.f32 %v3683, %v3719
        %v3764 = vmul.f32 %v3684, %v3721
        %v3765 = vmul.f32 %v3685, %v3723
        %v3766 = vmul.f32 %v3686, %v3725
        %v3767 = vmul.f32 %v3687, %v3727
        %v3768 = vmul.f32 %v3688, %v3729
        %v3769 = vmul.f32 %v3689, %v3731
        %v3770 = vmul.f32 %v3690, %v3733
        %v3771 = vmul.f32 %v3691, %v3735
        %v3772 = vmul.f32 %v3692, %v3737
        %v3773 = vmul.f32 %v3693, %v3739
        %v3774 = vmul.f32 %v3694, %v3741
        %v3775 = vmul.f32 %v3695, %v3743
        %v3776 = vmul.f32 %v3489, %v2653
        %v3777 = vmul.f32 %v3491, %v2654
        %v3778 = vmul.f32 %v3493, %v2655
        %v3779 = vmul.f32 %v3495, %v2656
        %v3780 = vmul.f32 %v3497, %v2657
        %v3781 = vmul.f32 %v3499, %v2658
        %v3782 = vmul.f32 %v3501, %v2659
        %v3783 = vmul.f32 %v3503, %v2660
        %v3784 = vmul.f32 %v3505, %v2661
        %v3785 = vmul.f32 %v3507, %v2662
        %v3786 = vmul.f32 %v3509, %v2663
        %v3787 = vmul.f32 %v3511, %v2664
        %v3788 = vmul.f32 %v3513, %v2665
        %v3789 = vmul.f32 %v3515, %v2666
        %v3790 = vmul.f32 %v3517, %v2667
        %v3791 = vmul.f32 %v3519, %v2668
        %v3792 = vadd.f32 %v3760, %v3776
        %v3793 = vadd.f32 %v3761, %v3777
        %v3794 = vadd.f32 %v3762, %v3778
        %v3795 = vadd.f32 %v3763, %v3779
        %v3796 = vadd.f32 %v3764, %v3780
        %v3797 = vadd.f32 %v3765, %v3781
        %v3798 = vadd.f32 %v3766, %v3782
        %v3799 = vadd.f32 %v3767, %v3783
        %v3800 = vadd.f32 %v3768, %v3784
        %v3801 = vadd.f32 %v3769, %v3785
        %v3802 = vadd.f32 %v3770, %v3786
        %v3803 = vadd.f32 %v3771, %v3787
        %v3804 = vadd.f32 %v3772, %v3788
        %v3805 = vadd.f32 %v3773, %v3789
        %v3806 = vadd.f32 %v3774, %v3790
        %v3807 = vadd.f32 %v3775, %v3791
        %3824 = vrot.lane.b32.xlu0 %v3792, 96
        %v3825 = vpop.permute.xlu0 %3824
        %3826 = vrot.lane.b32.xlu0 %v3793, 96
        %v3827 = vpop.permute.xlu0 %3826
        %3828 = vrot.lane.b32.xlu0 %v3794, 96
        %v3829 = vpop.permute.xlu0 %3828
        %3830 = vrot.lane.b32.xlu0 %v3795, 96
        %v3831 = vpop.permute.xlu0 %3830
        %3832 = vrot.lane.b32.xlu0 %v3796, 96
        %v3833 = vpop.permute.xlu0 %3832
        %3834 = vrot.lane.b32.xlu0 %v3797, 96
        %v3835 = vpop.permute.xlu0 %3834
        %3836 = vrot.lane.b32.xlu0 %v3798, 96
        %v3837 = vpop.permute.xlu0 %3836
        %3838 = vrot.lane.b32.xlu0 %v3799, 96
        %v3839 = vpop.permute.xlu0 %3838
        %3840 = vrot.lane.b32.xlu0 %v3800, 96
        %v3841 = vpop.permute.xlu0 %3840
        %3842 = vrot.lane.b32.xlu0 %v3801, 96
        %v3843 = vpop.permute.xlu0 %3842
        %3844 = vrot.lane.b32.xlu0 %v3802, 96
        %v3845 = vpop.permute.xlu0 %3844
        %3846 = vrot.lane.b32.xlu0 %v3803, 96
        %v3847 = vpop.permute.xlu0 %3846
        %3848 = vrot.lane.b32.xlu0 %v3804, 96
        %v3849 = vpop.permute.xlu0 %3848
        %3850 = vrot.lane.b32.xlu0 %v3805, 96
        %v3851 = vpop.permute.xlu0 %3850
        %3852 = vrot.lane.b32.xlu0 %v3806, 96
        %v3853 = vpop.permute.xlu0 %3852
        %3854 = vrot.lane.b32.xlu0 %v3807, 96
        %v3855 = vpop.permute.xlu0 %3854
        %3872 = vst.msk [vmem:[%s293] sm:$0xff] %vm336, %v3825
        %3873 = vst.msk [vmem:[%s293 + $0x8] sm:$0xff] %vm336, %v3827
        %3874 = vst.msk [vmem:[%s293 + $0x10] sm:$0xff] %vm336, %v3829
        %3875 = vst.msk [vmem:[%s293 + $0x18] sm:$0xff] %vm336, %v3831
        %3876 = vst.msk [vmem:[%s293 + $0x20] sm:$0xff] %vm336, %v3833
        %3877 = vst.msk [vmem:[%s293 + $0x28] sm:$0xff] %vm336, %v3835
        %3878 = vst.msk [vmem:[%s293 + $0x30] sm:$0xff] %vm336, %v3837
        %3879 = vst.msk [vmem:[%s293 + $0x38] sm:$0xff] %vm336, %v3839
        %3880 = vst.msk [vmem:[%s293 + $0x40] sm:$0xff] %vm336, %v3841
        %3881 = vst.msk [vmem:[%s293 + $0x48] sm:$0xff] %vm336, %v3843
        %3882 = vst.msk [vmem:[%s293 + $0x50] sm:$0xff] %vm336, %v3845
        %3883 = vst.msk [vmem:[%s293 + $0x58] sm:$0xff] %vm336, %v3847
        %3884 = vst.msk [vmem:[%s293 + $0x60] sm:$0xff] %vm336, %v3849
        %3885 = vst.msk [vmem:[%s293 + $0x68] sm:$0xff] %vm336, %v3851
        %3886 = vst.msk [vmem:[%s293 + $0x70] sm:$0xff] %vm336, %v3853
        %3887 = vst.msk [vmem:[%s293 + $0x78] sm:$0xff] %vm336, %v3855
        %s3888 = smul.u32 16, %s20
        %p3889 = scmp.lt.s32.totalorder %s3888, 31
        %s3890 = scalar_select %p3889, %s3888, 31
        %s3891 = smul.addr %s3890, 8
        %s3892 = scalar_lea.vmem %s6, %s3891
        // Predicated region
        $region49: #{tpu_custom_call.1} parent=43 // pred_check
          %p3893 = pneg %p174
        $region50: #{tpu_custom_call.1} parent=43 // pred_check_branch
          %3895 = sbr.rel (%p3893) target = $region52
        $region51: #{tpu_custom_call.1} parent=43 // pred_region
          %s3896 = smul.u32 16, %s20
        $region52: #{tpu_custom_call.1} parent=43 // pred_fallthru
          _
      $region44: #{tpu_custom_call.1} parent=5 // pred_fallthru
        _
      %p3897 = scmp.le.s32.totalorder 2, %s15
      // Predicated region
      $region53: #{tpu_custom_call.1} parent=5 // pred_check
        %p3898 = pneg %p3897
      $region54: #{tpu_custom_call.1} parent=5 // pred_check_branch
        %3900 = sbr.rel (%p3898) target = $region56
      $region55: #{tpu_custom_call.1} parent=5 // pred_region
        %s3901 = ssub.s32 %s15, 2
        // Predicated region
        $region57: #{tpu_custom_call.1} parent=55 // pred_check
          %p3902 = pneg %p180
        $region58: #{tpu_custom_call.1} parent=55 // pred_check_branch
          %3904 = sbr.rel (%p3902) target = $region60
        $region59: #{tpu_custom_call.1} parent=55 // pred_region
          %s3905 = smul.u32 16, %s21
          %p3906 = scmp.lt.s32.totalorder %s3905, 31
          %s3907 = scalar_select %p3906, %s3905, 31
          %s3908 = smul.addr %s3907, 8
          %s3909 = scalar_lea.vmem %s6, %s3908
        $region60: #{tpu_custom_call.1} parent=55 // pred_fallthru
          _
      $region56: #{tpu_custom_call.1} parent=5 // pred_fallthru
        _
    $region6: #{tpu_custom_call.1} parent=1 // loop_footer
      %s19 = sadd.s32 1, %s15
    $region7: #{tpu_custom_call.1} parent=1 // loop_footer_branch
      %14 = sbr.rel target = $region3
    $region8: #{tpu_custom_call.1} parent=1 // loop_exit
      _
    %3910 = vsyncpa [#allocation3], 1
    %s3911 = scalar_lea.sflag [#allocation3], 1
    %3912 = vsyncpa %s3911, 1

</llo_original>
